<compile_context>
chip_gen: v6e
topology: v6e:2x2x1
jax: 0.10.0
libtpu: 0.0.40
codegen_flags: <defaults>
</compile_context>

<pallas_src>
import jax
import jax.numpy as jnp
from jax.experimental import pallas as pl
from jax.experimental.pallas import tpu as pltpu


# ----------------------------- fused kernel --------------------------------

def _make_fused_kernel(nt, tn):
    """Builds the fused forward kernel; nt/tn are Python ints (trace-time)."""

    def kernel(
        x1_ref, x2_ref,                       # inputs
        wb1_ref, bb1_ref, wb2_ref, bb2_ref,   # branch linears
        w1a_ref, w1b_ref, b1_ref,             # linear1 (W1 row-split = folded concat)
        w2_ref, b2_ref,                       # linear2 (W2 tiled over grid; b2 resident)
        w3_ref, b3_ref,                       # output  (W3 resident, (nt, tn, O))
        o_ref,                                # (B, O) output (resident accumulator)
        *scratch,                             # (B, H1) bf16 scratch iff nt > 1
    ):
        j = pl.program_id(0)
        bf = w1a_ref.dtype

        def layer1():
            # branch projections (Dropout -> identity at inference)
            a = jnp.dot(x1_ref[...].astype(wb1_ref.dtype), wb1_ref[...],
                        preferred_element_type=jnp.float32) + bb1_ref[...]
            b = jnp.dot(x2_ref[...].astype(wb2_ref.dtype), wb2_ref[...],
                        preferred_element_type=jnp.float32) + bb2_ref[...]
            # "concat + linear1" folded: cat(a,b) @ W1 == a @ W1[:U1] + b @ W1[U1:]
            z = (jnp.dot(a.astype(bf), w1a_ref[...], preferred_element_type=jnp.float32)
                 + jnp.dot(b.astype(bf), w1b_ref[...], preferred_element_type=jnp.float32)
                 + b1_ref[...])
            return jnp.maximum(z, 0.0).astype(bf)     # ReLU; dropout = identity

        if nt == 1:
            # ---- single-step path (default): straight-line, one output store ----
            h1 = layer1()
            h2 = jnp.maximum(
                jnp.dot(h1, w2_ref[...], preferred_element_type=jnp.float32)
                + b2_ref[pl.ds(0, 1), :],
                0.0,
            )
            o_ref[...] = (jnp.dot(h2.astype(w3_ref.dtype), w3_ref[0],
                                  preferred_element_type=jnp.float32)
                          + b3_ref[...])
        else:
            # ---- streamed path (tn < H2): W2 column-tiled over the grid -------
            h1_s = scratch[0]

            @pl.when(j == 0)
            def _():
                h1_s[...] = layer1()

            # linear2 column tile: ReLU(h1 @ W2[:, tile] + b2[tile])
            h2 = jnp.maximum(
                jnp.dot(h1_s[...], w2_ref[...], preferred_element_type=jnp.float32)
                + b2_ref[pl.ds(j, 1), :],
                0.0,
            )
            # partial contribution: h2_tile @ W3[tile, :] (W3 resident, row-indexed)
            partial = jnp.dot(h2.astype(w3_ref.dtype), w3_ref[j],
                              preferred_element_type=jnp.float32)

            @pl.when(j == 0)
            def _():
                o_ref[...] = partial + b3_ref[...]

            @pl.when(j > 0)
            def _():
                o_ref[...] += partial

    return kernel


# ----------------------------- wrapper --------------------------------------

def model_forward(x1, x2, params, *, tn=None):
    (wb1, bb1), (wb2, bb2) = params["branches"]
    w1, b1 = params["w1"], params["b1"]
    w2, b2 = params["w2"], params["b2"]
    w3, b3 = params["w3"], params["b3"]

    B = x1.shape[0]
    F1, U1 = wb1.shape
    F2, U2 = wb2.shape
    D, H1 = w1.shape            # D = U1 + U2
    H2 = w2.shape[1]
    O = w3.shape[1]

    if tn is None:
        tn = H2                 # default: single grid step, one contiguous W2 DMA
    assert H2 % tn == 0 and tn % 128 == 0
    nt = H2 // tn

    # static param-layout plumbing (outside the kernel)
    w1a = w1[:U1]
    w1b = w1[U1:]
    w3r = w3.reshape(nt, tn, O)     # resident; indexed by grid step in-kernel
    b2r = b2.reshape(nt, tn)        # resident; indexed by grid step in-kernel

    def full(shape):
        return pl.BlockSpec(shape, lambda j: (0,) * len(shape))

    flops = 2 * B * (F1 * U1 + F2 * U2 + D * H1 + H1 * H2 + H2 * O)
    bytes_accessed = (
        (wb1.size + wb2.size + w1.size + w2.size + w3.size) * 2      # bf16 weights
        + (bb1.size + bb2.size + b1.size + b2.size + b3.size) * 4    # f32 biases
        + (x1.size + x2.size + B * O) * 4                            # f32 acts
    )

    scratch_shapes = [] if nt == 1 else [pltpu.VMEM((B, H1), jnp.bfloat16)]

    return pl.pallas_call(
        _make_fused_kernel(nt, tn),
        out_shape=jax.ShapeDtypeStruct((B, O), jnp.float32),
        grid_spec=pltpu.PrefetchScalarGridSpec(
            num_scalar_prefetch=0,
            grid=(nt,),
            in_specs=[
                full((B, F1)), full((B, F2)),
                full((F1, U1)), full((1, U1)),
                full((F2, U2)), full((1, U2)),
                full((U1, H1)), full((U2, H1)), full((1, H1)),
                pl.BlockSpec((H1, tn), lambda j: (0, j)),   # W2: only streamed operand
                full((nt, tn)),                             # b2 resident
                full((nt, tn, O)),                          # W3 resident
                full((1, O)),
            ],
            out_specs=pl.BlockSpec((B, O), lambda j: (0, 0)),   # resident accumulator
            scratch_shapes=scratch_shapes,
        ),
        compiler_params=pltpu.CompilerParams(
            dimension_semantics=("arbitrary",),      # reduction/carry across the grid
        ),
        cost_estimate=pl.CostEstimate(
            flops=int(flops), transcendentals=0, bytes_accessed=int(bytes_accessed)),
    )(
        x1, x2,
        wb1, bb1.reshape(1, U1), wb2, bb2.reshape(1, U2),
        w1a, w1b, b1.reshape(1, H1),
        w2, b2r,
        w3r, b3.reshape(1, O),
    )


# ----------------------------- param init -----------------------------------

def _init_linear(key, fan_in, fan_out):
    # PyTorch-style uniform(-1/sqrt(fan_in), 1/sqrt(fan_in))
    kw, kb = jax.random.split(key)
    bound = 1.0 / jnp.sqrt(jnp.float32(fan_in))
    w = jax.random.uniform(kw, (fan_in, fan_out), jnp.float32, -bound, bound)
    b = jax.random.uniform(kb, (fan_out,), jnp.float32, -bound, bound)
    return w, b


if __name__ == "__main__":
    key = jax.random.PRNGKey(0)

    input_dicts = (
        {"NUM_FEATURES": 16, "OUTPUT_UNITS": 32, "DROPOUT": 0.1},
        {"NUM_FEATURES": 24, "OUTPUT_UNITS": 32, "DROPOUT": 0.2},
    )
    output_units = 16
    batch = 8
    bf = jnp.bfloat16

    keys = jax.random.split(key, 8)
    branch_f32 = [
        _init_linear(keys[i], d["NUM_FEATURES"], d["OUTPUT_UNITS"])
        for i, d in enumerate(input_dicts)
    ]
    first_input_units = sum(d["OUTPUT_UNITS"] for d in input_dicts)   # 64
    w1f, b1 = _init_linear(keys[4], first_input_units, 1024)
    w2f, b2 = _init_linear(keys[5], 1024, 1024)
    w3f, b3 = _init_linear(keys[6], 1024, output_units)

    # bf16 weight storage (f32 biases / f32 accumulation)
    params = {
        "branches": [(w.astype(bf), b) for (w, b) in branch_f32],
        "w1": w1f.astype(bf), "b1": b1,
        "w2": w2f.astype(bf), "b2": b2,
        "w3": w3f.astype(bf), "b3": b3,
    }

    xkeys = jax.random.split(keys[7], len(input_dicts))
    xs = [jax.random.normal(xkeys[i], (batch, d["NUM_FEATURES"]), jnp.float32)
          for i, d in enumerate(input_dicts)]

    # default: tn = 1024 -> single grid step
    out = model_forward(xs[0], xs[1], params)
    out = jax.block_until_ready(out)
    assert out.shape == (batch, output_units)

    # --- reference 1: bf16-weight-matched (mirrors kernel casts) ------------
    def ref_bf16(x1, x2):
        a = jnp.dot(x1.astype(bf), params["branches"][0][0],
                    preferred_element_type=jnp.float32) + params["branches"][0][1]
        c = jnp.dot(x2.astype(bf), params["branches"][1][0],
                    preferred_element_type=jnp.float32) + params["branches"][1][1]
        x = jnp.concatenate([a, c], axis=1)
        h = jnp.dot(x.astype(bf), params["w1"],
                    preferred_element_type=jnp.float32) + params["b1"]
        h = jnp.maximum(h, 0.0).astype(bf)
        h = jnp.dot(h, params["w2"],
                    preferred_element_type=jnp.float32) + params["b2"]
        h = jnp.maximum(h, 0.0).astype(bf)
        return jnp.dot(h, params["w3"],
                       preferred_element_type=jnp.float32) + params["b3"]

    r_bf = ref_bf16(xs[0], xs[1])
    assert jnp.allclose(out, r_bf, atol=2e-3, rtol=2e-3), \
        float(jnp.max(jnp.abs(out - r_bf)))

    # --- reference 2: pure-f32 PyTorch-equivalent (loose tol for bf16) ------
    a = xs[0] @ branch_f32[0][0] + branch_f32[0][1]
    c = xs[1] @ branch_f32[1][0] + branch_f32[1][1]
    rf = jnp.concatenate([a, c], axis=1)
    rf = jnp.maximum(rf @ w1f + b1, 0.0)
    rf = jnp.maximum(rf @ w2f + b2, 0.0)
    rf = rf @ w3f + b3
    assert jnp.allclose(out, rf, atol=5e-2, rtol=5e-2), \
        float(jnp.max(jnp.abs(out - rf)))

    # --- sweep check: streamed-W2 path (tn < H2) matches ---------------------
    out_streamed = jax.block_until_ready(model_forward(xs[0], xs[1], params, tn=256))
    assert jnp.allclose(out_streamed, r_bf, atol=2e-3, rtol=2e-3), \
        float(jnp.max(jnp.abs(out_streamed - r_bf)))

    print("KERNEL_OK")
</pallas_src>

<mosaic_0001>
module attributes {stable_mosaic.version = 11 : i64} {
  func.func @kernel(%arg0: i32, %arg1: memref<8x16xf32, #tpu.memory_space<vmem>>, %arg2: memref<8x24xf32, #tpu.memory_space<vmem>>, %arg3: memref<16x32xbf16, #tpu.memory_space<vmem>>, %arg4: memref<1x32xf32, #tpu.memory_space<vmem>>, %arg5: memref<24x32xbf16, #tpu.memory_space<vmem>>, %arg6: memref<1x32xf32, #tpu.memory_space<vmem>>, %arg7: memref<32x1024xbf16, #tpu.memory_space<vmem>>, %arg8: memref<32x1024xbf16, #tpu.memory_space<vmem>>, %arg9: memref<1x1024xf32, #tpu.memory_space<vmem>>, %arg10: memref<1024x1024xbf16, #tpu.memory_space<vmem>>, %arg11: memref<1x1024xf32, #tpu.memory_space<vmem>>, %arg12: memref<1x1024x16xbf16, #tpu.memory_space<vmem>>, %arg13: memref<1x16xf32, #tpu.memory_space<vmem>>, %arg14: memref<8x16xf32, #tpu.memory_space<vmem>>) attributes {dimension_semantics = [#tpu.dimension_semantics<arbitrary>], iteration_bounds = array<i64: 1>, scalar_prefetch = 0 : i64, scratch_operands = 0 : i64, tpu.core_type = #tpu.core_type<tc>, window_params = [{pipeline_mode = #tpu.pipeline_mode<synchronous>, transform_indices = @transform_0, window_bounds = array<i64: 8, 16>}, {pipeline_mode = #tpu.pipeline_mode<synchronous>, transform_indices = @transform_1, window_bounds = array<i64: 8, 24>}, {pipeline_mode = #tpu.pipeline_mode<synchronous>, transform_indices = @transform_2, window_bounds = array<i64: 16, 32>}, {pipeline_mode = #tpu.pipeline_mode<synchronous>, transform_indices = @transform_3, window_bounds = array<i64: 1, 32>}, {pipeline_mode = #tpu.pipeline_mode<synchronous>, transform_indices = @transform_4, window_bounds = array<i64: 24, 32>}, {pipeline_mode = #tpu.pipeline_mode<synchronous>, transform_indices = @transform_5, window_bounds = array<i64: 1, 32>}, {pipeline_mode = #tpu.pipeline_mode<synchronous>, transform_indices = @transform_6, window_bounds = array<i64: 32, 1024>}, {pipeline_mode = #tpu.pipeline_mode<synchronous>, transform_indices = @transform_7, window_bounds = array<i64: 32, 1024>}, {pipeline_mode = #tpu.pipeline_mode<synchronous>, transform_indices = @transform_8, window_bounds = array<i64: 1, 1024>}, {transform_indices = @transform_9, window_bounds = array<i64: 1024, 1024>}, {pipeline_mode = #tpu.pipeline_mode<synchronous>, transform_indices = @transform_10, window_bounds = array<i64: 1, 1024>}, {pipeline_mode = #tpu.pipeline_mode<synchronous>, transform_indices = @transform_11, window_bounds = array<i64: 1, 1024, 16>}, {pipeline_mode = #tpu.pipeline_mode<synchronous>, transform_indices = @transform_12, window_bounds = array<i64: 1, 16>}, {pipeline_mode = #tpu.pipeline_mode<synchronous>, transform_indices = @transform_13, window_bounds = array<i64: 8, 16>}]} {
    %c0 = arith.constant 0 : index
    %c0_0 = arith.constant 0 : index
    %0 = vector.load %arg1[%c0, %c0_0] : memref<8x16xf32, #tpu.memory_space<vmem>>, vector<8x16xf32>
    %1 = arith.truncf %0 : vector<8x16xf32> to vector<8x16xbf16>
    %c0_1 = arith.constant 0 : index
    %c0_2 = arith.constant 0 : index
    %2 = vector.load %arg3[%c0_1, %c0_2] : memref<16x32xbf16, #tpu.memory_space<vmem>>, vector<16x32xbf16>
    %cst = arith.constant dense<0.000000e+00> : vector<8x32xf32>
    %3 = tpu.matmul %1, %2, %cst {dimension_numbers = #tpu.dot_dimension_numbers<[1], [0], [0], [1], [0, 0, 1, 1], [], []>} : vector<8x16xbf16>, vector<16x32xbf16>, vector<8x32xf32> -> vector<8x32xf32>
    %c0_3 = arith.constant 0 : index
    %c0_4 = arith.constant 0 : index
    %4 = vector.load %arg4[%c0_3, %c0_4] : memref<1x32xf32, #tpu.memory_space<vmem>>, vector<1x32xf32>
    %5 = vector.broadcast %4 : vector<1x32xf32> to vector<8x32xf32>
    %6 = arith.addf %3, %5 : vector<8x32xf32>
    %c0_5 = arith.constant 0 : index
    %c0_6 = arith.constant 0 : index
    %7 = vector.load %arg2[%c0_5, %c0_6] : memref<8x24xf32, #tpu.memory_space<vmem>>, vector<8x24xf32>
    %8 = arith.truncf %7 : vector<8x24xf32> to vector<8x24xbf16>
    %c0_7 = arith.constant 0 : index
    %c0_8 = arith.constant 0 : index
    %9 = vector.load %arg5[%c0_7, %c0_8] : memref<24x32xbf16, #tpu.memory_space<vmem>>, vector<24x32xbf16>
    %cst_9 = arith.constant dense<0.000000e+00> : vector<8x32xf32>
    %10 = tpu.matmul %8, %9, %cst_9 {dimension_numbers = #tpu.dot_dimension_numbers<[1], [0], [0], [1], [0, 0, 1, 1], [], []>} : vector<8x24xbf16>, vector<24x32xbf16>, vector<8x32xf32> -> vector<8x32xf32>
    %c0_10 = arith.constant 0 : index
    %c0_11 = arith.constant 0 : index
    %11 = vector.load %arg6[%c0_10, %c0_11] : memref<1x32xf32, #tpu.memory_space<vmem>>, vector<1x32xf32>
    %12 = vector.broadcast %11 : vector<1x32xf32> to vector<8x32xf32>
    %13 = arith.addf %10, %12 : vector<8x32xf32>
    %14 = arith.truncf %6 : vector<8x32xf32> to vector<8x32xbf16>
    %c0_12 = arith.constant 0 : index
    %c0_13 = arith.constant 0 : index
    %15 = vector.load %arg7[%c0_12, %c0_13] : memref<32x1024xbf16, #tpu.memory_space<vmem>>, vector<32x1024xbf16>
    %cst_14 = arith.constant dense<0.000000e+00> : vector<8x1024xf32>
    %16 = tpu.matmul %14, %15, %cst_14 {dimension_numbers = #tpu.dot_dimension_numbers<[1], [0], [0], [1], [0, 0, 1, 1], [], []>} : vector<8x32xbf16>, vector<32x1024xbf16>, vector<8x1024xf32> -> vector<8x1024xf32>
    %17 = arith.truncf %13 : vector<8x32xf32> to vector<8x32xbf16>
    %c0_15 = arith.constant 0 : index
    %c0_16 = arith.constant 0 : index
    %18 = vector.load %arg8[%c0_15, %c0_16] : memref<32x1024xbf16, #tpu.memory_space<vmem>>, vector<32x1024xbf16>
    %cst_17 = arith.constant dense<0.000000e+00> : vector<8x1024xf32>
    %19 = tpu.matmul %17, %18, %cst_17 {dimension_numbers = #tpu.dot_dimension_numbers<[1], [0], [0], [1], [0, 0, 1, 1], [], []>} : vector<8x32xbf16>, vector<32x1024xbf16>, vector<8x1024xf32> -> vector<8x1024xf32>
    %20 = arith.addf %16, %19 : vector<8x1024xf32>
    %c0_18 = arith.constant 0 : index
    %c0_19 = arith.constant 0 : index
    %21 = vector.load %arg9[%c0_18, %c0_19] : memref<1x1024xf32, #tpu.memory_space<vmem>>, vector<1x1024xf32>
    %22 = vector.broadcast %21 : vector<1x1024xf32> to vector<8x1024xf32>
    %23 = arith.addf %20, %22 : vector<8x1024xf32>
    %cst_20 = arith.constant 0.000000e+00 : f32
    %24 = vector.broadcast %cst_20 : f32 to vector<8x1024xf32>
    %25 = arith.maximumf %23, %24 : vector<8x1024xf32>
    %26 = arith.truncf %25 : vector<8x1024xf32> to vector<8x1024xbf16>
    %c0_21 = arith.constant 0 : index
    %c0_22 = arith.constant 0 : index
    %27 = vector.load %arg10[%c0_21, %c0_22] : memref<1024x1024xbf16, #tpu.memory_space<vmem>>, vector<1024x1024xbf16>
    %cst_23 = arith.constant dense<0.000000e+00> : vector<8x1024xf32>
    %28 = tpu.matmul %26, %27, %cst_23 {dimension_numbers = #tpu.dot_dimension_numbers<[1], [0], [0], [1], [0, 0, 1, 1], [], []>} : vector<8x1024xbf16>, vector<1024x1024xbf16>, vector<8x1024xf32> -> vector<8x1024xf32>
    %c0_24 = arith.constant 0 : index
    %c0_25 = arith.constant 0 : index
    %29 = vector.load %arg11[%c0_24, %c0_25] : memref<1x1024xf32, #tpu.memory_space<vmem>>, vector<1x1024xf32>
    %30 = vector.broadcast %29 : vector<1x1024xf32> to vector<8x1024xf32>
    %31 = arith.addf %28, %30 : vector<8x1024xf32>
    %cst_26 = arith.constant 0.000000e+00 : f32
    %32 = vector.broadcast %cst_26 : f32 to vector<8x1024xf32>
    %33 = arith.maximumf %31, %32 : vector<8x1024xf32>
    %34 = arith.truncf %33 : vector<8x1024xf32> to vector<8x1024xbf16>
    %c0_27 = arith.constant 0 : index
    %c0_28 = arith.constant 0 : index
    %c0_29 = arith.constant 0 : index
    %35 = vector.load %arg12[%c0_27, %c0_28, %c0_29] : memref<1x1024x16xbf16, #tpu.memory_space<vmem>>, vector<1x1024x16xbf16>
    %36 = vector.shape_cast %35 : vector<1x1024x16xbf16> to vector<1024x16xbf16>
    %cst_30 = arith.constant dense<0.000000e+00> : vector<8x16xf32>
    %37 = tpu.matmul %34, %36, %cst_30 {dimension_numbers = #tpu.dot_dimension_numbers<[1], [0], [0], [1], [0, 0, 1, 1], [], []>} : vector<8x1024xbf16>, vector<1024x16xbf16>, vector<8x16xf32> -> vector<8x16xf32>
    %c0_31 = arith.constant 0 : index
    %c0_32 = arith.constant 0 : index
    %38 = vector.load %arg13[%c0_31, %c0_32] : memref<1x16xf32, #tpu.memory_space<vmem>>, vector<1x16xf32>
    %39 = vector.broadcast %38 : vector<1x16xf32> to vector<8x16xf32>
    %40 = arith.addf %37, %39 : vector<8x16xf32>
    %c0_33 = arith.constant 0 : index
    %c0_34 = arith.constant 0 : index
    %41 = vector.load %arg14[%c0_33, %c0_34] : memref<8x16xf32, #tpu.memory_space<vmem>>, vector<8x16xf32>
    tpu.vector_store %arg14[%c0_33, %c0_34], %40 {strides = array<i32>} : memref<8x16xf32, #tpu.memory_space<vmem>>, vector<8x16xf32>,
    return
  }
  func.func @transform_0(%arg0: i32) -> (i32, i32) {
    %c0_i32 = arith.constant 0 : i32
    %c0_i32_0 = arith.constant 0 : i32
    %c0_i32_1 = arith.constant 0 : i32
    return %c0_i32, %c0_i32_0 : i32, i32
  }
  func.func @transform_1(%arg0: i32) -> (i32, i32) {
    %c0_i32 = arith.constant 0 : i32
    %c0_i32_0 = arith.constant 0 : i32
    %c0_i32_1 = arith.constant 0 : i32
    return %c0_i32, %c0_i32_0 : i32, i32
  }
  func.func @transform_2(%arg0: i32) -> (i32, i32) {
    %c0_i32 = arith.constant 0 : i32
    %c0_i32_0 = arith.constant 0 : i32
    %c0_i32_1 = arith.constant 0 : i32
    return %c0_i32, %c0_i32_0 : i32, i32
  }
  func.func @transform_3(%arg0: i32) -> (i32, i32) {
    %c0_i32 = arith.constant 0 : i32
    %c0_i32_0 = arith.constant 0 : i32
    %c0_i32_1 = arith.constant 0 : i32
    return %c0_i32, %c0_i32_0 : i32, i32
  }
  func.func @transform_4(%arg0: i32) -> (i32, i32) {
    %c0_i32 = arith.constant 0 : i32
    %c0_i32_0 = arith.constant 0 : i32
    %c0_i32_1 = arith.constant 0 : i32
    return %c0_i32, %c0_i32_0 : i32, i32
  }
  func.func @transform_5(%arg0: i32) -> (i32, i32) {
    %c0_i32 = arith.constant 0 : i32
    %c0_i32_0 = arith.constant 0 : i32
    %c0_i32_1 = arith.constant 0 : i32
    return %c0_i32, %c0_i32_0 : i32, i32
  }
  func.func @transform_6(%arg0: i32) -> (i32, i32) {
    %c0_i32 = arith.constant 0 : i32
    %c0_i32_0 = arith.constant 0 : i32
    %c0_i32_1 = arith.constant 0 : i32
    return %c0_i32, %c0_i32_0 : i32, i32
  }
  func.func @transform_7(%arg0: i32) -> (i32, i32) {
    %c0_i32 = arith.constant 0 : i32
    %c0_i32_0 = arith.constant 0 : i32
    %c0_i32_1 = arith.constant 0 : i32
    return %c0_i32, %c0_i32_0 : i32, i32
  }
  func.func @transform_8(%arg0: i32) -> (i32, i32) {
    %c0_i32 = arith.constant 0 : i32
    %c0_i32_0 = arith.constant 0 : i32
    %c0_i32_1 = arith.constant 0 : i32
    return %c0_i32, %c0_i32_0 : i32, i32
  }
  func.func @transform_9(%arg0: i32) -> (i32, i32) {
    %c0_i32 = arith.constant 0 : i32
    %c0_i32_0 = arith.constant 0 : i32
    return %c0_i32, %arg0 : i32, i32
  }
  func.func @transform_10(%arg0: i32) -> (i32, i32) {
    %c0_i32 = arith.constant 0 : i32
    %c0_i32_0 = arith.constant 0 : i32
    %c0_i32_1 = arith.constant 0 : i32
    return %c0_i32, %c0_i32_0 : i32, i32
  }
  func.func @transform_11(%arg0: i32) -> (i32, i32, i32) {
    %c0_i32 = arith.constant 0 : i32
    %c0_i32_0 = arith.constant 0 : i32
    %c0_i32_1 = arith.constant 0 : i32
    %c0_i32_2 = arith.constant 0 : i32
    return %c0_i32, %c0_i32_0, %c0_i32_1 : i32, i32, i32
  }
  func.func @transform_12(%arg0: i32) -> (i32, i32) {
    %c0_i32 = arith.constant 0 : i32
    %c0_i32_0 = arith.constant 0 : i32
    %c0_i32_1 = arith.constant 0 : i32
    return %c0_i32, %c0_i32_0 : i32, i32
  }
  func.func @transform_13(%arg0: i32) -> (i32, i32) {
    %c0_i32 = arith.constant 0 : i32
    %c0_i32_0 = arith.constant 0 : i32
    %c0_i32_1 = arith.constant 0 : i32
    return %c0_i32, %c0_i32_0 : i32, i32
  }
}

</mosaic_0001>

<llo_original>
// kernel: tpu_custom_call.1
$region0: #{tpu_custom_call.1}
  #allocation0 [shape = 'u32[]', space=smem, size = 0x4, offset = 0x4, fixed_abs, tag = 'smem constant byte address 0x4 - core index']
  #allocation1 [shape = 'u32[144,128]{1,0:T(1,128)}', space=vmem, size = 0x12000, scoped, tag = 'internal scratch']
  %s0 = inlined_call_operand.hbm [shape: f32[8,16], index: 0, kind: input, shape index: {}]
  %s1 = inlined_call_operand.hbm [shape: f32[8,24], index: 1, kind: input, shape index: {}]
  %s2 = inlined_call_operand.hbm [shape: bf16[16,32], index: 2, kind: input, shape index: {}]
  %s3 = inlined_call_operand.hbm [shape: f32[1,32], index: 3, kind: input, shape index: {}]
  %s4 = inlined_call_operand.hbm [shape: bf16[24,32], index: 4, kind: input, shape index: {}]
  %s5 = inlined_call_operand.hbm [shape: f32[1,32], index: 5, kind: input, shape index: {}]
  %s6 = inlined_call_operand.hbm [shape: bf16[32,1024], index: 6, kind: input, shape index: {}]
  %s7 = inlined_call_operand.hbm [shape: bf16[32,1024], index: 7, kind: input, shape index: {}]
  %s8 = inlined_call_operand.hbm [shape: f32[1,1024], index: 8, kind: input, shape index: {}]
  %s9 = inlined_call_operand.hbm [shape: bf16[1024,1024], index: 9, kind: input, shape index: {}]
  %s10 = inlined_call_operand.hbm [shape: f32[1,1024], index: 10, kind: input, shape index: {}]
  %s11 = inlined_call_operand.vmem [shape: bf16[1,1024,16], index: 11, kind: input, shape index: {}]
  %s12 = inlined_call_operand.hbm [shape: f32[1,16], index: 12, kind: input, shape index: {}]
  %s13 = inlined_call_operand.hbm [shape: f32[8,16], index: 13, kind: output, shape index: {}]
  %s14 = sld [smem:[#allocation0]]
  $region110: #{tpu_custom_call.1} parent=0
    _
  %s16 = ssub.s32 1, %s14
  %s17 = scalar_select 0, %s16, %s14
  $region1: #{tpu_custom_call.1} parent=0
    #allocation2 [shape = 'u8[4096]{0}', space=vmem, size = 0x1000, scoped, tag = 'input window, operand 0, single buffered']
    #allocation3 [shape = 's32[1]{0}', space=sflag, size = 0x4, scoped, tag = 'scoped memory for tpu_custom_call.1']
    #allocation4 [shape = 's32[1]{0}', space=sflag, size = 0x4, scoped, tag = 'scoped memory for tpu_custom_call.1']
    #allocation5 [shape = 'u8[4096]{0}', space=vmem, size = 0x1000, scoped, tag = 'input window, operand 1, single buffered']
    #allocation6 [shape = 's32[1]{0}', space=sflag, size = 0x4, scoped, tag = 'scoped memory for tpu_custom_call.1']
    #allocation7 [shape = 'u8[4096]{0}', space=vmem, size = 0x1000, scoped, tag = 'input window, operand 2, single buffered']
    #allocation8 [shape = 'u8[512]{0}', space=vmem, size = 0x400, scoped, tag = 'input window, operand 3, single buffered']
    #allocation9 [shape = 's32[1]{0}', space=sflag, size = 0x4, scoped, tag = 'scoped memory for tpu_custom_call.1']
    #allocation10 [shape = 'u8[6144]{0}', space=vmem, size = 0x1800, scoped, tag = 'input window, operand 4, single buffered']
    #allocation11 [shape = 'u8[512]{0}', space=vmem, size = 0x400, scoped, tag = 'input window, operand 5, single buffered']
    #allocation12 [shape = 's32[1]{0}', space=sflag, size = 0x4, scoped, tag = 'scoped memory for tpu_custom_call.1']
    #allocation13 [shape = 'u8[65536]{0}', space=vmem, size = 0x10000, scoped, tag = 'input window, operand 6, single buffered']
    #allocation14 [shape = 'u8[65536]{0}', space=vmem, size = 0x10000, scoped, tag = 'input window, operand 7, single buffered']
    #allocation15 [shape = 's32[1]{0}', space=sflag, size = 0x4, scoped, tag = 'scoped memory for tpu_custom_call.1']
    #allocation16 [shape = 'u8[4096]{0}', space=vmem, size = 0x1000, scoped, tag = 'input window, operand 8, single buffered']
    #allocation17 [shape = 'u8[2097152]{0}', space=vmem, size = 0x200000, scoped, tag = 'input window, operand 9, single buffered']
    #allocation18 [shape = 's32[1]{0}', space=sflag, size = 0x4, scoped, tag = 'scoped memory for tpu_custom_call.1']
    #allocation19 [shape = 'u8[4096]{0}', space=vmem, size = 0x1000, scoped, tag = 'input window, operand 10, single buffered']
    #allocation20 [shape = 'u8[512]{0}', space=vmem, size = 0x400, scoped, tag = 'input window, operand 12, single buffered']
    #allocation21 [shape = 's32[1]{0}', space=sflag, size = 0x4, scoped, tag = 'scoped memory for tpu_custom_call.1']
    #allocation22 [shape = 'u8[4096]{0}', space=vmem, size = 0x1000, scoped, tag = 'output window, operand 0, single buffered']
    %18 = vsyncpa [#allocation3], 0
    %19 = vsyncpa [#allocation6], 0
    %20 = vsyncpa [#allocation9], 0
    %21 = vsyncpa [#allocation12], 0
    %22 = vsyncpa [#allocation15], 0
    %23 = vsyncpa [#allocation18], 0
    %24 = vsyncpa [#allocation21], 0
    %25 = vsyncpa [#allocation4], 0
    // Predicated region
    $region2: #{tpu_custom_call.1} parent=1 // pred_check
      _
    $region3: #{tpu_custom_call.1} parent=1 // pred_check_branch
      %27 = sbr.rel (0) target = $region5
    $region4: #{tpu_custom_call.1} parent=1 // pred_region
      %s29 = ssub.s32 128, 128
      %30 = vsyncadd [#allocation3], %s29
      %s32 = sshll.u32 [#allocation2], 4
      %s33 = int_to_ptr.vmem [resolvable:$true] %s32
      %35 = dma.hbm_to_vmem [thread:$0]  %s0, 128, %s33, [#allocation3]
    $region5: #{tpu_custom_call.1} parent=1 // pred_fallthru
      _
    // Predicated region
    $region6: #{tpu_custom_call.1} parent=1 // pred_check
      _
    $region7: #{tpu_custom_call.1} parent=1 // pred_check_branch
      %37 = sbr.rel (0) target = $region9
    $region8: #{tpu_custom_call.1} parent=1 // pred_region
      %s39 = ssub.s32 128, 128
      %40 = vsyncadd [#allocation6], %s39
      %s42 = sshll.u32 [#allocation5], 4
      %s43 = int_to_ptr.vmem [resolvable:$true] %s42
      %45 = dma.hbm_to_vmem [thread:$0]  %s1, 128, %s43, [#allocation6]
    $region9: #{tpu_custom_call.1} parent=1 // pred_fallthru
      _
    // Predicated region
    $region10: #{tpu_custom_call.1} parent=1 // pred_check
      _
    $region11: #{tpu_custom_call.1} parent=1 // pred_check_branch
      %47 = sbr.rel (0) target = $region13
    $region12: #{tpu_custom_call.1} parent=1 // pred_region
      %s49 = ssub.s32 128, 128
      %50 = vsyncadd [#allocation6], %s49
      %s51 = sshll.u32 [#allocation7], 4
      %s52 = int_to_ptr.vmem [resolvable:$true] %s51
      %57 = dma.hbm_to_vmem [thread:$0]  %s2, 128, %s52, [#allocation6], 64, 64, 4
    $region13: #{tpu_custom_call.1} parent=1 // pred_fallthru
      _
    // Predicated region
    $region14: #{tpu_custom_call.1} parent=1 // pred_check
      _
    $region15: #{tpu_custom_call.1} parent=1 // pred_check_branch
      %59 = sbr.rel (0) target = $region17
    $region16: #{tpu_custom_call.1} parent=1 // pred_region
      %s61 = ssub.s32 16, 16
      %62 = vsyncadd [#allocation9], %s61
      %s64 = sshll.u32 [#allocation8], 4
      %s65 = int_to_ptr.vmem [resolvable:$true] %s64
      %67 = dma.hbm_to_vmem [thread:$0]  %s3, 16, %s65, [#allocation9]
    $region17: #{tpu_custom_call.1} parent=1 // pred_fallthru
      _
    // Predicated region
    $region18: #{tpu_custom_call.1} parent=1 // pred_check
      _
    $region19: #{tpu_custom_call.1} parent=1 // pred_check_branch
      %69 = sbr.rel (0) target = $region21
    $region20: #{tpu_custom_call.1} parent=1 // pred_region
      %s71 = ssub.s32 192, 192
      %72 = vsyncadd [#allocation9], %s71
      %s73 = sshll.u32 [#allocation10], 4
      %s74 = int_to_ptr.vmem [resolvable:$true] %s73
      %79 = dma.hbm_to_vmem [thread:$0]  %s4, 192, %s74, [#allocation9], 64, 64, 4
    $region21: #{tpu_custom_call.1} parent=1 // pred_fallthru
      _
    // Predicated region
    $region22: #{tpu_custom_call.1} parent=1 // pred_check
      _
    $region23: #{tpu_custom_call.1} parent=1 // pred_check_branch
      %81 = sbr.rel (0) target = $region25
    $region24: #{tpu_custom_call.1} parent=1 // pred_region
      %s83 = ssub.s32 16, 16
      %84 = vsyncadd [#allocation12], %s83
      %s86 = sshll.u32 [#allocation11], 4
      %s87 = int_to_ptr.vmem [resolvable:$true] %s86
      %89 = dma.hbm_to_vmem [thread:$0]  %s5, 16, %s87, [#allocation12]
    $region25: #{tpu_custom_call.1} parent=1 // pred_fallthru
      _
    // Predicated region
    $region26: #{tpu_custom_call.1} parent=1 // pred_check
      _
    $region27: #{tpu_custom_call.1} parent=1 // pred_check_branch
      %91 = sbr.rel (0) target = $region29
    $region28: #{tpu_custom_call.1} parent=1 // pred_region
      %s93 = ssub.s32 2048, 2048
      %94 = vsyncadd [#allocation12], %s93
      %s95 = sshll.u32 [#allocation13], 4
      %s96 = int_to_ptr.vmem [resolvable:$true] %s95
      %101 = dma.hbm_to_vmem [thread:$0]  %s6, 2048, %s96, [#allocation12], 512, 512, 32
    $region29: #{tpu_custom_call.1} parent=1 // pred_fallthru
      _
    // Predicated region
    $region30: #{tpu_custom_call.1} parent=1 // pred_check
      _
    $region31: #{tpu_custom_call.1} parent=1 // pred_check_branch
      %103 = sbr.rel (0) target = $region33
    $region32: #{tpu_custom_call.1} parent=1 // pred_region
      %s105 = ssub.s32 2048, 2048
      %106 = vsyncadd [#allocation15], %s105
      %s107 = sshll.u32 [#allocation14], 4
      %s108 = int_to_ptr.vmem [resolvable:$true] %s107
      %113 = dma.hbm_to_vmem [thread:$0]  %s7, 2048, %s108, [#allocation15], 512, 512, 32
    $region33: #{tpu_custom_call.1} parent=1 // pred_fallthru
      _
    // Predicated region
    $region34: #{tpu_custom_call.1} parent=1 // pred_check
      _
    $region35: #{tpu_custom_call.1} parent=1 // pred_check_branch
      %115 = sbr.rel (0) target = $region37
    $region36: #{tpu_custom_call.1} parent=1 // pred_region
      %s117 = ssub.s32 128, 128
      %118 = vsyncadd [#allocation15], %s117
      %s120 = sshll.u32 [#allocation16], 4
      %s121 = int_to_ptr.vmem [resolvable:$true] %s120
      %123 = dma.hbm_to_vmem [thread:$0]  %s8, 128, %s121, [#allocation15]
    $region37: #{tpu_custom_call.1} parent=1 // pred_fallthru
      _
    // Predicated region
    $region38: #{tpu_custom_call.1} parent=1 // pred_check
      _
    $region39: #{tpu_custom_call.1} parent=1 // pred_check_branch
      %125 = sbr.rel (0) target = $region41
    $region40: #{tpu_custom_call.1} parent=1 // pred_region
      %s127 = ssub.s32 65536, 65536
      %128 = vsyncadd [#allocation18], %s127
      %s129 = sshll.u32 [#allocation17], 4
      %s130 = int_to_ptr.vmem [resolvable:$true] %s129
      %135 = dma.hbm_to_vmem [thread:$0]  %s9, 65536, %s130, [#allocation18], 512, 512, 32
    $region41: #{tpu_custom_call.1} parent=1 // pred_fallthru
      _
    // Predicated region
    $region42: #{tpu_custom_call.1} parent=1 // pred_check
      _
    $region43: #{tpu_custom_call.1} parent=1 // pred_check_branch
      %137 = sbr.rel (0) target = $region45
    $region44: #{tpu_custom_call.1} parent=1 // pred_region
      %s139 = ssub.s32 128, 128
      %140 = vsyncadd [#allocation18], %s139
      %s142 = sshll.u32 [#allocation19], 4
      %s143 = int_to_ptr.vmem [resolvable:$true] %s142
      %145 = dma.hbm_to_vmem [thread:$0]  %s10, 128, %s143, [#allocation18]
    $region45: #{tpu_custom_call.1} parent=1 // pred_fallthru
      _
    // Predicated region
    $region46: #{tpu_custom_call.1} parent=1 // pred_check
      _
    $region47: #{tpu_custom_call.1} parent=1 // pred_check_branch
      %147 = sbr.rel (0) target = $region49
    $region48: #{tpu_custom_call.1} parent=1 // pred_region
      _
    $region49: #{tpu_custom_call.1} parent=1 // pred_fallthru
      _
    // Predicated region
    $region50: #{tpu_custom_call.1} parent=1 // pred_check
      _
    $region51: #{tpu_custom_call.1} parent=1 // pred_check_branch
      %149 = sbr.rel (0) target = $region53
    $region52: #{tpu_custom_call.1} parent=1 // pred_region
      %s151 = ssub.s32 16, 16
      %152 = vsyncadd [#allocation21], %s151
      %s154 = sshll.u32 [#allocation20], 4
      %s155 = int_to_ptr.vmem [resolvable:$true] %s154
      %157 = dma.hbm_to_vmem [thread:$0]  %s12, 16, %s155, [#allocation21]
    $region53: #{tpu_custom_call.1} parent=1 // pred_fallthru
      _
    // Predicated region
    $region54: #{tpu_custom_call.1} parent=1 // pred_check
      _
    $region55: #{tpu_custom_call.1} parent=1 // pred_check_branch
      %159 = sbr.rel (0) target = $region57
    $region56: #{tpu_custom_call.1} parent=1 // pred_region
      %160 = dma.done [#allocation3], 128
    $region57: #{tpu_custom_call.1} parent=1 // pred_fallthru
      _
    // Predicated region
    $region58: #{tpu_custom_call.1} parent=1 // pred_check
      _
    $region59: #{tpu_custom_call.1} parent=1 // pred_check_branch
      %162 = sbr.rel (0) target = $region61
    $region60: #{tpu_custom_call.1} parent=1 // pred_region
      %163 = dma.done [#allocation6], 128
    $region61: #{tpu_custom_call.1} parent=1 // pred_fallthru
      _
    // Predicated region
    $region62: #{tpu_custom_call.1} parent=1 // pred_check
      _
    $region63: #{tpu_custom_call.1} parent=1 // pred_check_branch
      %165 = sbr.rel (0) target = $region65
    $region64: #{tpu_custom_call.1} parent=1 // pred_region
      %166 = dma.done [#allocation6], 128
    $region65: #{tpu_custom_call.1} parent=1 // pred_fallthru
      _
    // Predicated region
    $region66: #{tpu_custom_call.1} parent=1 // pred_check
      _
    $region67: #{tpu_custom_call.1} parent=1 // pred_check_branch
      %168 = sbr.rel (0) target = $region69
    $region68: #{tpu_custom_call.1} parent=1 // pred_region
      %169 = dma.done [#allocation9], 16
    $region69: #{tpu_custom_call.1} parent=1 // pred_fallthru
      _
    // Predicated region
    $region70: #{tpu_custom_call.1} parent=1 // pred_check
      _
    $region71: #{tpu_custom_call.1} parent=1 // pred_check_branch
      %171 = sbr.rel (0) target = $region73
    $region72: #{tpu_custom_call.1} parent=1 // pred_region
      %172 = dma.done [#allocation9], 192
    $region73: #{tpu_custom_call.1} parent=1 // pred_fallthru
      _
    // Predicated region
    $region74: #{tpu_custom_call.1} parent=1 // pred_check
      _
    $region75: #{tpu_custom_call.1} parent=1 // pred_check_branch
      %174 = sbr.rel (0) target = $region77
    $region76: #{tpu_custom_call.1} parent=1 // pred_region
      %175 = dma.done [#allocation12], 16
    $region77: #{tpu_custom_call.1} parent=1 // pred_fallthru
      _
    // Predicated region
    $region78: #{tpu_custom_call.1} parent=1 // pred_check
      _
    $region79: #{tpu_custom_call.1} parent=1 // pred_check_branch
      %177 = sbr.rel (0) target = $region81
    $region80: #{tpu_custom_call.1} parent=1 // pred_region
      %178 = dma.done [#allocation12], 2048
    $region81: #{tpu_custom_call.1} parent=1 // pred_fallthru
      _
    // Predicated region
    $region82: #{tpu_custom_call.1} parent=1 // pred_check
      _
    $region83: #{tpu_custom_call.1} parent=1 // pred_check_branch
      %180 = sbr.rel (0) target = $region85
    $region84: #{tpu_custom_call.1} parent=1 // pred_region
      %181 = dma.done [#allocation15], 2048
    $region85: #{tpu_custom_call.1} parent=1 // pred_fallthru
      _
    // Predicated region
    $region86: #{tpu_custom_call.1} parent=1 // pred_check
      _
    $region87: #{tpu_custom_call.1} parent=1 // pred_check_branch
      %183 = sbr.rel (0) target = $region89
    $region88: #{tpu_custom_call.1} parent=1 // pred_region
      %184 = dma.done [#allocation15], 128
    $region89: #{tpu_custom_call.1} parent=1 // pred_fallthru
      _
    // Predicated region
    $region90: #{tpu_custom_call.1} parent=1 // pred_check
      _
    $region91: #{tpu_custom_call.1} parent=1 // pred_check_branch
      %186 = sbr.rel (0) target = $region93
    $region92: #{tpu_custom_call.1} parent=1 // pred_region
      %187 = dma.done [#allocation18], 65536
    $region93: #{tpu_custom_call.1} parent=1 // pred_fallthru
      _
    // Predicated region
    $region94: #{tpu_custom_call.1} parent=1 // pred_check
      _
    $region95: #{tpu_custom_call.1} parent=1 // pred_check_branch
      %189 = sbr.rel (0) target = $region97
    $region96: #{tpu_custom_call.1} parent=1 // pred_region
      %190 = dma.done [#allocation18], 128
    $region97: #{tpu_custom_call.1} parent=1 // pred_fallthru
      _
    // Predicated region
    $region98: #{tpu_custom_call.1} parent=1 // pred_check
      _
    $region99: #{tpu_custom_call.1} parent=1 // pred_check_branch
      %192 = sbr.rel (0) target = $region101
    $region100: #{tpu_custom_call.1} parent=1 // pred_region
      %193 = dma.done [#allocation21], 16
    $region101: #{tpu_custom_call.1} parent=1 // pred_fallthru
      _
    %v195 = vld [vmem:[#allocation2] sm:$0xff]
    %v196 = vpack.c.bf16 %v195, %v195
    %v197 = vld [vmem:[#allocation7] sm:$0xf]
    %v198 = vld [vmem:[#allocation7 + $0x4] sm:$0xf]
    %v199 = vld [vmem:[#allocation8] sm:$0x1]
    %v201 = vlaneseq
    %v202 = vshrl.u32 %v201, 7
    %v203 = vsub.s32 0, %v202
    %v204 = vrot.slane %v199, %v203
    %v208 = vunpack.c.l.b16 %v197
    %v209 = vunpack.c.l.b16 %v198
    %v210 = vpack.c.b16 %v209, %v208
    %vm212 = vcmask 130048
    %v214 = vsel %vm212, %v196, 0
    %216 = vmatprep.subr.bf16.mxu0 0
    %217 = vmatpush1.bf16.msra.mxu0 0
    %218 = vmatprep.subr.bf16.mxu0 0
    %219 = vmatpush1.bf16.msra.mxu0 0
    %220 = vmatprep.subr.bf16.mxu0 0
    %221 = vmatpush1.bf16.msra.mxu0 0
    %222 = vmatprep.subr.bf16.mxu0 0
    %223 = vmatpush1.bf16.msra.mxu0 0
    %224 = vmatprep.subr.bf16.mxu0 0
    %225 = vmatpush1.bf16.msra.mxu0 0
    %226 = vmatprep.subr.bf16.mxu0 0
    %227 = vmatpush1.bf16.msra.mxu0 0
    %228 = vmatprep.subr.bf16.mxu0 0
    %229 = vmatpush1.bf16.msra.mxu0 0
    %230 = vmatprep.subr.bf16.mxu0 0
    %231 = vmatpush1.bf16.msra.mxu0 %v210
    %232 = vmatprep.subr.bf16.mxu0 0
    %233 = vmatpush2.bf16.msra.mxu0 0
    %234 = vmatprep.subr.bf16.mxu0 0
    %235 = vmatpush2.bf16.msra.mxu0 0
    %236 = vmatprep.subr.bf16.mxu0 0
    %237 = vmatpush2.bf16.msra.mxu0 0
    %238 = vmatprep.subr.bf16.mxu0 0
    %239 = vmatpush2.bf16.msra.mxu0 0
    %240 = vmatprep.subr.bf16.mxu0 0
    %241 = vmatpush2.bf16.msra.mxu0 0
    %242 = vmatprep.subr.bf16.mxu0 0
    %243 = vmatpush2.bf16.msra.mxu0 0
    %244 = vmatprep.subr.bf16.mxu0 0
    %245 = vmatpush2.bf16.msra.mxu0 0
    %246 = vmatprep.subr.bf16.mxu0 0
    %247 = vmatpush2.bf16.msra.mxu0 0
    %248 = vmatprep.mubr.bf16.mxu0 0
    %249 = vmatmul.mubr.bf16.gmra.mxu0 %v214
    %v250 = vpop.f32.mrf.mxu0
    %v251 = vadd.f32 %v204, %v250
    %v252 = vpop.f32.mrf.mxu0
    %v253 = vpop.f32.mrf.mxu0
    %v254 = vpop.f32.mrf.mxu0
    %255 = vdwg.mxu0
    %v256 = vld [vmem:[#allocation5] sm:$0xff]
    %v257 = vpack.c.bf16 %v256, %v256
    %v258 = vld [vmem:[#allocation10] sm:$0xf]
    %v259 = vld [vmem:[#allocation10 + $0x4] sm:$0xf]
    %v260 = vld [vmem:[#allocation10 + $0x8] sm:$0xf]
    %v261 = vld [vmem:[#allocation11] sm:$0x1]
    %v263 = vlaneseq
    %v264 = vshrl.u32 %v263, 7
    %v265 = vsub.s32 0, %v264
    %v266 = vrot.slane %v261, %v265
    %v271 = vunpack.c.l.b16 %v258
    %v272 = vunpack.c.l.b16 %v259
    %v273 = vunpack.c.l.b16 %v260
    %v274 = vpack.c.b16 %v272, %v271
    %v275 = vpack.c.b16 %v273, %v273
    %vm277 = vcmask 195584
    %v279 = vsel %vm277, %v257, 0
    %vm281 = vcmask 1043456
    %v283 = vsel %vm281, %v275, 0
    %285 = vmatprep.subr.bf16.mxu0 0
    %286 = vmatpush1.bf16.msra.mxu0 0
    %287 = vmatprep.subr.bf16.mxu0 0
    %288 = vmatpush1.bf16.msra.mxu0 0
    %289 = vmatprep.subr.bf16.mxu0 0
    %290 = vmatpush1.bf16.msra.mxu0 0
    %291 = vmatprep.subr.bf16.mxu0 0
    %292 = vmatpush1.bf16.msra.mxu0 0
    %293 = vmatprep.subr.bf16.mxu0 0
    %294 = vmatpush1.bf16.msra.mxu0 0
    %295 = vmatprep.subr.bf16.mxu0 0
    %296 = vmatpush1.bf16.msra.mxu0 0
    %297 = vmatprep.subr.bf16.mxu0 0
    %298 = vmatpush1.bf16.msra.mxu0 %v283
    %299 = vmatprep.subr.bf16.mxu0 0
    %300 = vmatpush1.bf16.msra.mxu0 %v274
    %301 = vmatprep.subr.bf16.mxu0 0
    %302 = vmatpush2.bf16.msra.mxu0 0
    %303 = vmatprep.subr.bf16.mxu0 0
    %304 = vmatpush2.bf16.msra.mxu0 0
    %305 = vmatprep.subr.bf16.mxu0 0
    %306 = vmatpush2.bf16.msra.mxu0 0
    %307 = vmatprep.subr.bf16.mxu0 0
    %308 = vmatpush2.bf16.msra.mxu0 0
    %309 = vmatprep.subr.bf16.mxu0 0
    %310 = vmatpush2.bf16.msra.mxu0 0
    %311 = vmatprep.subr.bf16.mxu0 0
    %312 = vmatpush2.bf16.msra.mxu0 0
    %313 = vmatprep.subr.bf16.mxu0 0
    %314 = vmatpush2.bf16.msra.mxu0 0
    %315 = vmatprep.subr.bf16.mxu0 0
    %316 = vmatpush2.bf16.msra.mxu0 0
    %317 = vmatprep.mubr.bf16.mxu0 0
    %318 = vmatmul.mubr.bf16.gmra.mxu0 %v279
    %v319 = vpop.f32.mrf.mxu0
    %v320 = vadd.f32 %v266, %v319
    %v321 = vpop.f32.mrf.mxu0
    %v322 = vpop.f32.mrf.mxu0
    %v323 = vpop.f32.mrf.mxu0
    %324 = vdwg.mxu0
    %v325 = vpack.c.bf16 %v251, %v251
    %v326 = vld [vmem:[#allocation13] sm:$0xff]
    %v327 = vld [vmem:[#allocation13 + $0x8] sm:$0xff]
    %v328 = vld [vmem:[#allocation13 + $0x10] sm:$0xff]
    %v329 = vld [vmem:[#allocation13 + $0x18] sm:$0xff]
    %v330 = vld [vmem:[#allocation13 + $0x20] sm:$0xff]
    %v331 = vld [vmem:[#allocation13 + $0x28] sm:$0xff]
    %v332 = vld [vmem:[#allocation13 + $0x30] sm:$0xff]
    %v333 = vld [vmem:[#allocation13 + $0x38] sm:$0xff]
    %v334 = vld [vmem:[#allocation13 + $0x40] sm:$0xff]
    %v335 = vld [vmem:[#allocation13 + $0x48] sm:$0xff]
    %v336 = vld [vmem:[#allocation13 + $0x50] sm:$0xff]
    %v337 = vld [vmem:[#allocation13 + $0x58] sm:$0xff]
    %v338 = vld [vmem:[#allocation13 + $0x60] sm:$0xff]
    %v339 = vld [vmem:[#allocation13 + $0x68] sm:$0xff]
    %v340 = vld [vmem:[#allocation13 + $0x70] sm:$0xff]
    %v341 = vld [vmem:[#allocation13 + $0x78] sm:$0xff]
    %v342 = vpack.c.bf16 %v320, %v320
    %v343 = vld [vmem:[#allocation14] sm:$0xff]
    %v344 = vld [vmem:[#allocation14 + $0x8] sm:$0xff]
    %v345 = vld [vmem:[#allocation14 + $0x10] sm:$0xff]
    %v346 = vld [vmem:[#allocation14 + $0x18] sm:$0xff]
    %v347 = vld [vmem:[#allocation14 + $0x20] sm:$0xff]
    %v348 = vld [vmem:[#allocation14 + $0x28] sm:$0xff]
    %v349 = vld [vmem:[#allocation14 + $0x30] sm:$0xff]
    %v350 = vld [vmem:[#allocation14 + $0x38] sm:$0xff]
    %v351 = vld [vmem:[#allocation14 + $0x40] sm:$0xff]
    %v352 = vld [vmem:[#allocation14 + $0x48] sm:$0xff]
    %v353 = vld [vmem:[#allocation14 + $0x50] sm:$0xff]
    %v354 = vld [vmem:[#allocation14 + $0x58] sm:$0xff]
    %v355 = vld [vmem:[#allocation14 + $0x60] sm:$0xff]
    %v356 = vld [vmem:[#allocation14 + $0x68] sm:$0xff]
    %v357 = vld [vmem:[#allocation14 + $0x70] sm:$0xff]
    %v358 = vld [vmem:[#allocation14 + $0x78] sm:$0xff]
    %v375 = vunpack.c.l.b16 %v343
    %v376 = vunpack.c.h.b16 %v343
    %v377 = vunpack.c.l.b16 %v344
    %v378 = vunpack.c.h.b16 %v344
    %v379 = vunpack.c.l.b16 %v345
    %v380 = vunpack.c.h.b16 %v345
    %v381 = vunpack.c.l.b16 %v346
    %v382 = vunpack.c.h.b16 %v346
    %v383 = vunpack.c.l.b16 %v347
    %v384 = vunpack.c.h.b16 %v347
    %v385 = vunpack.c.l.b16 %v348
    %v386 = vunpack.c.h.b16 %v348
    %v387 = vunpack.c.l.b16 %v349
    %v388 = vunpack.c.h.b16 %v349
    %v389 = vunpack.c.l.b16 %v350
    %v390 = vunpack.c.h.b16 %v350
    %v391 = vunpack.c.l.b16 %v351
    %v392 = vunpack.c.h.b16 %v351
    %v393 = vunpack.c.l.b16 %v352
    %v394 = vunpack.c.h.b16 %v352
    %v395 = vunpack.c.l.b16 %v353
    %v396 = vunpack.c.h.b16 %v353
    %v397 = vunpack.c.l.b16 %v354
    %v398 = vunpack.c.h.b16 %v354
    %v399 = vunpack.c.l.b16 %v355
    %v400 = vunpack.c.h.b16 %v355
    %v401 = vunpack.c.l.b16 %v356
    %v402 = vunpack.c.h.b16 %v356
    %v403 = vunpack.c.l.b16 %v357
    %v404 = vunpack.c.h.b16 %v357
    %v405 = vunpack.c.l.b16 %v358
    %v406 = vunpack.c.h.b16 %v358
    %v407 = vpack.c.b16 %v383, %v375
    %v408 = vpack.c.b16 %v384, %v376
    %v409 = vpack.c.b16 %v385, %v377
    %v410 = vpack.c.b16 %v386, %v378
    %v411 = vpack.c.b16 %v387, %v379
    %v412 = vpack.c.b16 %v388, %v380
    %v413 = vpack.c.b16 %v389, %v381
    %v414 = vpack.c.b16 %v390, %v382
    %v415 = vpack.c.b16 %v399, %v391
    %v416 = vpack.c.b16 %v400, %v392
    %v417 = vpack.c.b16 %v401, %v393
    %v418 = vpack.c.b16 %v402, %v394
    %v419 = vpack.c.b16 %v403, %v395
    %v420 = vpack.c.b16 %v404, %v396
    %v421 = vpack.c.b16 %v405, %v397
    %v422 = vpack.c.b16 %v406, %v398
    %vm439 = vcmask 261120
    %v441 = vsel %vm439, %v342, 0
    %443 = vmatprep.subr.bf16.mxu0 0
    %444 = vmatpush1.bf16.msra.mxu0 0
    %445 = vmatprep.subr.bf16.mxu0 0
    %446 = vmatpush1.bf16.msra.mxu0 0
    %447 = vmatprep.subr.bf16.mxu0 0
    %448 = vmatpush1.bf16.msra.mxu0 0
    %449 = vmatprep.subr.bf16.mxu0 0
    %450 = vmatpush1.bf16.msra.mxu0 0
    %451 = vmatprep.subr.bf16.mxu0 0
    %452 = vmatpush1.bf16.msra.mxu0 0
    %453 = vmatprep.subr.bf16.mxu0 0
    %454 = vmatpush1.bf16.msra.mxu0 0
    %455 = vmatprep.subr.bf16.mxu0 %v416
    %456 = vmatpush1.bf16.msra.mxu0 %v415
    %457 = vmatprep.subr.bf16.mxu0 %v408
    %458 = vmatpush1.bf16.msra.mxu0 %v407
    %459 = vmatprep.subr.bf16.mxu0 0
    %460 = vmatpush2.bf16.msra.mxu0 0
    %461 = vmatprep.subr.bf16.mxu0 0
    %462 = vmatpush2.bf16.msra.mxu0 0
    %463 = vmatprep.subr.bf16.mxu0 0
    %464 = vmatpush2.bf16.msra.mxu0 0
    %465 = vmatprep.subr.bf16.mxu0 0
    %466 = vmatpush2.bf16.msra.mxu0 0
    %467 = vmatprep.subr.bf16.mxu0 0
    %468 = vmatpush2.bf16.msra.mxu0 0
    %469 = vmatprep.subr.bf16.mxu0 0
    %470 = vmatpush2.bf16.msra.mxu0 0
    %471 = vmatprep.subr.bf16.mxu0 0
    %472 = vmatpush2.bf16.msra.mxu0 0
    %473 = vmatprep.subr.bf16.mxu0 0
    %474 = vmatpush2.bf16.msra.mxu0 0
    %475 = vmatprep.mubr.bf16.mxu0 0
    %476 = vmatmul.mubr.bf16.gmra.mxu0 %v441
    %v477 = vpop.f32.mrf.mxu0
    %v478 = vadd.f32 0.0, %v477
    %v479 = vpop.f32.mrf.mxu0
    %v480 = vadd.f32 0.0, %v479
    %v481 = vpop.f32.mrf.mxu0
    %v482 = vpop.f32.mrf.mxu0
    %483 = vdwg.mxu0
    %484 = vmatprep.subr.bf16.mxu0 0
    %485 = vmatpush1.bf16.msra.mxu0 0
    %486 = vmatprep.subr.bf16.mxu0 0
    %487 = vmatpush1.bf16.msra.mxu0 0
    %488 = vmatprep.subr.bf16.mxu0 0
    %489 = vmatpush1.bf16.msra.mxu0 0
    %490 = vmatprep.subr.bf16.mxu0 0
    %491 = vmatpush1.bf16.msra.mxu0 0
    %492 = vmatprep.subr.bf16.mxu0 0
    %493 = vmatpush1.bf16.msra.mxu0 0
    %494 = vmatprep.subr.bf16.mxu0 0
    %495 = vmatpush1.bf16.msra.mxu0 0
    %496 = vmatprep.subr.bf16.mxu0 %v418
    %497 = vmatpush1.bf16.msra.mxu0 %v417
    %498 = vmatprep.subr.bf16.mxu0 %v410
    %499 = vmatpush1.bf16.msra.mxu0 %v409
    %500 = vmatprep.subr.bf16.mxu0 0
    %501 = vmatpush2.bf16.msra.mxu0 0
    %502 = vmatprep.subr.bf16.mxu0 0
    %503 = vmatpush2.bf16.msra.mxu0 0
    %504 = vmatprep.subr.bf16.mxu0 0
    %505 = vmatpush2.bf16.msra.mxu0 0
    %506 = vmatprep.subr.bf16.mxu0 0
    %507 = vmatpush2.bf16.msra.mxu0 0
    %508 = vmatprep.subr.bf16.mxu0 0
    %509 = vmatpush2.bf16.msra.mxu0 0
    %510 = vmatprep.subr.bf16.mxu0 0
    %511 = vmatpush2.bf16.msra.mxu0 0
    %512 = vmatprep.subr.bf16.mxu0 0
    %513 = vmatpush2.bf16.msra.mxu0 0
    %514 = vmatprep.subr.bf16.mxu0 0
    %515 = vmatpush2.bf16.msra.mxu0 0
    %516 = vmatprep.mubr.bf16.mxu0 0
    %517 = vmatmul.mubr.bf16.gmra.mxu0 %v441
    %v518 = vpop.f32.mrf.mxu0
    %v519 = vadd.f32 0.0, %v518
    %v520 = vpop.f32.mrf.mxu0
    %v521 = vadd.f32 0.0, %v520
    %v522 = vpop.f32.mrf.mxu0
    %v523 = vpop.f32.mrf.mxu0
    %524 = vdwg.mxu0
    %525 = vmatprep.subr.bf16.mxu0 0
    %526 = vmatpush1.bf16.msra.mxu0 0
    %527 = vmatprep.subr.bf16.mxu0 0
    %528 = vmatpush1.bf16.msra.mxu0 0
    %529 = vmatprep.subr.bf16.mxu0 0
    %530 = vmatpush1.bf16.msra.mxu0 0
    %531 = vmatprep.subr.bf16.mxu0 0
    %532 = vmatpush1.bf16.msra.mxu0 0
    %533 = vmatprep.subr.bf16.mxu0 0
    %534 = vmatpush1.bf16.msra.mxu0 0
    %535 = vmatprep.subr.bf16.mxu0 0
    %536 = vmatpush1.bf16.msra.mxu0 0
    %537 = vmatprep.subr.bf16.mxu0 %v420
    %538 = vmatpush1.bf16.msra.mxu0 %v419
    %539 = vmatprep.subr.bf16.mxu0 %v412
    %540 = vmatpush1.bf16.msra.mxu0 %v411
    %541 = vmatprep.subr.bf16.mxu0 0
    %542 = vmatpush2.bf16.msra.mxu0 0
    %543 = vmatprep.subr.bf16.mxu0 0
    %544 = vmatpush2.bf16.msra.mxu0 0
    %545 = vmatprep.subr.bf16.mxu0 0
    %546 = vmatpush2.bf16.msra.mxu0 0
    %547 = vmatprep.subr.bf16.mxu0 0
    %548 = vmatpush2.bf16.msra.mxu0 0
    %549 = vmatprep.subr.bf16.mxu0 0
    %550 = vmatpush2.bf16.msra.mxu0 0
    %551 = vmatprep.subr.bf16.mxu0 0
    %552 = vmatpush2.bf16.msra.mxu0 0
    %553 = vmatprep.subr.bf16.mxu0 0
    %554 = vmatpush2.bf16.msra.mxu0 0
    %555 = vmatprep.subr.bf16.mxu0 0
    %556 = vmatpush2.bf16.msra.mxu0 0
    %557 = vmatprep.mubr.bf16.mxu0 0
    %558 = vmatmul.mubr.bf16.gmra.mxu0 %v441
    %v559 = vpop.f32.mrf.mxu0
    %v560 = vadd.f32 0.0, %v559
    %v561 = vpop.f32.mrf.mxu0
    %v562 = vadd.f32 0.0, %v561
    %v563 = vpop.f32.mrf.mxu0
    %v564 = vpop.f32.mrf.mxu0
    %565 = vdwg.mxu0
    %566 = vmatprep.subr.bf16.mxu0 0
    %567 = vmatpush1.bf16.msra.mxu0 0
    %568 = vmatprep.subr.bf16.mxu0 0
    %569 = vmatpush1.bf16.msra.mxu0 0
    %570 = vmatprep.subr.bf16.mxu0 0
    %571 = vmatpush1.bf16.msra.mxu0 0
    %572 = vmatprep.subr.bf16.mxu0 0
    %573 = vmatpush1.bf16.msra.mxu0 0
    %574 = vmatprep.subr.bf16.mxu0 0
    %575 = vmatpush1.bf16.msra.mxu0 0
    %576 = vmatprep.subr.bf16.mxu0 0
    %577 = vmatpush1.bf16.msra.mxu0 0
    %578 = vmatprep.subr.bf16.mxu0 %v422
    %579 = vmatpush1.bf16.msra.mxu0 %v421
    %580 = vmatprep.subr.bf16.mxu0 %v414
    %581 = vmatpush1.bf16.msra.mxu0 %v413
    %582 = vmatprep.subr.bf16.mxu0 0
    %583 = vmatpush2.bf16.msra.mxu0 0
    %584 = vmatprep.subr.bf16.mxu0 0
    %585 = vmatpush2.bf16.msra.mxu0 0
    %586 = vmatprep.subr.bf16.mxu0 0
    %587 = vmatpush2.bf16.msra.mxu0 0
    %588 = vmatprep.subr.bf16.mxu0 0
    %589 = vmatpush2.bf16.msra.mxu0 0
    %590 = vmatprep.subr.bf16.mxu0 0
    %591 = vmatpush2.bf16.msra.mxu0 0
    %592 = vmatprep.subr.bf16.mxu0 0
    %593 = vmatpush2.bf16.msra.mxu0 0
    %594 = vmatprep.subr.bf16.mxu0 0
    %595 = vmatpush2.bf16.msra.mxu0 0
    %596 = vmatprep.subr.bf16.mxu0 0
    %597 = vmatpush2.bf16.msra.mxu0 0
    %598 = vmatprep.mubr.bf16.mxu0 0
    %599 = vmatmul.mubr.bf16.gmra.mxu0 %v441
    %v600 = vpop.f32.mrf.mxu0
    %v601 = vadd.f32 0.0, %v600
    %v602 = vpop.f32.mrf.mxu0
    %v603 = vadd.f32 0.0, %v602
    %v604 = vpop.f32.mrf.mxu0
    %v605 = vpop.f32.mrf.mxu0
    %606 = vdwg.mxu0
    %v623 = vunpack.c.l.b16 %v326
    %v624 = vunpack.c.h.b16 %v326
    %v625 = vunpack.c.l.b16 %v327
    %v626 = vunpack.c.h.b16 %v327
    %v627 = vunpack.c.l.b16 %v328
    %v628 = vunpack.c.h.b16 %v328
    %v629 = vunpack.c.l.b16 %v329
    %v630 = vunpack.c.h.b16 %v329
    %v631 = vunpack.c.l.b16 %v330
    %v632 = vunpack.c.h.b16 %v330
    %v633 = vunpack.c.l.b16 %v331
    %v634 = vunpack.c.h.b16 %v331
    %v635 = vunpack.c.l.b16 %v332
    %v636 = vunpack.c.h.b16 %v332
    %v637 = vunpack.c.l.b16 %v333
    %v638 = vunpack.c.h.b16 %v333
    %v639 = vunpack.c.l.b16 %v334
    %v640 = vunpack.c.h.b16 %v334
    %v641 = vunpack.c.l.b16 %v335
    %v642 = vunpack.c.h.b16 %v335
    %v643 = vunpack.c.l.b16 %v336
    %v644 = vunpack.c.h.b16 %v336
    %v645 = vunpack.c.l.b16 %v337
    %v646 = vunpack.c.h.b16 %v337
    %v647 = vunpack.c.l.b16 %v338
    %v648 = vunpack.c.h.b16 %v338
    %v649 = vunpack.c.l.b16 %v339
    %v650 = vunpack.c.h.b16 %v339
    %v651 = vunpack.c.l.b16 %v340
    %v652 = vunpack.c.h.b16 %v340
    %v653 = vunpack.c.l.b16 %v341
    %v654 = vunpack.c.h.b16 %v341
    %v655 = vpack.c.b16 %v631, %v623
    %v656 = vpack.c.b16 %v632, %v624
    %v657 = vpack.c.b16 %v633, %v625
    %v658 = vpack.c.b16 %v634, %v626
    %v659 = vpack.c.b16 %v635, %v627
    %v660 = vpack.c.b16 %v636, %v628
    %v661 = vpack.c.b16 %v637, %v629
    %v662 = vpack.c.b16 %v638, %v630
    %v663 = vpack.c.b16 %v647, %v639
    %v664 = vpack.c.b16 %v648, %v640
    %v665 = vpack.c.b16 %v649, %v641
    %v666 = vpack.c.b16 %v650, %v642
    %v667 = vpack.c.b16 %v651, %v643
    %v668 = vpack.c.b16 %v652, %v644
    %v669 = vpack.c.b16 %v653, %v645
    %v670 = vpack.c.b16 %v654, %v646
    %v688 = vsel %vm439, %v325, 0
    %690 = vmatprep.subr.bf16.mxu0 0
    %691 = vmatpush1.bf16.msra.mxu0 0
    %692 = vmatprep.subr.bf16.mxu0 0
    %693 = vmatpush1.bf16.msra.mxu0 0
    %694 = vmatprep.subr.bf16.mxu0 0
    %695 = vmatpush1.bf16.msra.mxu0 0
    %696 = vmatprep.subr.bf16.mxu0 0
    %697 = vmatpush1.bf16.msra.mxu0 0
    %698 = vmatprep.subr.bf16.mxu0 0
    %699 = vmatpush1.bf16.msra.mxu0 0
    %700 = vmatprep.subr.bf16.mxu0 0
    %701 = vmatpush1.bf16.msra.mxu0 0
    %702 = vmatprep.subr.bf16.mxu0 %v664
    %703 = vmatpush1.bf16.msra.mxu0 %v663
    %704 = vmatprep.subr.bf16.mxu0 %v656
    %705 = vmatpush1.bf16.msra.mxu0 %v655
    %706 = vmatprep.subr.bf16.mxu0 0
    %707 = vmatpush2.bf16.msra.mxu0 0
    %708 = vmatprep.subr.bf16.mxu0 0
    %709 = vmatpush2.bf16.msra.mxu0 0
    %710 = vmatprep.subr.bf16.mxu0 0
    %711 = vmatpush2.bf16.msra.mxu0 0
    %712 = vmatprep.subr.bf16.mxu0 0
    %713 = vmatpush2.bf16.msra.mxu0 0
    %714 = vmatprep.subr.bf16.mxu0 0
    %715 = vmatpush2.bf16.msra.mxu0 0
    %716 = vmatprep.subr.bf16.mxu0 0
    %717 = vmatpush2.bf16.msra.mxu0 0
    %718 = vmatprep.subr.bf16.mxu0 0
    %719 = vmatpush2.bf16.msra.mxu0 0
    %720 = vmatprep.subr.bf16.mxu0 0
    %721 = vmatpush2.bf16.msra.mxu0 0
    %722 = vmatprep.mubr.bf16.mxu0 0
    %723 = vmatmul.mubr.bf16.gmra.mxu0 %v688
    %v724 = vpop.f32.mrf.mxu0
    %v725 = vadd.f32 %v478, %v724
    %v726 = vpop.f32.mrf.mxu0
    %v727 = vadd.f32 %v480, %v726
    %v728 = vpop.f32.mrf.mxu0
    %v729 = vpop.f32.mrf.mxu0
    %730 = vdwg.mxu0
    %731 = vmatprep.subr.bf16.mxu0 0
    %732 = vmatpush1.bf16.msra.mxu0 0
    %733 = vmatprep.subr.bf16.mxu0 0
    %734 = vmatpush1.bf16.msra.mxu0 0
    %735 = vmatprep.subr.bf16.mxu0 0
    %736 = vmatpush1.bf16.msra.mxu0 0
    %737 = vmatprep.subr.bf16.mxu0 0
    %738 = vmatpush1.bf16.msra.mxu0 0
    %739 = vmatprep.subr.bf16.mxu0 0
    %740 = vmatpush1.bf16.msra.mxu0 0
    %741 = vmatprep.subr.bf16.mxu0 0
    %742 = vmatpush1.bf16.msra.mxu0 0
    %743 = vmatprep.subr.bf16.mxu0 %v666
    %744 = vmatpush1.bf16.msra.mxu0 %v665
    %745 = vmatprep.subr.bf16.mxu0 %v658
    %746 = vmatpush1.bf16.msra.mxu0 %v657
    %747 = vmatprep.subr.bf16.mxu0 0
    %748 = vmatpush2.bf16.msra.mxu0 0
    %749 = vmatprep.subr.bf16.mxu0 0
    %750 = vmatpush2.bf16.msra.mxu0 0
    %751 = vmatprep.subr.bf16.mxu0 0
    %752 = vmatpush2.bf16.msra.mxu0 0
    %753 = vmatprep.subr.bf16.mxu0 0
    %754 = vmatpush2.bf16.msra.mxu0 0
    %755 = vmatprep.subr.bf16.mxu0 0
    %756 = vmatpush2.bf16.msra.mxu0 0
    %757 = vmatprep.subr.bf16.mxu0 0
    %758 = vmatpush2.bf16.msra.mxu0 0
    %759 = vmatprep.subr.bf16.mxu0 0
    %760 = vmatpush2.bf16.msra.mxu0 0
    %761 = vmatprep.subr.bf16.mxu0 0
    %762 = vmatpush2.bf16.msra.mxu0 0
    %763 = vmatprep.mubr.bf16.mxu0 0
    %764 = vmatmul.mubr.bf16.gmra.mxu0 %v688
    %v765 = vpop.f32.mrf.mxu0
    %v766 = vadd.f32 %v519, %v765
    %v767 = vpop.f32.mrf.mxu0
    %v768 = vadd.f32 %v521, %v767
    %v769 = vpop.f32.mrf.mxu0
    %v770 = vpop.f32.mrf.mxu0
    %771 = vdwg.mxu0
    %772 = vmatprep.subr.bf16.mxu0 0
    %773 = vmatpush1.bf16.msra.mxu0 0
    %774 = vmatprep.subr.bf16.mxu0 0
    %775 = vmatpush1.bf16.msra.mxu0 0
    %776 = vmatprep.subr.bf16.mxu0 0
    %777 = vmatpush1.bf16.msra.mxu0 0
    %778 = vmatprep.subr.bf16.mxu0 0
    %779 = vmatpush1.bf16.msra.mxu0 0
    %780 = vmatprep.subr.bf16.mxu0 0
    %781 = vmatpush1.bf16.msra.mxu0 0
    %782 = vmatprep.subr.bf16.mxu0 0
    %783 = vmatpush1.bf16.msra.mxu0 0
    %784 = vmatprep.subr.bf16.mxu0 %v668
    %785 = vmatpush1.bf16.msra.mxu0 %v667
    %786 = vmatprep.subr.bf16.mxu0 %v660
    %787 = vmatpush1.bf16.msra.mxu0 %v659
    %788 = vmatprep.subr.bf16.mxu0 0
    %789 = vmatpush2.bf16.msra.mxu0 0
    %790 = vmatprep.subr.bf16.mxu0 0
    %791 = vmatpush2.bf16.msra.mxu0 0
    %792 = vmatprep.subr.bf16.mxu0 0
    %793 = vmatpush2.bf16.msra.mxu0 0
    %794 = vmatprep.subr.bf16.mxu0 0
    %795 = vmatpush2.bf16.msra.mxu0 0
    %796 = vmatprep.subr.bf16.mxu0 0
    %797 = vmatpush2.bf16.msra.mxu0 0
    %798 = vmatprep.subr.bf16.mxu0 0
    %799 = vmatpush2.bf16.msra.mxu0 0
    %800 = vmatprep.subr.bf16.mxu0 0
    %801 = vmatpush2.bf16.msra.mxu0 0
    %802 = vmatprep.subr.bf16.mxu0 0
    %803 = vmatpush2.bf16.msra.mxu0 0
    %804 = vmatprep.mubr.bf16.mxu0 0
    %805 = vmatmul.mubr.bf16.gmra.mxu0 %v688
    %v806 = vpop.f32.mrf.mxu0
    %v807 = vadd.f32 %v560, %v806
    %v808 = vpop.f32.mrf.mxu0
    %v809 = vadd.f32 %v562, %v808
    %v810 = vpop.f32.mrf.mxu0
    %v811 = vpop.f32.mrf.mxu0
    %812 = vdwg.mxu0
    %813 = vmatprep.subr.bf16.mxu0 0
    %814 = vmatpush1.bf16.msra.mxu0 0
    %815 = vmatprep.subr.bf16.mxu0 0
    %816 = vmatpush1.bf16.msra.mxu0 0
    %817 = vmatprep.subr.bf16.mxu0 0
    %818 = vmatpush1.bf16.msra.mxu0 0
    %819 = vmatprep.subr.bf16.mxu0 0
    %820 = vmatpush1.bf16.msra.mxu0 0
    %821 = vmatprep.subr.bf16.mxu0 0
    %822 = vmatpush1.bf16.msra.mxu0 0
    %823 = vmatprep.subr.bf16.mxu0 0
    %824 = vmatpush1.bf16.msra.mxu0 0
    %825 = vmatprep.subr.bf16.mxu0 %v670
    %826 = vmatpush1.bf16.msra.mxu0 %v669
    %827 = vmatprep.subr.bf16.mxu0 %v662
    %828 = vmatpush1.bf16.msra.mxu0 %v661
    %829 = vmatprep.subr.bf16.mxu0 0
    %830 = vmatpush2.bf16.msra.mxu0 0
    %831 = vmatprep.subr.bf16.mxu0 0
    %832 = vmatpush2.bf16.msra.mxu0 0
    %833 = vmatprep.subr.bf16.mxu0 0
    %834 = vmatpush2.bf16.msra.mxu0 0
    %835 = vmatprep.subr.bf16.mxu0 0
    %836 = vmatpush2.bf16.msra.mxu0 0
    %837 = vmatprep.subr.bf16.mxu0 0
    %838 = vmatpush2.bf16.msra.mxu0 0
    %839 = vmatprep.subr.bf16.mxu0 0
    %840 = vmatpush2.bf16.msra.mxu0 0
    %841 = vmatprep.subr.bf16.mxu0 0
    %842 = vmatpush2.bf16.msra.mxu0 0
    %843 = vmatprep.subr.bf16.mxu0 0
    %844 = vmatpush2.bf16.msra.mxu0 0
    %845 = vmatprep.mubr.bf16.mxu0 0
    %846 = vmatmul.mubr.bf16.gmra.mxu0 %v688
    %v847 = vpop.f32.mrf.mxu0
    %v848 = vadd.f32 %v601, %v847
    %v849 = vpop.f32.mrf.mxu0
    %v850 = vadd.f32 %v603, %v849
    %v851 = vpop.f32.mrf.mxu0
    %v852 = vpop.f32.mrf.mxu0
    %853 = vdwg.mxu0
    %v854 = vld [vmem:[#allocation16] sm:$0xff]
    %v856 = vlaneseq
    %v857 = vshrl.u32 %v856, 7
    %v858 = vsub.s32 0, %v857
    %v859 = vrot.slane %v854, %v858
    %v860 = vlaneseq
    %v861 = vshrl.u32 %v860, 7
    %v862 = vsub.s32 1, %v861
    %v863 = vrot.slane %v854, %v862
    %v864 = vlaneseq
    %v865 = vshrl.u32 %v864, 7
    %v866 = vsub.s32 2, %v865
    %v867 = vrot.slane %v854, %v866
    %v868 = vlaneseq
    %v869 = vshrl.u32 %v868, 7
    %v870 = vsub.s32 3, %v869
    %v871 = vrot.slane %v854, %v870
    %v872 = vlaneseq
    %v873 = vshrl.u32 %v872, 7
    %v874 = vsub.s32 4, %v873
    %v875 = vrot.slane %v854, %v874
    %v876 = vlaneseq
    %v877 = vshrl.u32 %v876, 7
    %v878 = vsub.s32 5, %v877
    %v879 = vrot.slane %v854, %v878
    %v880 = vlaneseq
    %v881 = vshrl.u32 %v880, 7
    %v882 = vsub.s32 6, %v881
    %v883 = vrot.slane %v854, %v882
    %v884 = vlaneseq
    %v885 = vshrl.u32 %v884, 7
    %v886 = vsub.s32 7, %v885
    %v887 = vrot.slane %v854, %v886
    %v896 = vadd.f32 %v725, %v859
    %v897 = vadd.f32 %v727, %v863
    %v898 = vadd.f32 %v766, %v867
    %v899 = vadd.f32 %v768, %v871
    %v900 = vadd.f32 %v807, %v875
    %v901 = vadd.f32 %v809, %v879
    %v902 = vadd.f32 %v848, %v883
    %v903 = vadd.f32 %v850, %v887
    %v904 = vmax.f32 %v896, 0.0
    %v905 = vmax.f32 %v897, 0.0
    %v906 = vmax.f32 %v898, 0.0
    %v907 = vmax.f32 %v899, 0.0
    %v908 = vmax.f32 %v900, 0.0
    %v909 = vmax.f32 %v901, 0.0
    %v910 = vmax.f32 %v902, 0.0
    %v911 = vmax.f32 %v903, 0.0
    %v912 = vpack.c.bf16 %v904, %v904
    %v913 = vpack.c.bf16 %v905, %v905
    %v914 = vpack.c.bf16 %v906, %v906
    %v915 = vpack.c.bf16 %v907, %v907
    %v916 = vpack.c.bf16 %v908, %v908
    %v917 = vpack.c.bf16 %v909, %v909
    %v918 = vpack.c.bf16 %v910, %v910
    %v919 = vpack.c.bf16 %v911, %v911
    %v920 = vld [vmem:[#allocation17] sm:$0xff]
    %v921 = vld [vmem:[#allocation17 + $0x8] sm:$0xff]
    %v922 = vld [vmem:[#allocation17 + $0x10] sm:$0xff]
    %v923 = vld [vmem:[#allocation17 + $0x18] sm:$0xff]
    %v924 = vld [vmem:[#allocation17 + $0x20] sm:$0xff]
    %v925 = vld [vmem:[#allocation17 + $0x28] sm:$0xff]
    %v926 = vld [vmem:[#allocation17 + $0x30] sm:$0xff]
    %v927 = vld [vmem:[#allocation17 + $0x38] sm:$0xff]
    %v928 = vld [vmem:[#allocation17 + $0x40] sm:$0xff]
    %v929 = vld [vmem:[#allocation17 + $0x48] sm:$0xff]
    %v930 = vld [vmem:[#allocation17 + $0x50] sm:$0xff]
    %v931 = vld [vmem:[#allocation17 + $0x58] sm:$0xff]
    %v932 = vld [vmem:[#allocation17 + $0x60] sm:$0xff]
    %v933 = vld [vmem:[#allocation17 + $0x68] sm:$0xff]
    %v934 = vld [vmem:[#allocation17 + $0x70] sm:$0xff]
    %v935 = vld [vmem:[#allocation17 + $0x78] sm:$0xff]
    %v936 = vld [vmem:[#allocation17 + $0x80] sm:$0xff]
    %v937 = vld [vmem:[#allocation17 + $0x88] sm:$0xff]
    %v938 = vld [vmem:[#allocation17 + $0x90] sm:$0xff]
    %v939 = vld [vmem:[#allocation17 + $0x98] sm:$0xff]
    %v940 = vld [vmem:[#allocation17 + $0xa0] sm:$0xff]
    %v941 = vld [vmem:[#allocation17 + $0xa8] sm:$0xff]
    %v942 = vld [vmem:[#allocation17 + $0xb0] sm:$0xff]
    %v943 = vld [vmem:[#allocation17 + $0xb8] sm:$0xff]
    %v944 = vld [vmem:[#allocation17 + $0xc0] sm:$0xff]
    %v945 = vld [vmem:[#allocation17 + $0xc8] sm:$0xff]
    %v946 = vld [vmem:[#allocation17 + $0xd0] sm:$0xff]
    %v947 = vld [vmem:[#allocation17 + $0xd8] sm:$0xff]
    %v948 = vld [vmem:[#allocation17 + $0xe0] sm:$0xff]
    %v949 = vld [vmem:[#allocation17 + $0xe8] sm:$0xff]
    %v950 = vld [vmem:[#allocation17 + $0xf0] sm:$0xff]
    %v951 = vld [vmem:[#allocation17 + $0xf8] sm:$0xff]
    %v952 = vld [vmem:[#allocation17 + $0x100] sm:$0xff]
    %v953 = vld [vmem:[#allocation17 + $0x108] sm:$0xff]
    %v954 = vld [vmem:[#allocation17 + $0x110] sm:$0xff]
    %v955 = vld [vmem:[#allocation17 + $0x118] sm:$0xff]
    %v956 = vld [vmem:[#allocation17 + $0x120] sm:$0xff]
    %v957 = vld [vmem:[#allocation17 + $0x128] sm:$0xff]
    %v958 = vld [vmem:[#allocation17 + $0x130] sm:$0xff]
    %v959 = vld [vmem:[#allocation17 + $0x138] sm:$0xff]
    %v960 = vld [vmem:[#allocation17 + $0x140] sm:$0xff]
    %v961 = vld [vmem:[#allocation17 + $0x148] sm:$0xff]
    %v962 = vld [vmem:[#allocation17 + $0x150] sm:$0xff]
    %v963 = vld [vmem:[#allocation17 + $0x158] sm:$0xff]
    %v964 = vld [vmem:[#allocation17 + $0x160] sm:$0xff]
    %v965 = vld [vmem:[#allocation17 + $0x168] sm:$0xff]
    %v966 = vld [vmem:[#allocation17 + $0x170] sm:$0xff]
    %v967 = vld [vmem:[#allocation17 + $0x178] sm:$0xff]
    %v968 = vld [vmem:[#allocation17 + $0x180] sm:$0xff]
    %v969 = vld [vmem:[#allocation17 + $0x188] sm:$0xff]
    %v970 = vld [vmem:[#allocation17 + $0x190] sm:$0xff]
    %v971 = vld [vmem:[#allocation17 + $0x198] sm:$0xff]
    %v972 = vld [vmem:[#allocation17 + $0x1a0] sm:$0xff]
    %v973 = vld [vmem:[#allocation17 + $0x1a8] sm:$0xff]
    %v974 = vld [vmem:[#allocation17 + $0x1b0] sm:$0xff]
    %v975 = vld [vmem:[#allocation17 + $0x1b8] sm:$0xff]
    %v976 = vld [vmem:[#allocation17 + $0x1c0] sm:$0xff]
    %v977 = vld [vmem:[#allocation17 + $0x1c8] sm:$0xff]
    %v978 = vld [vmem:[#allocation17 + $0x1d0] sm:$0xff]
    %v979 = vld [vmem:[#allocation17 + $0x1d8] sm:$0xff]
    %v980 = vld [vmem:[#allocation17 + $0x1e0] sm:$0xff]
    %v981 = vld [vmem:[#allocation17 + $0x1e8] sm:$0xff]
    %v982 = vld [vmem:[#allocation17 + $0x1f0] sm:$0xff]
    %v983 = vld [vmem:[#allocation17 + $0x1f8] sm:$0xff]
    %v984 = vld [vmem:[#allocation17 + $0x200] sm:$0xff]
    %v985 = vld [vmem:[#allocation17 + $0x208] sm:$0xff]
    %v986 = vld [vmem:[#allocation17 + $0x210] sm:$0xff]
    %v987 = vld [vmem:[#allocation17 + $0x218] sm:$0xff]
    %v988 = vld [vmem:[#allocation17 + $0x220] sm:$0xff]
    %v989 = vld [vmem:[#allocation17 + $0x228] sm:$0xff]
    %v990 = vld [vmem:[#allocation17 + $0x230] sm:$0xff]
    %v991 = vld [vmem:[#allocation17 + $0x238] sm:$0xff]
    %v992 = vld [vmem:[#allocation17 + $0x240] sm:$0xff]
    %v993 = vld [vmem:[#allocation17 + $0x248] sm:$0xff]
    %v994 = vld [vmem:[#allocation17 + $0x250] sm:$0xff]
    %v995 = vld [vmem:[#allocation17 + $0x258] sm:$0xff]
    %v996 = vld [vmem:[#allocation17 + $0x260] sm:$0xff]
    %v997 = vld [vmem:[#allocation17 + $0x268] sm:$0xff]
    %v998 = vld [vmem:[#allocation17 + $0x270] sm:$0xff]
    %v999 = vld [vmem:[#allocation17 + $0x278] sm:$0xff]
    %v1000 = vld [vmem:[#allocation17 + $0x280] sm:$0xff]
    %v1001 = vld [vmem:[#allocation17 + $0x288] sm:$0xff]
    %v1002 = vld [vmem:[#allocation17 + $0x290] sm:$0xff]
    %v1003 = vld [vmem:[#allocation17 + $0x298] sm:$0xff]
    %v1004 = vld [vmem:[#allocation17 + $0x2a0] sm:$0xff]
    %v1005 = vld [vmem:[#allocation17 + $0x2a8] sm:$0xff]
    %v1006 = vld [vmem:[#allocation17 + $0x2b0] sm:$0xff]
    %v1007 = vld [vmem:[#allocation17 + $0x2b8] sm:$0xff]
    %v1008 = vld [vmem:[#allocation17 + $0x2c0] sm:$0xff]
    %v1009 = vld [vmem:[#allocation17 + $0x2c8] sm:$0xff]
    %v1010 = vld [vmem:[#allocation17 + $0x2d0] sm:$0xff]
    %v1011 = vld [vmem:[#allocation17 + $0x2d8] sm:$0xff]
    %v1012 = vld [vmem:[#allocation17 + $0x2e0] sm:$0xff]
    %v1013 = vld [vmem:[#allocation17 + $0x2e8] sm:$0xff]
    %v1014 = vld [vmem:[#allocation17 + $0x2f0] sm:$0xff]
    %v1015 = vld [vmem:[#allocation17 + $0x2f8] sm:$0xff]
    %v1016 = vld [vmem:[#allocation17 + $0x300] sm:$0xff]
    %v1017 = vld [vmem:[#allocation17 + $0x308] sm:$0xff]
    %v1018 = vld [vmem:[#allocation17 + $0x310] sm:$0xff]
    %v1019 = vld [vmem:[#allocation17 + $0x318] sm:$0xff]
    %v1020 = vld [vmem:[#allocation17 + $0x320] sm:$0xff]
    %v1021 = vld [vmem:[#allocation17 + $0x328] sm:$0xff]
    %v1022 = vld [vmem:[#allocation17 + $0x330] sm:$0xff]
    %v1023 = vld [vmem:[#allocation17 + $0x338] sm:$0xff]
    %v1024 = vld [vmem:[#allocation17 + $0x340] sm:$0xff]
    %v1025 = vld [vmem:[#allocation17 + $0x348] sm:$0xff]
    %v1026 = vld [vmem:[#allocation17 + $0x350] sm:$0xff]
    %v1027 = vld [vmem:[#allocation17 + $0x358] sm:$0xff]
    %v1028 = vld [vmem:[#allocation17 + $0x360] sm:$0xff]
    %v1029 = vld [vmem:[#allocation17 + $0x368] sm:$0xff]
    %v1030 = vld [vmem:[#allocation17 + $0x370] sm:$0xff]
    %v1031 = vld [vmem:[#allocation17 + $0x378] sm:$0xff]
    %v1032 = vld [vmem:[#allocation17 + $0x380] sm:$0xff]
    %v1033 = vld [vmem:[#allocation17 + $0x388] sm:$0xff]
    %v1034 = vld [vmem:[#allocation17 + $0x390] sm:$0xff]
    %v1035 = vld [vmem:[#allocation17 + $0x398] sm:$0xff]
    %v1036 = vld [vmem:[#allocation17 + $0x3a0] sm:$0xff]
    %v1037 = vld [vmem:[#allocation17 + $0x3a8] sm:$0xff]
    %v1038 = vld [vmem:[#allocation17 + $0x3b0] sm:$0xff]
    %v1039 = vld [vmem:[#allocation17 + $0x3b8] sm:$0xff]
    %v1040 = vld [vmem:[#allocation17 + $0x3c0] sm:$0xff]
    %v1041 = vld [vmem:[#allocation17 + $0x3c8] sm:$0xff]
    %v1042 = vld [vmem:[#allocation17 + $0x3d0] sm:$0xff]
    %v1043 = vld [vmem:[#allocation17 + $0x3d8] sm:$0xff]
    %v1044 = vld [vmem:[#allocation17 + $0x3e0] sm:$0xff]
    %v1045 = vld [vmem:[#allocation17 + $0x3e8] sm:$0xff]
    %v1046 = vld [vmem:[#allocation17 + $0x3f0] sm:$0xff]
    %v1047 = vld [vmem:[#allocation17 + $0x3f8] sm:$0xff]
    %v1048 = vld [vmem:[#allocation17 + $0x400] sm:$0xff]
    %v1049 = vld [vmem:[#allocation17 + $0x408] sm:$0xff]
    %v1050 = vld [vmem:[#allocation17 + $0x410] sm:$0xff]
    %v1051 = vld [vmem:[#allocation17 + $0x418] sm:$0xff]
    %v1052 = vld [vmem:[#allocation17 + $0x420] sm:$0xff]
    %v1053 = vld [vmem:[#allocation17 + $0x428] sm:$0xff]
    %v1054 = vld [vmem:[#allocation17 + $0x430] sm:$0xff]
    %v1055 = vld [vmem:[#allocation17 + $0x438] sm:$0xff]
    %v1056 = vld [vmem:[#allocation17 + $0x440] sm:$0xff]
    %v1057 = vld [vmem:[#allocation17 + $0x448] sm:$0xff]
    %v1058 = vld [vmem:[#allocation17 + $0x450] sm:$0xff]
    %v1059 = vld [vmem:[#allocation17 + $0x458] sm:$0xff]
    %v1060 = vld [vmem:[#allocation17 + $0x460] sm:$0xff]
    %v1061 = vld [vmem:[#allocation17 + $0x468] sm:$0xff]
    %v1062 = vld [vmem:[#allocation17 + $0x470] sm:$0xff]
    %v1063 = vld [vmem:[#allocation17 + $0x478] sm:$0xff]
    %v1064 = vld [vmem:[#allocation17 + $0x480] sm:$0xff]
    %v1065 = vld [vmem:[#allocation17 + $0x488] sm:$0xff]
    %v1066 = vld [vmem:[#allocation17 + $0x490] sm:$0xff]
    %v1067 = vld [vmem:[#allocation17 + $0x498] sm:$0xff]
    %v1068 = vld [vmem:[#allocation17 + $0x4a0] sm:$0xff]
    %v1069 = vld [vmem:[#allocation17 + $0x4a8] sm:$0xff]
    %v1070 = vld [vmem:[#allocation17 + $0x4b0] sm:$0xff]
    %v1071 = vld [vmem:[#allocation17 + $0x4b8] sm:$0xff]
    %v1072 = vld [vmem:[#allocation17 + $0x4c0] sm:$0xff]
    %v1073 = vld [vmem:[#allocation17 + $0x4c8] sm:$0xff]
    %v1074 = vld [vmem:[#allocation17 + $0x4d0] sm:$0xff]
    %v1075 = vld [vmem:[#allocation17 + $0x4d8] sm:$0xff]
    %v1076 = vld [vmem:[#allocation17 + $0x4e0] sm:$0xff]
    %v1077 = vld [vmem:[#allocation17 + $0x4e8] sm:$0xff]
    %v1078 = vld [vmem:[#allocation17 + $0x4f0] sm:$0xff]
    %v1079 = vld [vmem:[#allocation17 + $0x4f8] sm:$0xff]
    %v1080 = vld [vmem:[#allocation17 + $0x500] sm:$0xff]
    %v1081 = vld [vmem:[#allocation17 + $0x508] sm:$0xff]
    %v1082 = vld [vmem:[#allocation17 + $0x510] sm:$0xff]
    %v1083 = vld [vmem:[#allocation17 + $0x518] sm:$0xff]
    %v1084 = vld [vmem:[#allocation17 + $0x520] sm:$0xff]
    %v1085 = vld [vmem:[#allocation17 + $0x528] sm:$0xff]
    %v1086 = vld [vmem:[#allocation17 + $0x530] sm:$0xff]
    %v1087 = vld [vmem:[#allocation17 + $0x538] sm:$0xff]
    %v1088 = vld [vmem:[#allocation17 + $0x540] sm:$0xff]
    %v1089 = vld [vmem:[#allocation17 + $0x548] sm:$0xff]
    %v1090 = vld [vmem:[#allocation17 + $0x550] sm:$0xff]
    %v1091 = vld [vmem:[#allocation17 + $0x558] sm:$0xff]
    %v1092 = vld [vmem:[#allocation17 + $0x560] sm:$0xff]
    %v1093 = vld [vmem:[#allocation17 + $0x568] sm:$0xff]
    %v1094 = vld [vmem:[#allocation17 + $0x570] sm:$0xff]
    %v1095 = vld [vmem:[#allocation17 + $0x578] sm:$0xff]
    %v1096 = vld [vmem:[#allocation17 + $0x580] sm:$0xff]
    %v1097 = vld [vmem:[#allocation17 + $0x588] sm:$0xff]
    %v1098 = vld [vmem:[#allocation17 + $0x590] sm:$0xff]
    %v1099 = vld [vmem:[#allocation17 + $0x598] sm:$0xff]
    %v1100 = vld [vmem:[#allocation17 + $0x5a0] sm:$0xff]
    %v1101 = vld [vmem:[#allocation17 + $0x5a8] sm:$0xff]
    %v1102 = vld [vmem:[#allocation17 + $0x5b0] sm:$0xff]
    %v1103 = vld [vmem:[#allocation17 + $0x5b8] sm:$0xff]
    %v1104 = vld [vmem:[#allocation17 + $0x5c0] sm:$0xff]
    %v1105 = vld [vmem:[#allocation17 + $0x5c8] sm:$0xff]
    %v1106 = vld [vmem:[#allocation17 + $0x5d0] sm:$0xff]
    %v1107 = vld [vmem:[#allocation17 + $0x5d8] sm:$0xff]
    %v1108 = vld [vmem:[#allocation17 + $0x5e0] sm:$0xff]
    %v1109 = vld [vmem:[#allocation17 + $0x5e8] sm:$0xff]
    %v1110 = vld [vmem:[#allocation17 + $0x5f0] sm:$0xff]
    %v1111 = vld [vmem:[#allocation17 + $0x5f8] sm:$0xff]
    %v1112 = vld [vmem:[#allocation17 + $0x600] sm:$0xff]
    %v1113 = vld [vmem:[#allocation17 + $0x608] sm:$0xff]
    %v1114 = vld [vmem:[#allocation17 + $0x610] sm:$0xff]
    %v1115 = vld [vmem:[#allocation17 + $0x618] sm:$0xff]
    %v1116 = vld [vmem:[#allocation17 + $0x620] sm:$0xff]
    %v1117 = vld [vmem:[#allocation17 + $0x628] sm:$0xff]
    %v1118 = vld [vmem:[#allocation17 + $0x630] sm:$0xff]
    %v1119 = vld [vmem:[#allocation17 + $0x638] sm:$0xff]
    %v1120 = vld [vmem:[#allocation17 + $0x640] sm:$0xff]
    %v1121 = vld [vmem:[#allocation17 + $0x648] sm:$0xff]
    %v1122 = vld [vmem:[#allocation17 + $0x650] sm:$0xff]
    %v1123 = vld [vmem:[#allocation17 + $0x658] sm:$0xff]
    %v1124 = vld [vmem:[#allocation17 + $0x660] sm:$0xff]
    %v1125 = vld [vmem:[#allocation17 + $0x668] sm:$0xff]
    %v1126 = vld [vmem:[#allocation17 + $0x670] sm:$0xff]
    %v1127 = vld [vmem:[#allocation17 + $0x678] sm:$0xff]
    %v1128 = vld [vmem:[#allocation17 + $0x680] sm:$0xff]
    %v1129 = vld [vmem:[#allocation17 + $0x688] sm:$0xff]
    %v1130 = vld [vmem:[#allocation17 + $0x690] sm:$0xff]
    %v1131 = vld [vmem:[#allocation17 + $0x698] sm:$0xff]
    %v1132 = vld [vmem:[#allocation17 + $0x6a0] sm:$0xff]
    %v1133 = vld [vmem:[#allocation17 + $0x6a8] sm:$0xff]
    %v1134 = vld [vmem:[#allocation17 + $0x6b0] sm:$0xff]
    %v1135 = vld [vmem:[#allocation17 + $0x6b8] sm:$0xff]
    %v1136 = vld [vmem:[#allocation17 + $0x6c0] sm:$0xff]
    %v1137 = vld [vmem:[#allocation17 + $0x6c8] sm:$0xff]
    %v1138 = vld [vmem:[#allocation17 + $0x6d0] sm:$0xff]
    %v1139 = vld [vmem:[#allocation17 + $0x6d8] sm:$0xff]
    %v1140 = vld [vmem:[#allocation17 + $0x6e0] sm:$0xff]
    %v1141 = vld [vmem:[#allocation17 + $0x6e8] sm:$0xff]
    %v1142 = vld [vmem:[#allocation17 + $0x6f0] sm:$0xff]
    %v1143 = vld [vmem:[#allocation17 + $0x6f8] sm:$0xff]
    %v1144 = vld [vmem:[#allocation17 + $0x700] sm:$0xff]
    %v1145 = vld [vmem:[#allocation17 + $0x708] sm:$0xff]
    %v1146 = vld [vmem:[#allocation17 + $0x710] sm:$0xff]
    %v1147 = vld [vmem:[#allocation17 + $0x718] sm:$0xff]
    %v1148 = vld [vmem:[#allocation17 + $0x720] sm:$0xff]
    %v1149 = vld [vmem:[#allocation17 + $0x728] sm:$0xff]
    %v1150 = vld [vmem:[#allocation17 + $0x730] sm:$0xff]
    %v1151 = vld [vmem:[#allocation17 + $0x738] sm:$0xff]
    %v1152 = vld [vmem:[#allocation17 + $0x740] sm:$0xff]
    %v1153 = vld [vmem:[#allocation17 + $0x748] sm:$0xff]
    %v1154 = vld [vmem:[#allocation17 + $0x750] sm:$0xff]
    %v1155 = vld [vmem:[#allocation17 + $0x758] sm:$0xff]
    %v1156 = vld [vmem:[#allocation17 + $0x760] sm:$0xff]
    %v1157 = vld [vmem:[#allocation17 + $0x768] sm:$0xff]
    %v1158 = vld [vmem:[#allocation17 + $0x770] sm:$0xff]
    %v1159 = vld [vmem:[#allocation17 + $0x778] sm:$0xff]
    %v1160 = vld [vmem:[#allocation17 + $0x780] sm:$0xff]
    %v1161 = vld [vmem:[#allocation17 + $0x788] sm:$0xff]
    %v1162 = vld [vmem:[#allocation17 + $0x790] sm:$0xff]
    %v1163 = vld [vmem:[#allocation17 + $0x798] sm:$0xff]
    %v1164 = vld [vmem:[#allocation17 + $0x7a0] sm:$0xff]
    %v1165 = vld [vmem:[#allocation17 + $0x7a8] sm:$0xff]
    %v1166 = vld [vmem:[#allocation17 + $0x7b0] sm:$0xff]
    %v1167 = vld [vmem:[#allocation17 + $0x7b8] sm:$0xff]
    %v1168 = vld [vmem:[#allocation17 + $0x7c0] sm:$0xff]
    %v1169 = vld [vmem:[#allocation17 + $0x7c8] sm:$0xff]
    %v1170 = vld [vmem:[#allocation17 + $0x7d0] sm:$0xff]
    %v1171 = vld [vmem:[#allocation17 + $0x7d8] sm:$0xff]
    %v1172 = vld [vmem:[#allocation17 + $0x7e0] sm:$0xff]
    %v1173 = vld [vmem:[#allocation17 + $0x7e8] sm:$0xff]
    %v1174 = vld [vmem:[#allocation17 + $0x7f0] sm:$0xff]
    %v1175 = vld [vmem:[#allocation17 + $0x7f8] sm:$0xff]
    %v1176 = vld [vmem:[#allocation17 + $0x800] sm:$0xff]
    %v1177 = vld [vmem:[#allocation17 + $0x808] sm:$0xff]
    %v1178 = vld [vmem:[#allocation17 + $0x810] sm:$0xff]
    %v1179 = vld [vmem:[#allocation17 + $0x818] sm:$0xff]
    %v1180 = vld [vmem:[#allocation17 + $0x820] sm:$0xff]
    %v1181 = vld [vmem:[#allocation17 + $0x828] sm:$0xff]
    %v1182 = vld [vmem:[#allocation17 + $0x830] sm:$0xff]
    %v1183 = vld [vmem:[#allocation17 + $0x838] sm:$0xff]
    %v1184 = vld [vmem:[#allocation17 + $0x840] sm:$0xff]
    %v1185 = vld [vmem:[#allocation17 + $0x848] sm:$0xff]
    %v1186 = vld [vmem:[#allocation17 + $0x850] sm:$0xff]
    %v1187 = vld [vmem:[#allocation17 + $0x858] sm:$0xff]
    %v1188 = vld [vmem:[#allocation17 + $0x860] sm:$0xff]
    %v1189 = vld [vmem:[#allocation17 + $0x868] sm:$0xff]
    %v1190 = vld [vmem:[#allocation17 + $0x870] sm:$0xff]
    %v1191 = vld [vmem:[#allocation17 + $0x878] sm:$0xff]
    %v1192 = vld [vmem:[#allocation17 + $0x880] sm:$0xff]
    %v1193 = vld [vmem:[#allocation17 + $0x888] sm:$0xff]
    %v1194 = vld [vmem:[#allocation17 + $0x890] sm:$0xff]
    %v1195 = vld [vmem:[#allocation17 + $0x898] sm:$0xff]
    %v1196 = vld [vmem:[#allocation17 + $0x8a0] sm:$0xff]
    %v1197 = vld [vmem:[#allocation17 + $0x8a8] sm:$0xff]
    %v1198 = vld [vmem:[#allocation17 + $0x8b0] sm:$0xff]
    %v1199 = vld [vmem:[#allocation17 + $0x8b8] sm:$0xff]
    %v1200 = vld [vmem:[#allocation17 + $0x8c0] sm:$0xff]
    %v1201 = vld [vmem:[#allocation17 + $0x8c8] sm:$0xff]
    %v1202 = vld [vmem:[#allocation17 + $0x8d0] sm:$0xff]
    %v1203 = vld [vmem:[#allocation17 + $0x8d8] sm:$0xff]
    %v1204 = vld [vmem:[#allocation17 + $0x8e0] sm:$0xff]
    %v1205 = vld [vmem:[#allocation17 + $0x8e8] sm:$0xff]
    %v1206 = vld [vmem:[#allocation17 + $0x8f0] sm:$0xff]
    %v1207 = vld [vmem:[#allocation17 + $0x8f8] sm:$0xff]
    %v1208 = vld [vmem:[#allocation17 + $0x900] sm:$0xff]
    %v1209 = vld [vmem:[#allocation17 + $0x908] sm:$0xff]
    %v1210 = vld [vmem:[#allocation17 + $0x910] sm:$0xff]
    %v1211 = vld [vmem:[#allocation17 + $0x918] sm:$0xff]
    %v1212 = vld [vmem:[#allocation17 + $0x920] sm:$0xff]
    %v1213 = vld [vmem:[#allocation17 + $0x928] sm:$0xff]
    %v1214 = vld [vmem:[#allocation17 + $0x930] sm:$0xff]
    %v1215 = vld [vmem:[#allocation17 + $0x938] sm:$0xff]
    %v1216 = vld [vmem:[#allocation17 + $0x940] sm:$0xff]
    %v1217 = vld [vmem:[#allocation17 + $0x948] sm:$0xff]
    %v1218 = vld [vmem:[#allocation17 + $0x950] sm:$0xff]
    %v1219 = vld [vmem:[#allocation17 + $0x958] sm:$0xff]
    %v1220 = vld [vmem:[#allocation17 + $0x960] sm:$0xff]
    %v1221 = vld [vmem:[#allocation17 + $0x968] sm:$0xff]
    %v1222 = vld [vmem:[#allocation17 + $0x970] sm:$0xff]
    %v1223 = vld [vmem:[#allocation17 + $0x978] sm:$0xff]
    %v1224 = vld [vmem:[#allocation17 + $0x980] sm:$0xff]
    %v1225 = vld [vmem:[#allocation17 + $0x988] sm:$0xff]
    %v1226 = vld [vmem:[#allocation17 + $0x990] sm:$0xff]
    %v1227 = vld [vmem:[#allocation17 + $0x998] sm:$0xff]
    %v1228 = vld [vmem:[#allocation17 + $0x9a0] sm:$0xff]
    %v1229 = vld [vmem:[#allocation17 + $0x9a8] sm:$0xff]
    %v1230 = vld [vmem:[#allocation17 + $0x9b0] sm:$0xff]
    %v1231 = vld [vmem:[#allocation17 + $0x9b8] sm:$0xff]
    %v1232 = vld [vmem:[#allocation17 + $0x9c0] sm:$0xff]
    %v1233 = vld [vmem:[#allocation17 + $0x9c8] sm:$0xff]
    %v1234 = vld [vmem:[#allocation17 + $0x9d0] sm:$0xff]
    %v1235 = vld [vmem:[#allocation17 + $0x9d8] sm:$0xff]
    %v1236 = vld [vmem:[#allocation17 + $0x9e0] sm:$0xff]
    %v1237 = vld [vmem:[#allocation17 + $0x9e8] sm:$0xff]
    %v1238 = vld [vmem:[#allocation17 + $0x9f0] sm:$0xff]
    %v1239 = vld [vmem:[#allocation17 + $0x9f8] sm:$0xff]
    %v1240 = vld [vmem:[#allocation17 + $0xa00] sm:$0xff]
    %v1241 = vld [vmem:[#allocation17 + $0xa08] sm:$0xff]
    %v1242 = vld [vmem:[#allocation17 + $0xa10] sm:$0xff]
    %v1243 = vld [vmem:[#allocation17 + $0xa18] sm:$0xff]
    %v1244 = vld [vmem:[#allocation17 + $0xa20] sm:$0xff]
    %v1245 = vld [vmem:[#allocation17 + $0xa28] sm:$0xff]
    %v1246 = vld [vmem:[#allocation17 + $0xa30] sm:$0xff]
    %v1247 = vld [vmem:[#allocation17 + $0xa38] sm:$0xff]
    %v1248 = vld [vmem:[#allocation17 + $0xa40] sm:$0xff]
    %v1249 = vld [vmem:[#allocation17 + $0xa48] sm:$0xff]
    %v1250 = vld [vmem:[#allocation17 + $0xa50] sm:$0xff]
    %v1251 = vld [vmem:[#allocation17 + $0xa58] sm:$0xff]
    %v1252 = vld [vmem:[#allocation17 + $0xa60] sm:$0xff]
    %v1253 = vld [vmem:[#allocation17 + $0xa68] sm:$0xff]
    %v1254 = vld [vmem:[#allocation17 + $0xa70] sm:$0xff]
    %v1255 = vld [vmem:[#allocation17 + $0xa78] sm:$0xff]
    %v1256 = vld [vmem:[#allocation17 + $0xa80] sm:$0xff]
    %v1257 = vld [vmem:[#allocation17 + $0xa88] sm:$0xff]
    %v1258 = vld [vmem:[#allocation17 + $0xa90] sm:$0xff]
    %v1259 = vld [vmem:[#allocation17 + $0xa98] sm:$0xff]
    %v1260 = vld [vmem:[#allocation17 + $0xaa0] sm:$0xff]
    %v1261 = vld [vmem:[#allocation17 + $0xaa8] sm:$0xff]
    %v1262 = vld [vmem:[#allocation17 + $0xab0] sm:$0xff]
    %v1263 = vld [vmem:[#allocation17 + $0xab8] sm:$0xff]
    %v1264 = vld [vmem:[#allocation17 + $0xac0] sm:$0xff]
    %v1265 = vld [vmem:[#allocation17 + $0xac8] sm:$0xff]
    %v1266 = vld [vmem:[#allocation17 + $0xad0] sm:$0xff]
    %v1267 = vld [vmem:[#allocation17 + $0xad8] sm:$0xff]
    %v1268 = vld [vmem:[#allocation17 + $0xae0] sm:$0xff]
    %v1269 = vld [vmem:[#allocation17 + $0xae8] sm:$0xff]
    %v1270 = vld [vmem:[#allocation17 + $0xaf0] sm:$0xff]
    %v1271 = vld [vmem:[#allocation17 + $0xaf8] sm:$0xff]
    %v1272 = vld [vmem:[#allocation17 + $0xb00] sm:$0xff]
    %v1273 = vld [vmem:[#allocation17 + $0xb08] sm:$0xff]
    %v1274 = vld [vmem:[#allocation17 + $0xb10] sm:$0xff]
    %v1275 = vld [vmem:[#allocation17 + $0xb18] sm:$0xff]
    %v1276 = vld [vmem:[#allocation17 + $0xb20] sm:$0xff]
    %v1277 = vld [vmem:[#allocation17 + $0xb28] sm:$0xff]
    %v1278 = vld [vmem:[#allocation17 + $0xb30] sm:$0xff]
    %v1279 = vld [vmem:[#allocation17 + $0xb38] sm:$0xff]
    %v1280 = vld [vmem:[#allocation17 + $0xb40] sm:$0xff]
    %v1281 = vld [vmem:[#allocation17 + $0xb48] sm:$0xff]
    %v1282 = vld [vmem:[#allocation17 + $0xb50] sm:$0xff]
    %v1283 = vld [vmem:[#allocation17 + $0xb58] sm:$0xff]
    %v1284 = vld [vmem:[#allocation17 + $0xb60] sm:$0xff]
    %v1285 = vld [vmem:[#allocation17 + $0xb68] sm:$0xff]
    %v1286 = vld [vmem:[#allocation17 + $0xb70] sm:$0xff]
    %v1287 = vld [vmem:[#allocation17 + $0xb78] sm:$0xff]
    %v1288 = vld [vmem:[#allocation17 + $0xb80] sm:$0xff]
    %v1289 = vld [vmem:[#allocation17 + $0xb88] sm:$0xff]
    %v1290 = vld [vmem:[#allocation17 + $0xb90] sm:$0xff]
    %v1291 = vld [vmem:[#allocation17 + $0xb98] sm:$0xff]
    %v1292 = vld [vmem:[#allocation17 + $0xba0] sm:$0xff]
    %v1293 = vld [vmem:[#allocation17 + $0xba8] sm:$0xff]
    %v1294 = vld [vmem:[#allocation17 + $0xbb0] sm:$0xff]
    %v1295 = vld [vmem:[#allocation17 + $0xbb8] sm:$0xff]
    %v1296 = vld [vmem:[#allocation17 + $0xbc0] sm:$0xff]
    %v1297 = vld [vmem:[#allocation17 + $0xbc8] sm:$0xff]
    %v1298 = vld [vmem:[#allocation17 + $0xbd0] sm:$0xff]
    %v1299 = vld [vmem:[#allocation17 + $0xbd8] sm:$0xff]
    %v1300 = vld [vmem:[#allocation17 + $0xbe0] sm:$0xff]
    %v1301 = vld [vmem:[#allocation17 + $0xbe8] sm:$0xff]
    %v1302 = vld [vmem:[#allocation17 + $0xbf0] sm:$0xff]
    %v1303 = vld [vmem:[#allocation17 + $0xbf8] sm:$0xff]
    %v1304 = vld [vmem:[#allocation17 + $0xc00] sm:$0xff]
    %v1305 = vld [vmem:[#allocation17 + $0xc08] sm:$0xff]
    %v1306 = vld [vmem:[#allocation17 + $0xc10] sm:$0xff]
    %v1307 = vld [vmem:[#allocation17 + $0xc18] sm:$0xff]
    %v1308 = vld [vmem:[#allocation17 + $0xc20] sm:$0xff]
    %v1309 = vld [vmem:[#allocation17 + $0xc28] sm:$0xff]
    %v1310 = vld [vmem:[#allocation17 + $0xc30] sm:$0xff]
    %v1311 = vld [vmem:[#allocation17 + $0xc38] sm:$0xff]
    %v1312 = vld [vmem:[#allocation17 + $0xc40] sm:$0xff]
    %v1313 = vld [vmem:[#allocation17 + $0xc48] sm:$0xff]
    %v1314 = vld [vmem:[#allocation17 + $0xc50] sm:$0xff]
    %v1315 = vld [vmem:[#allocation17 + $0xc58] sm:$0xff]
    %v1316 = vld [vmem:[#allocation17 + $0xc60] sm:$0xff]
    %v1317 = vld [vmem:[#allocation17 + $0xc68] sm:$0xff]
    %v1318 = vld [vmem:[#allocation17 + $0xc70] sm:$0xff]
    %v1319 = vld [vmem:[#allocation17 + $0xc78] sm:$0xff]
    %v1320 = vld [vmem:[#allocation17 + $0xc80] sm:$0xff]
    %v1321 = vld [vmem:[#allocation17 + $0xc88] sm:$0xff]
    %v1322 = vld [vmem:[#allocation17 + $0xc90] sm:$0xff]
    %v1323 = vld [vmem:[#allocation17 + $0xc98] sm:$0xff]
    %v1324 = vld [vmem:[#allocation17 + $0xca0] sm:$0xff]
    %v1325 = vld [vmem:[#allocation17 + $0xca8] sm:$0xff]
    %v1326 = vld [vmem:[#allocation17 + $0xcb0] sm:$0xff]
    %v1327 = vld [vmem:[#allocation17 + $0xcb8] sm:$0xff]
    %v1328 = vld [vmem:[#allocation17 + $0xcc0] sm:$0xff]
    %v1329 = vld [vmem:[#allocation17 + $0xcc8] sm:$0xff]
    %v1330 = vld [vmem:[#allocation17 + $0xcd0] sm:$0xff]
    %v1331 = vld [vmem:[#allocation17 + $0xcd8] sm:$0xff]
    %v1332 = vld [vmem:[#allocation17 + $0xce0] sm:$0xff]
    %v1333 = vld [vmem:[#allocation17 + $0xce8] sm:$0xff]
    %v1334 = vld [vmem:[#allocation17 + $0xcf0] sm:$0xff]
    %v1335 = vld [vmem:[#allocation17 + $0xcf8] sm:$0xff]
    %v1336 = vld [vmem:[#allocation17 + $0xd00] sm:$0xff]
    %v1337 = vld [vmem:[#allocation17 + $0xd08] sm:$0xff]
    %v1338 = vld [vmem:[#allocation17 + $0xd10] sm:$0xff]
    %v1339 = vld [vmem:[#allocation17 + $0xd18] sm:$0xff]
    %v1340 = vld [vmem:[#allocation17 + $0xd20] sm:$0xff]
    %v1341 = vld [vmem:[#allocation17 + $0xd28] sm:$0xff]
    %v1342 = vld [vmem:[#allocation17 + $0xd30] sm:$0xff]
    %v1343 = vld [vmem:[#allocation17 + $0xd38] sm:$0xff]
    %v1344 = vld [vmem:[#allocation17 + $0xd40] sm:$0xff]
    %v1345 = vld [vmem:[#allocation17 + $0xd48] sm:$0xff]
    %v1346 = vld [vmem:[#allocation17 + $0xd50] sm:$0xff]
    %v1347 = vld [vmem:[#allocation17 + $0xd58] sm:$0xff]
    %v1348 = vld [vmem:[#allocation17 + $0xd60] sm:$0xff]
    %v1349 = vld [vmem:[#allocation17 + $0xd68] sm:$0xff]
    %v1350 = vld [vmem:[#allocation17 + $0xd70] sm:$0xff]
    %v1351 = vld [vmem:[#allocation17 + $0xd78] sm:$0xff]
    %v1352 = vld [vmem:[#allocation17 + $0xd80] sm:$0xff]
    %v1353 = vld [vmem:[#allocation17 + $0xd88] sm:$0xff]
    %v1354 = vld [vmem:[#allocation17 + $0xd90] sm:$0xff]
    %v1355 = vld [vmem:[#allocation17 + $0xd98] sm:$0xff]
    %v1356 = vld [vmem:[#allocation17 + $0xda0] sm:$0xff]
    %v1357 = vld [vmem:[#allocation17 + $0xda8] sm:$0xff]
    %v1358 = vld [vmem:[#allocation17 + $0xdb0] sm:$0xff]
    %v1359 = vld [vmem:[#allocation17 + $0xdb8] sm:$0xff]
    %v1360 = vld [vmem:[#allocation17 + $0xdc0] sm:$0xff]
    %v1361 = vld [vmem:[#allocation17 + $0xdc8] sm:$0xff]
    %v1362 = vld [vmem:[#allocation17 + $0xdd0] sm:$0xff]
    %v1363 = vld [vmem:[#allocation17 + $0xdd8] sm:$0xff]
    %v1364 = vld [vmem:[#allocation17 + $0xde0] sm:$0xff]
    %v1365 = vld [vmem:[#allocation17 + $0xde8] sm:$0xff]
    %v1366 = vld [vmem:[#allocation17 + $0xdf0] sm:$0xff]
    %v1367 = vld [vmem:[#allocation17 + $0xdf8] sm:$0xff]
    %v1368 = vld [vmem:[#allocation17 + $0xe00] sm:$0xff]
    %v1369 = vld [vmem:[#allocation17 + $0xe08] sm:$0xff]
    %v1370 = vld [vmem:[#allocation17 + $0xe10] sm:$0xff]
    %v1371 = vld [vmem:[#allocation17 + $0xe18] sm:$0xff]
    %v1372 = vld [vmem:[#allocation17 + $0xe20] sm:$0xff]
    %v1373 = vld [vmem:[#allocation17 + $0xe28] sm:$0xff]
    %v1374 = vld [vmem:[#allocation17 + $0xe30] sm:$0xff]
    %v1375 = vld [vmem:[#allocation17 + $0xe38] sm:$0xff]
    %v1376 = vld [vmem:[#allocation17 + $0xe40] sm:$0xff]
    %v1377 = vld [vmem:[#allocation17 + $0xe48] sm:$0xff]
    %v1378 = vld [vmem:[#allocation17 + $0xe50] sm:$0xff]
    %v1379 = vld [vmem:[#allocation17 + $0xe58] sm:$0xff]
    %v1380 = vld [vmem:[#allocation17 + $0xe60] sm:$0xff]
    %v1381 = vld [vmem:[#allocation17 + $0xe68] sm:$0xff]
    %v1382 = vld [vmem:[#allocation17 + $0xe70] sm:$0xff]
    %v1383 = vld [vmem:[#allocation17 + $0xe78] sm:$0xff]
    %v1384 = vld [vmem:[#allocation17 + $0xe80] sm:$0xff]
    %v1385 = vld [vmem:[#allocation17 + $0xe88] sm:$0xff]
    %v1386 = vld [vmem:[#allocation17 + $0xe90] sm:$0xff]
    %v1387 = vld [vmem:[#allocation17 + $0xe98] sm:$0xff]
    %v1388 = vld [vmem:[#allocation17 + $0xea0] sm:$0xff]
    %v1389 = vld [vmem:[#allocation17 + $0xea8] sm:$0xff]
    %v1390 = vld [vmem:[#allocation17 + $0xeb0] sm:$0xff]
    %v1391 = vld [vmem:[#allocation17 + $0xeb8] sm:$0xff]
    %v1392 = vld [vmem:[#allocation17 + $0xec0] sm:$0xff]
    %v1393 = vld [vmem:[#allocation17 + $0xec8] sm:$0xff]
    %v1394 = vld [vmem:[#allocation17 + $0xed0] sm:$0xff]
    %v1395 = vld [vmem:[#allocation17 + $0xed8] sm:$0xff]
    %v1396 = vld [vmem:[#allocation17 + $0xee0] sm:$0xff]
    %v1397 = vld [vmem:[#allocation17 + $0xee8] sm:$0xff]
    %v1398 = vld [vmem:[#allocation17 + $0xef0] sm:$0xff]
    %v1399 = vld [vmem:[#allocation17 + $0xef8] sm:$0xff]
    %v1400 = vld [vmem:[#allocation17 + $0xf00] sm:$0xff]
    %v1401 = vld [vmem:[#allocation17 + $0xf08] sm:$0xff]
    %v1402 = vld [vmem:[#allocation17 + $0xf10] sm:$0xff]
    %v1403 = vld [vmem:[#allocation17 + $0xf18] sm:$0xff]
    %v1404 = vld [vmem:[#allocation17 + $0xf20] sm:$0xff]
    %v1405 = vld [vmem:[#allocation17 + $0xf28] sm:$0xff]
    %v1406 = vld [vmem:[#allocation17 + $0xf30] sm:$0xff]
    %v1407 = vld [vmem:[#allocation17 + $0xf38] sm:$0xff]
    %v1408 = vld [vmem:[#allocation17 + $0xf40] sm:$0xff]
    %v1409 = vld [vmem:[#allocation17 + $0xf48] sm:$0xff]
    %v1410 = vld [vmem:[#allocation17 + $0xf50] sm:$0xff]
    %v1411 = vld [vmem:[#allocation17 + $0xf58] sm:$0xff]
    %v1412 = vld [vmem:[#allocation17 + $0xf60] sm:$0xff]
    %v1413 = vld [vmem:[#allocation17 + $0xf68] sm:$0xff]
    %v1414 = vld [vmem:[#allocation17 + $0xf70] sm:$0xff]
    %v1415 = vld [vmem:[#allocation17 + $0xf78] sm:$0xff]
    %v1416 = vld [vmem:[#allocation17 + $0xf80] sm:$0xff]
    %v1417 = vld [vmem:[#allocation17 + $0xf88] sm:$0xff]
    %v1418 = vld [vmem:[#allocation17 + $0xf90] sm:$0xff]
    %v1419 = vld [vmem:[#allocation17 + $0xf98] sm:$0xff]
    %v1420 = vld [vmem:[#allocation17 + $0xfa0] sm:$0xff]
    %v1421 = vld [vmem:[#allocation17 + $0xfa8] sm:$0xff]
    %v1422 = vld [vmem:[#allocation17 + $0xfb0] sm:$0xff]
    %v1423 = vld [vmem:[#allocation17 + $0xfb8] sm:$0xff]
    %v1424 = vld [vmem:[#allocation17 + $0xfc0] sm:$0xff]
    %v1425 = vld [vmem:[#allocation17 + $0xfc8] sm:$0xff]
    %v1426 = vld [vmem:[#allocation17 + $0xfd0] sm:$0xff]
    %v1427 = vld [vmem:[#allocation17 + $0xfd8] sm:$0xff]
    %v1428 = vld [vmem:[#allocation17 + $0xfe0] sm:$0xff]
    %v1429 = vld [vmem:[#allocation17 + $0xfe8] sm:$0xff]
    %v1430 = vld [vmem:[#allocation17 + $0xff0] sm:$0xff]
    %v1431 = vld [vmem:[#allocation17 + $0xff8] sm:$0xff]
    %v1432 = vld [vmem:[#allocation19] sm:$0xff]
    %v1434 = vlaneseq
    %v1435 = vshrl.u32 %v1434, 7
    %v1436 = vsub.s32 0, %v1435
    %v1437 = vrot.slane %v1432, %v1436
    %v1438 = vlaneseq
    %v1439 = vshrl.u32 %v1438, 7
    %v1440 = vsub.s32 1, %v1439
    %v1441 = vrot.slane %v1432, %v1440
    %v1442 = vlaneseq
    %v1443 = vshrl.u32 %v1442, 7
    %v1444 = vsub.s32 2, %v1443
    %v1445 = vrot.slane %v1432, %v1444
    %v1446 = vlaneseq
    %v1447 = vshrl.u32 %v1446, 7
    %v1448 = vsub.s32 3, %v1447
    %v1449 = vrot.slane %v1432, %v1448
    %v1450 = vlaneseq
    %v1451 = vshrl.u32 %v1450, 7
    %v1452 = vsub.s32 4, %v1451
    %v1453 = vrot.slane %v1432, %v1452
    %v1454 = vlaneseq
    %v1455 = vshrl.u32 %v1454, 7
    %v1456 = vsub.s32 5, %v1455
    %v1457 = vrot.slane %v1432, %v1456
    %v1458 = vlaneseq
    %v1459 = vshrl.u32 %v1458, 7
    %v1460 = vsub.s32 6, %v1459
    %v1461 = vrot.slane %v1432, %v1460
    %v1462 = vlaneseq
    %v1463 = vshrl.u32 %v1462, 7
    %v1464 = vsub.s32 7, %v1463
    %v1465 = vrot.slane %v1432, %v1464
    %v1986 = vunpack.c.l.b16 %v920
    %v1987 = vunpack.c.h.b16 %v920
    %v1988 = vunpack.c.l.b16 %v921
    %v1989 = vunpack.c.h.b16 %v921
    %v1990 = vunpack.c.l.b16 %v922
    %v1991 = vunpack.c.h.b16 %v922
    %v1992 = vunpack.c.l.b16 %v923
    %v1993 = vunpack.c.h.b16 %v923
    %v1994 = vunpack.c.l.b16 %v924
    %v1995 = vunpack.c.h.b16 %v924
    %v1996 = vunpack.c.l.b16 %v925
    %v1997 = vunpack.c.h.b16 %v925
    %v1998 = vunpack.c.l.b16 %v926
    %v1999 = vunpack.c.h.b16 %v926
    %v2000 = vunpack.c.l.b16 %v927
    %v2001 = vunpack.c.h.b16 %v927
    %v2002 = vunpack.c.l.b16 %v928
    %v2003 = vunpack.c.h.b16 %v928
    %v2004 = vunpack.c.l.b16 %v929
    %v2005 = vunpack.c.h.b16 %v929
    %v2006 = vunpack.c.l.b16 %v930
    %v2007 = vunpack.c.h.b16 %v930
    %v2008 = vunpack.c.l.b16 %v931
    %v2009 = vunpack.c.h.b16 %v931
    %v2010 = vunpack.c.l.b16 %v932
    %v2011 = vunpack.c.h.b16 %v932
    %v2012 = vunpack.c.l.b16 %v933
    %v2013 = vunpack.c.h.b16 %v933
    %v2014 = vunpack.c.l.b16 %v934
    %v2015 = vunpack.c.h.b16 %v934
    %v2016 = vunpack.c.l.b16 %v935
    %v2017 = vunpack.c.h.b16 %v935
    %v2018 = vunpack.c.l.b16 %v936
    %v2019 = vunpack.c.h.b16 %v936
    %v2020 = vunpack.c.l.b16 %v937
    %v2021 = vunpack.c.h.b16 %v937
    %v2022 = vunpack.c.l.b16 %v938
    %v2023 = vunpack.c.h.b16 %v938
    %v2024 = vunpack.c.l.b16 %v939
    %v2025 = vunpack.c.h.b16 %v939
    %v2026 = vunpack.c.l.b16 %v940
    %v2027 = vunpack.c.h.b16 %v940
    %v2028 = vunpack.c.l.b16 %v941
    %v2029 = vunpack.c.h.b16 %v941
    %v2030 = vunpack.c.l.b16 %v942
    %v2031 = vunpack.c.h.b16 %v942
    %v2032 = vunpack.c.l.b16 %v943
    %v2033 = vunpack.c.h.b16 %v943
    %v2034 = vunpack.c.l.b16 %v944
    %v2035 = vunpack.c.h.b16 %v944
    %v2036 = vunpack.c.l.b16 %v945
    %v2037 = vunpack.c.h.b16 %v945
    %v2038 = vunpack.c.l.b16 %v946
    %v2039 = vunpack.c.h.b16 %v946
    %v2040 = vunpack.c.l.b16 %v947
    %v2041 = vunpack.c.h.b16 %v947
    %v2042 = vunpack.c.l.b16 %v948
    %v2043 = vunpack.c.h.b16 %v948
    %v2044 = vunpack.c.l.b16 %v949
    %v2045 = vunpack.c.h.b16 %v949
    %v2046 = vunpack.c.l.b16 %v950
    %v2047 = vunpack.c.h.b16 %v950
    %v2048 = vunpack.c.l.b16 %v951
    %v2049 = vunpack.c.h.b16 %v951
    %v2050 = vunpack.c.l.b16 %v952
    %v2051 = vunpack.c.h.b16 %v952
    %v2052 = vunpack.c.l.b16 %v953
    %v2053 = vunpack.c.h.b16 %v953
    %v2054 = vunpack.c.l.b16 %v954
    %v2055 = vunpack.c.h.b16 %v954
    %v2056 = vunpack.c.l.b16 %v955
    %v2057 = vunpack.c.h.b16 %v955
    %v2058 = vunpack.c.l.b16 %v956
    %v2059 = vunpack.c.h.b16 %v956
    %v2060 = vunpack.c.l.b16 %v957
    %v2061 = vunpack.c.h.b16 %v957
    %v2062 = vunpack.c.l.b16 %v958
    %v2063 = vunpack.c.h.b16 %v958
    %v2064 = vunpack.c.l.b16 %v959
    %v2065 = vunpack.c.h.b16 %v959
    %v2066 = vunpack.c.l.b16 %v960
    %v2067 = vunpack.c.h.b16 %v960
    %v2068 = vunpack.c.l.b16 %v961
    %v2069 = vunpack.c.h.b16 %v961
    %v2070 = vunpack.c.l.b16 %v962
    %v2071 = vunpack.c.h.b16 %v962
    %v2072 = vunpack.c.l.b16 %v963
    %v2073 = vunpack.c.h.b16 %v963
    %v2074 = vunpack.c.l.b16 %v964
    %v2075 = vunpack.c.h.b16 %v964
    %v2076 = vunpack.c.l.b16 %v965
    %v2077 = vunpack.c.h.b16 %v965
    %v2078 = vunpack.c.l.b16 %v966
    %v2079 = vunpack.c.h.b16 %v966
    %v2080 = vunpack.c.l.b16 %v967
    %v2081 = vunpack.c.h.b16 %v967
    %v2082 = vunpack.c.l.b16 %v968
    %v2083 = vunpack.c.h.b16 %v968
    %v2084 = vunpack.c.l.b16 %v969
    %v2085 = vunpack.c.h.b16 %v969
    %v2086 = vunpack.c.l.b16 %v970
    %v2087 = vunpack.c.h.b16 %v970
    %v2088 = vunpack.c.l.b16 %v971
    %v2089 = vunpack.c.h.b16 %v971
    %v2090 = vunpack.c.l.b16 %v972
    %v2091 = vunpack.c.h.b16 %v972
    %v2092 = vunpack.c.l.b16 %v973
    %v2093 = vunpack.c.h.b16 %v973
    %v2094 = vunpack.c.l.b16 %v974
    %v2095 = vunpack.c.h.b16 %v974
    %v2096 = vunpack.c.l.b16 %v975
    %v2097 = vunpack.c.h.b16 %v975
    %v2098 = vunpack.c.l.b16 %v976
    %v2099 = vunpack.c.h.b16 %v976
    %v2100 = vunpack.c.l.b16 %v977
    %v2101 = vunpack.c.h.b16 %v977
    %v2102 = vunpack.c.l.b16 %v978
    %v2103 = vunpack.c.h.b16 %v978
    %v2104 = vunpack.c.l.b16 %v979
    %v2105 = vunpack.c.h.b16 %v979
    %v2106 = vunpack.c.l.b16 %v980
    %v2107 = vunpack.c.h.b16 %v980
    %v2108 = vunpack.c.l.b16 %v981
    %v2109 = vunpack.c.h.b16 %v981
    %v2110 = vunpack.c.l.b16 %v982
    %v2111 = vunpack.c.h.b16 %v982
    %v2112 = vunpack.c.l.b16 %v983
    %v2113 = vunpack.c.h.b16 %v983
    %v2114 = vunpack.c.l.b16 %v984
    %v2115 = vunpack.c.h.b16 %v984
    %v2116 = vunpack.c.l.b16 %v985
    %v2117 = vunpack.c.h.b16 %v985
    %v2118 = vunpack.c.l.b16 %v986
    %v2119 = vunpack.c.h.b16 %v986
    %v2120 = vunpack.c.l.b16 %v987
    %v2121 = vunpack.c.h.b16 %v987
    %v2122 = vunpack.c.l.b16 %v988
    %v2123 = vunpack.c.h.b16 %v988
    %v2124 = vunpack.c.l.b16 %v989
    %v2125 = vunpack.c.h.b16 %v989
    %v2126 = vunpack.c.l.b16 %v990
    %v2127 = vunpack.c.h.b16 %v990
    %v2128 = vunpack.c.l.b16 %v991
    %v2129 = vunpack.c.h.b16 %v991
    %v2130 = vunpack.c.l.b16 %v992
    %v2131 = vunpack.c.h.b16 %v992
    %v2132 = vunpack.c.l.b16 %v993
    %v2133 = vunpack.c.h.b16 %v993
    %v2134 = vunpack.c.l.b16 %v994
    %v2135 = vunpack.c.h.b16 %v994
    %v2136 = vunpack.c.l.b16 %v995
    %v2137 = vunpack.c.h.b16 %v995
    %v2138 = vunpack.c.l.b16 %v996
    %v2139 = vunpack.c.h.b16 %v996
    %v2140 = vunpack.c.l.b16 %v997
    %v2141 = vunpack.c.h.b16 %v997
    %v2142 = vunpack.c.l.b16 %v998
    %v2143 = vunpack.c.h.b16 %v998
    %v2144 = vunpack.c.l.b16 %v999
    %v2145 = vunpack.c.h.b16 %v999
    %v2146 = vunpack.c.l.b16 %v1000
    %v2147 = vunpack.c.h.b16 %v1000
    %v2148 = vunpack.c.l.b16 %v1001
    %v2149 = vunpack.c.h.b16 %v1001
    %v2150 = vunpack.c.l.b16 %v1002
    %v2151 = vunpack.c.h.b16 %v1002
    %v2152 = vunpack.c.l.b16 %v1003
    %v2153 = vunpack.c.h.b16 %v1003
    %v2154 = vunpack.c.l.b16 %v1004
    %v2155 = vunpack.c.h.b16 %v1004
    %v2156 = vunpack.c.l.b16 %v1005
    %v2157 = vunpack.c.h.b16 %v1005
    %v2158 = vunpack.c.l.b16 %v1006
    %v2159 = vunpack.c.h.b16 %v1006
    %v2160 = vunpack.c.l.b16 %v1007
    %v2161 = vunpack.c.h.b16 %v1007
    %v2162 = vunpack.c.l.b16 %v1008
    %v2163 = vunpack.c.h.b16 %v1008
    %v2164 = vunpack.c.l.b16 %v1009
    %v2165 = vunpack.c.h.b16 %v1009
    %v2166 = vunpack.c.l.b16 %v1010
    %v2167 = vunpack.c.h.b16 %v1010
    %v2168 = vunpack.c.l.b16 %v1011
    %v2169 = vunpack.c.h.b16 %v1011
    %v2170 = vunpack.c.l.b16 %v1012
    %v2171 = vunpack.c.h.b16 %v1012
    %v2172 = vunpack.c.l.b16 %v1013
    %v2173 = vunpack.c.h.b16 %v1013
    %v2174 = vunpack.c.l.b16 %v1014
    %v2175 = vunpack.c.h.b16 %v1014
    %v2176 = vunpack.c.l.b16 %v1015
    %v2177 = vunpack.c.h.b16 %v1015
    %v2178 = vunpack.c.l.b16 %v1016
    %v2179 = vunpack.c.h.b16 %v1016
    %v2180 = vunpack.c.l.b16 %v1017
    %v2181 = vunpack.c.h.b16 %v1017
    %v2182 = vunpack.c.l.b16 %v1018
    %v2183 = vunpack.c.h.b16 %v1018
    %v2184 = vunpack.c.l.b16 %v1019
    %v2185 = vunpack.c.h.b16 %v1019
    %v2186 = vunpack.c.l.b16 %v1020
    %v2187 = vunpack.c.h.b16 %v1020
    %v2188 = vunpack.c.l.b16 %v1021
    %v2189 = vunpack.c.h.b16 %v1021
    %v2190 = vunpack.c.l.b16 %v1022
    %v2191 = vunpack.c.h.b16 %v1022
    %v2192 = vunpack.c.l.b16 %v1023
    %v2193 = vunpack.c.h.b16 %v1023
    %v2194 = vunpack.c.l.b16 %v1024
    %v2195 = vunpack.c.h.b16 %v1024
    %v2196 = vunpack.c.l.b16 %v1025
    %v2197 = vunpack.c.h.b16 %v1025
    %v2198 = vunpack.c.l.b16 %v1026
    %v2199 = vunpack.c.h.b16 %v1026
    %v2200 = vunpack.c.l.b16 %v1027
    %v2201 = vunpack.c.h.b16 %v1027
    %v2202 = vunpack.c.l.b16 %v1028
    %v2203 = vunpack.c.h.b16 %v1028
    %v2204 = vunpack.c.l.b16 %v1029
    %v2205 = vunpack.c.h.b16 %v1029
    %v2206 = vunpack.c.l.b16 %v1030
    %v2207 = vunpack.c.h.b16 %v1030
    %v2208 = vunpack.c.l.b16 %v1031
    %v2209 = vunpack.c.h.b16 %v1031
    %v2210 = vunpack.c.l.b16 %v1032
    %v2211 = vunpack.c.h.b16 %v1032
    %v2212 = vunpack.c.l.b16 %v1033
    %v2213 = vunpack.c.h.b16 %v1033
    %v2214 = vunpack.c.l.b16 %v1034
    %v2215 = vunpack.c.h.b16 %v1034
    %v2216 = vunpack.c.l.b16 %v1035
    %v2217 = vunpack.c.h.b16 %v1035
    %v2218 = vunpack.c.l.b16 %v1036
    %v2219 = vunpack.c.h.b16 %v1036
    %v2220 = vunpack.c.l.b16 %v1037
    %v2221 = vunpack.c.h.b16 %v1037
    %v2222 = vunpack.c.l.b16 %v1038
    %v2223 = vunpack.c.h.b16 %v1038
    %v2224 = vunpack.c.l.b16 %v1039
    %v2225 = vunpack.c.h.b16 %v1039
    %v2226 = vunpack.c.l.b16 %v1040
    %v2227 = vunpack.c.h.b16 %v1040
    %v2228 = vunpack.c.l.b16 %v1041
    %v2229 = vunpack.c.h.b16 %v1041
    %v2230 = vunpack.c.l.b16 %v1042
    %v2231 = vunpack.c.h.b16 %v1042
    %v2232 = vunpack.c.l.b16 %v1043
    %v2233 = vunpack.c.h.b16 %v1043
    %v2234 = vunpack.c.l.b16 %v1044
    %v2235 = vunpack.c.h.b16 %v1044
    %v2236 = vunpack.c.l.b16 %v1045
    %v2237 = vunpack.c.h.b16 %v1045
    %v2238 = vunpack.c.l.b16 %v1046
    %v2239 = vunpack.c.h.b16 %v1046
    %v2240 = vunpack.c.l.b16 %v1047
    %v2241 = vunpack.c.h.b16 %v1047
    %v2242 = vunpack.c.l.b16 %v1048
    %v2243 = vunpack.c.h.b16 %v1048
    %v2244 = vunpack.c.l.b16 %v1049
    %v2245 = vunpack.c.h.b16 %v1049
    %v2246 = vunpack.c.l.b16 %v1050
    %v2247 = vunpack.c.h.b16 %v1050
    %v2248 = vunpack.c.l.b16 %v1051
    %v2249 = vunpack.c.h.b16 %v1051
    %v2250 = vunpack.c.l.b16 %v1052
    %v2251 = vunpack.c.h.b16 %v1052
    %v2252 = vunpack.c.l.b16 %v1053
    %v2253 = vunpack.c.h.b16 %v1053
    %v2254 = vunpack.c.l.b16 %v1054
    %v2255 = vunpack.c.h.b16 %v1054
    %v2256 = vunpack.c.l.b16 %v1055
    %v2257 = vunpack.c.h.b16 %v1055
    %v2258 = vunpack.c.l.b16 %v1056
    %v2259 = vunpack.c.h.b16 %v1056
    %v2260 = vunpack.c.l.b16 %v1057
    %v2261 = vunpack.c.h.b16 %v1057
    %v2262 = vunpack.c.l.b16 %v1058
    %v2263 = vunpack.c.h.b16 %v1058
    %v2264 = vunpack.c.l.b16 %v1059
    %v2265 = vunpack.c.h.b16 %v1059
    %v2266 = vunpack.c.l.b16 %v1060
    %v2267 = vunpack.c.h.b16 %v1060
    %v2268 = vunpack.c.l.b16 %v1061
    %v2269 = vunpack.c.h.b16 %v1061
    %v2270 = vunpack.c.l.b16 %v1062
    %v2271 = vunpack.c.h.b16 %v1062
    %v2272 = vunpack.c.l.b16 %v1063
    %v2273 = vunpack.c.h.b16 %v1063
    %v2274 = vunpack.c.l.b16 %v1064
    %v2275 = vunpack.c.h.b16 %v1064
    %v2276 = vunpack.c.l.b16 %v1065
    %v2277 = vunpack.c.h.b16 %v1065
    %v2278 = vunpack.c.l.b16 %v1066
    %v2279 = vunpack.c.h.b16 %v1066
    %v2280 = vunpack.c.l.b16 %v1067
    %v2281 = vunpack.c.h.b16 %v1067
    %v2282 = vunpack.c.l.b16 %v1068
    %v2283 = vunpack.c.h.b16 %v1068
    %v2284 = vunpack.c.l.b16 %v1069
    %v2285 = vunpack.c.h.b16 %v1069
    %v2286 = vunpack.c.l.b16 %v1070
    %v2287 = vunpack.c.h.b16 %v1070
    %v2288 = vunpack.c.l.b16 %v1071
    %v2289 = vunpack.c.h.b16 %v1071
    %v2290 = vunpack.c.l.b16 %v1072
    %v2291 = vunpack.c.h.b16 %v1072
    %v2292 = vunpack.c.l.b16 %v1073
    %v2293 = vunpack.c.h.b16 %v1073
    %v2294 = vunpack.c.l.b16 %v1074
    %v2295 = vunpack.c.h.b16 %v1074
    %v2296 = vunpack.c.l.b16 %v1075
    %v2297 = vunpack.c.h.b16 %v1075
    %v2298 = vunpack.c.l.b16 %v1076
    %v2299 = vunpack.c.h.b16 %v1076
    %v2300 = vunpack.c.l.b16 %v1077
    %v2301 = vunpack.c.h.b16 %v1077
    %v2302 = vunpack.c.l.b16 %v1078
    %v2303 = vunpack.c.h.b16 %v1078
    %v2304 = vunpack.c.l.b16 %v1079
    %v2305 = vunpack.c.h.b16 %v1079
    %v2306 = vunpack.c.l.b16 %v1080
    %v2307 = vunpack.c.h.b16 %v1080
    %v2308 = vunpack.c.l.b16 %v1081
    %v2309 = vunpack.c.h.b16 %v1081
    %v2310 = vunpack.c.l.b16 %v1082
    %v2311 = vunpack.c.h.b16 %v1082
    %v2312 = vunpack.c.l.b16 %v1083
    %v2313 = vunpack.c.h.b16 %v1083
    %v2314 = vunpack.c.l.b16 %v1084
    %v2315 = vunpack.c.h.b16 %v1084
    %v2316 = vunpack.c.l.b16 %v1085
    %v2317 = vunpack.c.h.b16 %v1085
    %v2318 = vunpack.c.l.b16 %v1086
    %v2319 = vunpack.c.h.b16 %v1086
    %v2320 = vunpack.c.l.b16 %v1087
    %v2321 = vunpack.c.h.b16 %v1087
    %v2322 = vunpack.c.l.b16 %v1088
    %v2323 = vunpack.c.h.b16 %v1088
    %v2324 = vunpack.c.l.b16 %v1089
    %v2325 = vunpack.c.h.b16 %v1089
    %v2326 = vunpack.c.l.b16 %v1090
    %v2327 = vunpack.c.h.b16 %v1090
    %v2328 = vunpack.c.l.b16 %v1091
    %v2329 = vunpack.c.h.b16 %v1091
    %v2330 = vunpack.c.l.b16 %v1092
    %v2331 = vunpack.c.h.b16 %v1092
    %v2332 = vunpack.c.l.b16 %v1093
    %v2333 = vunpack.c.h.b16 %v1093
    %v2334 = vunpack.c.l.b16 %v1094
    %v2335 = vunpack.c.h.b16 %v1094
    %v2336 = vunpack.c.l.b16 %v1095
    %v2337 = vunpack.c.h.b16 %v1095
    %v2338 = vunpack.c.l.b16 %v1096
    %v2339 = vunpack.c.h.b16 %v1096
    %v2340 = vunpack.c.l.b16 %v1097
    %v2341 = vunpack.c.h.b16 %v1097
    %v2342 = vunpack.c.l.b16 %v1098
    %v2343 = vunpack.c.h.b16 %v1098
    %v2344 = vunpack.c.l.b16 %v1099
    %v2345 = vunpack.c.h.b16 %v1099
    %v2346 = vunpack.c.l.b16 %v1100
    %v2347 = vunpack.c.h.b16 %v1100
    %v2348 = vunpack.c.l.b16 %v1101
    %v2349 = vunpack.c.h.b16 %v1101
    %v2350 = vunpack.c.l.b16 %v1102
    %v2351 = vunpack.c.h.b16 %v1102
    %v2352 = vunpack.c.l.b16 %v1103
    %v2353 = vunpack.c.h.b16 %v1103
    %v2354 = vunpack.c.l.b16 %v1104
    %v2355 = vunpack.c.h.b16 %v1104
    %v2356 = vunpack.c.l.b16 %v1105
    %v2357 = vunpack.c.h.b16 %v1105
    %v2358 = vunpack.c.l.b16 %v1106
    %v2359 = vunpack.c.h.b16 %v1106
    %v2360 = vunpack.c.l.b16 %v1107
    %v2361 = vunpack.c.h.b16 %v1107
    %v2362 = vunpack.c.l.b16 %v1108
    %v2363 = vunpack.c.h.b16 %v1108
    %v2364 = vunpack.c.l.b16 %v1109
    %v2365 = vunpack.c.h.b16 %v1109
    %v2366 = vunpack.c.l.b16 %v1110
    %v2367 = vunpack.c.h.b16 %v1110
    %v2368 = vunpack.c.l.b16 %v1111
    %v2369 = vunpack.c.h.b16 %v1111
    %v2370 = vunpack.c.l.b16 %v1112
    %v2371 = vunpack.c.h.b16 %v1112
    %v2372 = vunpack.c.l.b16 %v1113
    %v2373 = vunpack.c.h.b16 %v1113
    %v2374 = vunpack.c.l.b16 %v1114
    %v2375 = vunpack.c.h.b16 %v1114
    %v2376 = vunpack.c.l.b16 %v1115
    %v2377 = vunpack.c.h.b16 %v1115
    %v2378 = vunpack.c.l.b16 %v1116
    %v2379 = vunpack.c.h.b16 %v1116
    %v2380 = vunpack.c.l.b16 %v1117
    %v2381 = vunpack.c.h.b16 %v1117
    %v2382 = vunpack.c.l.b16 %v1118
    %v2383 = vunpack.c.h.b16 %v1118
    %v2384 = vunpack.c.l.b16 %v1119
    %v2385 = vunpack.c.h.b16 %v1119
    %v2386 = vunpack.c.l.b16 %v1120
    %v2387 = vunpack.c.h.b16 %v1120
    %v2388 = vunpack.c.l.b16 %v1121
    %v2389 = vunpack.c.h.b16 %v1121
    %v2390 = vunpack.c.l.b16 %v1122
    %v2391 = vunpack.c.h.b16 %v1122
    %v2392 = vunpack.c.l.b16 %v1123
    %v2393 = vunpack.c.h.b16 %v1123
    %v2394 = vunpack.c.l.b16 %v1124
    %v2395 = vunpack.c.h.b16 %v1124
    %v2396 = vunpack.c.l.b16 %v1125
    %v2397 = vunpack.c.h.b16 %v1125
    %v2398 = vunpack.c.l.b16 %v1126
    %v2399 = vunpack.c.h.b16 %v1126
    %v2400 = vunpack.c.l.b16 %v1127
    %v2401 = vunpack.c.h.b16 %v1127
    %v2402 = vunpack.c.l.b16 %v1128
    %v2403 = vunpack.c.h.b16 %v1128
    %v2404 = vunpack.c.l.b16 %v1129
    %v2405 = vunpack.c.h.b16 %v1129
    %v2406 = vunpack.c.l.b16 %v1130
    %v2407 = vunpack.c.h.b16 %v1130
    %v2408 = vunpack.c.l.b16 %v1131
    %v2409 = vunpack.c.h.b16 %v1131
    %v2410 = vunpack.c.l.b16 %v1132
    %v2411 = vunpack.c.h.b16 %v1132
    %v2412 = vunpack.c.l.b16 %v1133
    %v2413 = vunpack.c.h.b16 %v1133
    %v2414 = vunpack.c.l.b16 %v1134
    %v2415 = vunpack.c.h.b16 %v1134
    %v2416 = vunpack.c.l.b16 %v1135
    %v2417 = vunpack.c.h.b16 %v1135
    %v2418 = vunpack.c.l.b16 %v1136
    %v2419 = vunpack.c.h.b16 %v1136
    %v2420 = vunpack.c.l.b16 %v1137
    %v2421 = vunpack.c.h.b16 %v1137
    %v2422 = vunpack.c.l.b16 %v1138
    %v2423 = vunpack.c.h.b16 %v1138
    %v2424 = vunpack.c.l.b16 %v1139
    %v2425 = vunpack.c.h.b16 %v1139
    %v2426 = vunpack.c.l.b16 %v1140
    %v2427 = vunpack.c.h.b16 %v1140
    %v2428 = vunpack.c.l.b16 %v1141
    %v2429 = vunpack.c.h.b16 %v1141
    %v2430 = vunpack.c.l.b16 %v1142
    %v2431 = vunpack.c.h.b16 %v1142
    %v2432 = vunpack.c.l.b16 %v1143
    %v2433 = vunpack.c.h.b16 %v1143
    %v2434 = vunpack.c.l.b16 %v1144
    %v2435 = vunpack.c.h.b16 %v1144
    %v2436 = vunpack.c.l.b16 %v1145
    %v2437 = vunpack.c.h.b16 %v1145
    %v2438 = vunpack.c.l.b16 %v1146
    %v2439 = vunpack.c.h.b16 %v1146
    %v2440 = vunpack.c.l.b16 %v1147
    %v2441 = vunpack.c.h.b16 %v1147
    %v2442 = vunpack.c.l.b16 %v1148
    %v2443 = vunpack.c.h.b16 %v1148
    %v2444 = vunpack.c.l.b16 %v1149
    %v2445 = vunpack.c.h.b16 %v1149
    %v2446 = vunpack.c.l.b16 %v1150
    %v2447 = vunpack.c.h.b16 %v1150
    %v2448 = vunpack.c.l.b16 %v1151
    %v2449 = vunpack.c.h.b16 %v1151
    %v2450 = vunpack.c.l.b16 %v1152
    %v2451 = vunpack.c.h.b16 %v1152
    %v2452 = vunpack.c.l.b16 %v1153
    %v2453 = vunpack.c.h.b16 %v1153
    %v2454 = vunpack.c.l.b16 %v1154
    %v2455 = vunpack.c.h.b16 %v1154
    %v2456 = vunpack.c.l.b16 %v1155
    %v2457 = vunpack.c.h.b16 %v1155
    %v2458 = vunpack.c.l.b16 %v1156
    %v2459 = vunpack.c.h.b16 %v1156
    %v2460 = vunpack.c.l.b16 %v1157
    %v2461 = vunpack.c.h.b16 %v1157
    %v2462 = vunpack.c.l.b16 %v1158
    %v2463 = vunpack.c.h.b16 %v1158
    %v2464 = vunpack.c.l.b16 %v1159
    %v2465 = vunpack.c.h.b16 %v1159
    %v2466 = vunpack.c.l.b16 %v1160
    %v2467 = vunpack.c.h.b16 %v1160
    %v2468 = vunpack.c.l.b16 %v1161
    %v2469 = vunpack.c.h.b16 %v1161
    %v2470 = vunpack.c.l.b16 %v1162
    %v2471 = vunpack.c.h.b16 %v1162
    %v2472 = vunpack.c.l.b16 %v1163
    %v2473 = vunpack.c.h.b16 %v1163
    %v2474 = vunpack.c.l.b16 %v1164
    %v2475 = vunpack.c.h.b16 %v1164
    %v2476 = vunpack.c.l.b16 %v1165
    %v2477 = vunpack.c.h.b16 %v1165
    %v2478 = vunpack.c.l.b16 %v1166
    %v2479 = vunpack.c.h.b16 %v1166
    %v2480 = vunpack.c.l.b16 %v1167
    %v2481 = vunpack.c.h.b16 %v1167
    %v2482 = vunpack.c.l.b16 %v1168
    %v2483 = vunpack.c.h.b16 %v1168
    %v2484 = vunpack.c.l.b16 %v1169
    %v2485 = vunpack.c.h.b16 %v1169
    %v2486 = vunpack.c.l.b16 %v1170
    %v2487 = vunpack.c.h.b16 %v1170
    %v2488 = vunpack.c.l.b16 %v1171
    %v2489 = vunpack.c.h.b16 %v1171
    %v2490 = vunpack.c.l.b16 %v1172
    %v2491 = vunpack.c.h.b16 %v1172
    %v2492 = vunpack.c.l.b16 %v1173
    %v2493 = vunpack.c.h.b16 %v1173
    %v2494 = vunpack.c.l.b16 %v1174
    %v2495 = vunpack.c.h.b16 %v1174
    %v2496 = vunpack.c.l.b16 %v1175
    %v2497 = vunpack.c.h.b16 %v1175
    %v2498 = vunpack.c.l.b16 %v1176
    %v2499 = vunpack.c.h.b16 %v1176
    %v2500 = vunpack.c.l.b16 %v1177
    %v2501 = vunpack.c.h.b16 %v1177
    %v2502 = vunpack.c.l.b16 %v1178
    %v2503 = vunpack.c.h.b16 %v1178
    %v2504 = vunpack.c.l.b16 %v1179
    %v2505 = vunpack.c.h.b16 %v1179
    %v2506 = vunpack.c.l.b16 %v1180
    %v2507 = vunpack.c.h.b16 %v1180
    %v2508 = vunpack.c.l.b16 %v1181
    %v2509 = vunpack.c.h.b16 %v1181
    %v2510 = vunpack.c.l.b16 %v1182
    %v2511 = vunpack.c.h.b16 %v1182
    %v2512 = vunpack.c.l.b16 %v1183
    %v2513 = vunpack.c.h.b16 %v1183
    %v2514 = vunpack.c.l.b16 %v1184
    %v2515 = vunpack.c.h.b16 %v1184
    %v2516 = vunpack.c.l.b16 %v1185
    %v2517 = vunpack.c.h.b16 %v1185
    %v2518 = vunpack.c.l.b16 %v1186
    %v2519 = vunpack.c.h.b16 %v1186
    %v2520 = vunpack.c.l.b16 %v1187
    %v2521 = vunpack.c.h.b16 %v1187
    %v2522 = vunpack.c.l.b16 %v1188
    %v2523 = vunpack.c.h.b16 %v1188
    %v2524 = vunpack.c.l.b16 %v1189
    %v2525 = vunpack.c.h.b16 %v1189
    %v2526 = vunpack.c.l.b16 %v1190
    %v2527 = vunpack.c.h.b16 %v1190
    %v2528 = vunpack.c.l.b16 %v1191
    %v2529 = vunpack.c.h.b16 %v1191
    %v2530 = vunpack.c.l.b16 %v1192
    %v2531 = vunpack.c.h.b16 %v1192
    %v2532 = vunpack.c.l.b16 %v1193
    %v2533 = vunpack.c.h.b16 %v1193
    %v2534 = vunpack.c.l.b16 %v1194
    %v2535 = vunpack.c.h.b16 %v1194
    %v2536 = vunpack.c.l.b16 %v1195
    %v2537 = vunpack.c.h.b16 %v1195
    %v2538 = vunpack.c.l.b16 %v1196
    %v2539 = vunpack.c.h.b16 %v1196
    %v2540 = vunpack.c.l.b16 %v1197
    %v2541 = vunpack.c.h.b16 %v1197
    %v2542 = vunpack.c.l.b16 %v1198
    %v2543 = vunpack.c.h.b16 %v1198
    %v2544 = vunpack.c.l.b16 %v1199
    %v2545 = vunpack.c.h.b16 %v1199
    %v2546 = vunpack.c.l.b16 %v1200
    %v2547 = vunpack.c.h.b16 %v1200
    %v2548 = vunpack.c.l.b16 %v1201
    %v2549 = vunpack.c.h.b16 %v1201
    %v2550 = vunpack.c.l.b16 %v1202
    %v2551 = vunpack.c.h.b16 %v1202
    %v2552 = vunpack.c.l.b16 %v1203
    %v2553 = vunpack.c.h.b16 %v1203
    %v2554 = vunpack.c.l.b16 %v1204
    %v2555 = vunpack.c.h.b16 %v1204
    %v2556 = vunpack.c.l.b16 %v1205
    %v2557 = vunpack.c.h.b16 %v1205
    %v2558 = vunpack.c.l.b16 %v1206
    %v2559 = vunpack.c.h.b16 %v1206
    %v2560 = vunpack.c.l.b16 %v1207
    %v2561 = vunpack.c.h.b16 %v1207
    %v2562 = vunpack.c.l.b16 %v1208
    %v2563 = vunpack.c.h.b16 %v1208
    %v2564 = vunpack.c.l.b16 %v1209
    %v2565 = vunpack.c.h.b16 %v1209
    %v2566 = vunpack.c.l.b16 %v1210
    %v2567 = vunpack.c.h.b16 %v1210
    %v2568 = vunpack.c.l.b16 %v1211
    %v2569 = vunpack.c.h.b16 %v1211
    %v2570 = vunpack.c.l.b16 %v1212
    %v2571 = vunpack.c.h.b16 %v1212
    %v2572 = vunpack.c.l.b16 %v1213
    %v2573 = vunpack.c.h.b16 %v1213
    %v2574 = vunpack.c.l.b16 %v1214
    %v2575 = vunpack.c.h.b16 %v1214
    %v2576 = vunpack.c.l.b16 %v1215
    %v2577 = vunpack.c.h.b16 %v1215
    %v2578 = vunpack.c.l.b16 %v1216
    %v2579 = vunpack.c.h.b16 %v1216
    %v2580 = vunpack.c.l.b16 %v1217
    %v2581 = vunpack.c.h.b16 %v1217
    %v2582 = vunpack.c.l.b16 %v1218
    %v2583 = vunpack.c.h.b16 %v1218
    %v2584 = vunpack.c.l.b16 %v1219
    %v2585 = vunpack.c.h.b16 %v1219
    %v2586 = vunpack.c.l.b16 %v1220
    %v2587 = vunpack.c.h.b16 %v1220
    %v2588 = vunpack.c.l.b16 %v1221
    %v2589 = vunpack.c.h.b16 %v1221
    %v2590 = vunpack.c.l.b16 %v1222
    %v2591 = vunpack.c.h.b16 %v1222
    %v2592 = vunpack.c.l.b16 %v1223
    %v2593 = vunpack.c.h.b16 %v1223
    %v2594 = vunpack.c.l.b16 %v1224
    %v2595 = vunpack.c.h.b16 %v1224
    %v2596 = vunpack.c.l.b16 %v1225
    %v2597 = vunpack.c.h.b16 %v1225
    %v2598 = vunpack.c.l.b16 %v1226
    %v2599 = vunpack.c.h.b16 %v1226
    %v2600 = vunpack.c.l.b16 %v1227
    %v2601 = vunpack.c.h.b16 %v1227
    %v2602 = vunpack.c.l.b16 %v1228
    %v2603 = vunpack.c.h.b16 %v1228
    %v2604 = vunpack.c.l.b16 %v1229
    %v2605 = vunpack.c.h.b16 %v1229
    %v2606 = vunpack.c.l.b16 %v1230
    %v2607 = vunpack.c.h.b16 %v1230
    %v2608 = vunpack.c.l.b16 %v1231
    %v2609 = vunpack.c.h.b16 %v1231
    %v2610 = vunpack.c.l.b16 %v1232
    %v2611 = vunpack.c.h.b16 %v1232
    %v2612 = vunpack.c.l.b16 %v1233
    %v2613 = vunpack.c.h.b16 %v1233
    %v2614 = vunpack.c.l.b16 %v1234
    %v2615 = vunpack.c.h.b16 %v1234
    %v2616 = vunpack.c.l.b16 %v1235
    %v2617 = vunpack.c.h.b16 %v1235
    %v2618 = vunpack.c.l.b16 %v1236
    %v2619 = vunpack.c.h.b16 %v1236
    %v2620 = vunpack.c.l.b16 %v1237
    %v2621 = vunpack.c.h.b16 %v1237
    %v2622 = vunpack.c.l.b16 %v1238
    %v2623 = vunpack.c.h.b16 %v1238
    %v2624 = vunpack.c.l.b16 %v1239
    %v2625 = vunpack.c.h.b16 %v1239
    %v2626 = vunpack.c.l.b16 %v1240
    %v2627 = vunpack.c.h.b16 %v1240
    %v2628 = vunpack.c.l.b16 %v1241
    %v2629 = vunpack.c.h.b16 %v1241
    %v2630 = vunpack.c.l.b16 %v1242
    %v2631 = vunpack.c.h.b16 %v1242
    %v2632 = vunpack.c.l.b16 %v1243
    %v2633 = vunpack.c.h.b16 %v1243
    %v2634 = vunpack.c.l.b16 %v1244
    %v2635 = vunpack.c.h.b16 %v1244
    %v2636 = vunpack.c.l.b16 %v1245
    %v2637 = vunpack.c.h.b16 %v1245
    %v2638 = vunpack.c.l.b16 %v1246
    %v2639 = vunpack.c.h.b16 %v1246
    %v2640 = vunpack.c.l.b16 %v1247
    %v2641 = vunpack.c.h.b16 %v1247
    %v2642 = vunpack.c.l.b16 %v1248
    %v2643 = vunpack.c.h.b16 %v1248
    %v2644 = vunpack.c.l.b16 %v1249
    %v2645 = vunpack.c.h.b16 %v1249
    %v2646 = vunpack.c.l.b16 %v1250
    %v2647 = vunpack.c.h.b16 %v1250
    %v2648 = vunpack.c.l.b16 %v1251
    %v2649 = vunpack.c.h.b16 %v1251
    %v2650 = vunpack.c.l.b16 %v1252
    %v2651 = vunpack.c.h.b16 %v1252
    %v2652 = vunpack.c.l.b16 %v1253
    %v2653 = vunpack.c.h.b16 %v1253
    %v2654 = vunpack.c.l.b16 %v1254
    %v2655 = vunpack.c.h.b16 %v1254
    %v2656 = vunpack.c.l.b16 %v1255
    %v2657 = vunpack.c.h.b16 %v1255
    %v2658 = vunpack.c.l.b16 %v1256
    %v2659 = vunpack.c.h.b16 %v1256
    %v2660 = vunpack.c.l.b16 %v1257
    %v2661 = vunpack.c.h.b16 %v1257
    %v2662 = vunpack.c.l.b16 %v1258
    %v2663 = vunpack.c.h.b16 %v1258
    %v2664 = vunpack.c.l.b16 %v1259
    %v2665 = vunpack.c.h.b16 %v1259
    %v2666 = vunpack.c.l.b16 %v1260
    %v2667 = vunpack.c.h.b16 %v1260
    %v2668 = vunpack.c.l.b16 %v1261
    %v2669 = vunpack.c.h.b16 %v1261
    %v2670 = vunpack.c.l.b16 %v1262
    %v2671 = vunpack.c.h.b16 %v1262
    %v2672 = vunpack.c.l.b16 %v1263
    %v2673 = vunpack.c.h.b16 %v1263
    %v2674 = vunpack.c.l.b16 %v1264
    %v2675 = vunpack.c.h.b16 %v1264
    %v2676 = vunpack.c.l.b16 %v1265
    %v2677 = vunpack.c.h.b16 %v1265
    %v2678 = vunpack.c.l.b16 %v1266
    %v2679 = vunpack.c.h.b16 %v1266
    %v2680 = vunpack.c.l.b16 %v1267
    %v2681 = vunpack.c.h.b16 %v1267
    %v2682 = vunpack.c.l.b16 %v1268
    %v2683 = vunpack.c.h.b16 %v1268
    %v2684 = vunpack.c.l.b16 %v1269
    %v2685 = vunpack.c.h.b16 %v1269
    %v2686 = vunpack.c.l.b16 %v1270
    %v2687 = vunpack.c.h.b16 %v1270
    %v2688 = vunpack.c.l.b16 %v1271
    %v2689 = vunpack.c.h.b16 %v1271
    %v2690 = vunpack.c.l.b16 %v1272
    %v2691 = vunpack.c.h.b16 %v1272
    %v2692 = vunpack.c.l.b16 %v1273
    %v2693 = vunpack.c.h.b16 %v1273
    %v2694 = vunpack.c.l.b16 %v1274
    %v2695 = vunpack.c.h.b16 %v1274
    %v2696 = vunpack.c.l.b16 %v1275
    %v2697 = vunpack.c.h.b16 %v1275
    %v2698 = vunpack.c.l.b16 %v1276
    %v2699 = vunpack.c.h.b16 %v1276
    %v2700 = vunpack.c.l.b16 %v1277
    %v2701 = vunpack.c.h.b16 %v1277
    %v2702 = vunpack.c.l.b16 %v1278
    %v2703 = vunpack.c.h.b16 %v1278
    %v2704 = vunpack.c.l.b16 %v1279
    %v2705 = vunpack.c.h.b16 %v1279
    %v2706 = vunpack.c.l.b16 %v1280
    %v2707 = vunpack.c.h.b16 %v1280
    %v2708 = vunpack.c.l.b16 %v1281
    %v2709 = vunpack.c.h.b16 %v1281
    %v2710 = vunpack.c.l.b16 %v1282
    %v2711 = vunpack.c.h.b16 %v1282
    %v2712 = vunpack.c.l.b16 %v1283
    %v2713 = vunpack.c.h.b16 %v1283
    %v2714 = vunpack.c.l.b16 %v1284
    %v2715 = vunpack.c.h.b16 %v1284
    %v2716 = vunpack.c.l.b16 %v1285
    %v2717 = vunpack.c.h.b16 %v1285
    %v2718 = vunpack.c.l.b16 %v1286
    %v2719 = vunpack.c.h.b16 %v1286
    %v2720 = vunpack.c.l.b16 %v1287
    %v2721 = vunpack.c.h.b16 %v1287
    %v2722 = vunpack.c.l.b16 %v1288
    %v2723 = vunpack.c.h.b16 %v1288
    %v2724 = vunpack.c.l.b16 %v1289
    %v2725 = vunpack.c.h.b16 %v1289
    %v2726 = vunpack.c.l.b16 %v1290
    %v2727 = vunpack.c.h.b16 %v1290
    %v2728 = vunpack.c.l.b16 %v1291
    %v2729 = vunpack.c.h.b16 %v1291
    %v2730 = vunpack.c.l.b16 %v1292
    %v2731 = vunpack.c.h.b16 %v1292
    %v2732 = vunpack.c.l.b16 %v1293
    %v2733 = vunpack.c.h.b16 %v1293
    %v2734 = vunpack.c.l.b16 %v1294
    %v2735 = vunpack.c.h.b16 %v1294
    %v2736 = vunpack.c.l.b16 %v1295
    %v2737 = vunpack.c.h.b16 %v1295
    %v2738 = vunpack.c.l.b16 %v1296
    %v2739 = vunpack.c.h.b16 %v1296
    %v2740 = vunpack.c.l.b16 %v1297
    %v2741 = vunpack.c.h.b16 %v1297
    %v2742 = vunpack.c.l.b16 %v1298
    %v2743 = vunpack.c.h.b16 %v1298
    %v2744 = vunpack.c.l.b16 %v1299
    %v2745 = vunpack.c.h.b16 %v1299
    %v2746 = vunpack.c.l.b16 %v1300
    %v2747 = vunpack.c.h.b16 %v1300
    %v2748 = vunpack.c.l.b16 %v1301
    %v2749 = vunpack.c.h.b16 %v1301
    %v2750 = vunpack.c.l.b16 %v1302
    %v2751 = vunpack.c.h.b16 %v1302
    %v2752 = vunpack.c.l.b16 %v1303
    %v2753 = vunpack.c.h.b16 %v1303
    %v2754 = vunpack.c.l.b16 %v1304
    %v2755 = vunpack.c.h.b16 %v1304
    %v2756 = vunpack.c.l.b16 %v1305
    %v2757 = vunpack.c.h.b16 %v1305
    %v2758 = vunpack.c.l.b16 %v1306
    %v2759 = vunpack.c.h.b16 %v1306
    %v2760 = vunpack.c.l.b16 %v1307
    %v2761 = vunpack.c.h.b16 %v1307
    %v2762 = vunpack.c.l.b16 %v1308
    %v2763 = vunpack.c.h.b16 %v1308
    %v2764 = vunpack.c.l.b16 %v1309
    %v2765 = vunpack.c.h.b16 %v1309
    %v2766 = vunpack.c.l.b16 %v1310
    %v2767 = vunpack.c.h.b16 %v1310
    %v2768 = vunpack.c.l.b16 %v1311
    %v2769 = vunpack.c.h.b16 %v1311
    %v2770 = vunpack.c.l.b16 %v1312
    %v2771 = vunpack.c.h.b16 %v1312
    %v2772 = vunpack.c.l.b16 %v1313
    %v2773 = vunpack.c.h.b16 %v1313
    %v2774 = vunpack.c.l.b16 %v1314
    %v2775 = vunpack.c.h.b16 %v1314
    %v2776 = vunpack.c.l.b16 %v1315
    %v2777 = vunpack.c.h.b16 %v1315
    %v2778 = vunpack.c.l.b16 %v1316
    %v2779 = vunpack.c.h.b16 %v1316
    %v2780 = vunpack.c.l.b16 %v1317
    %v2781 = vunpack.c.h.b16 %v1317
    %v2782 = vunpack.c.l.b16 %v1318
    %v2783 = vunpack.c.h.b16 %v1318
    %v2784 = vunpack.c.l.b16 %v1319
    %v2785 = vunpack.c.h.b16 %v1319
    %v2786 = vunpack.c.l.b16 %v1320
    %v2787 = vunpack.c.h.b16 %v1320
    %v2788 = vunpack.c.l.b16 %v1321
    %v2789 = vunpack.c.h.b16 %v1321
    %v2790 = vunpack.c.l.b16 %v1322
    %v2791 = vunpack.c.h.b16 %v1322
    %v2792 = vunpack.c.l.b16 %v1323
    %v2793 = vunpack.c.h.b16 %v1323
    %v2794 = vunpack.c.l.b16 %v1324
    %v2795 = vunpack.c.h.b16 %v1324
    %v2796 = vunpack.c.l.b16 %v1325
    %v2797 = vunpack.c.h.b16 %v1325
    %v2798 = vunpack.c.l.b16 %v1326
    %v2799 = vunpack.c.h.b16 %v1326
    %v2800 = vunpack.c.l.b16 %v1327
    %v2801 = vunpack.c.h.b16 %v1327
    %v2802 = vunpack.c.l.b16 %v1328
    %v2803 = vunpack.c.h.b16 %v1328
    %v2804 = vunpack.c.l.b16 %v1329
    %v2805 = vunpack.c.h.b16 %v1329
    %v2806 = vunpack.c.l.b16 %v1330
    %v2807 = vunpack.c.h.b16 %v1330
    %v2808 = vunpack.c.l.b16 %v1331
    %v2809 = vunpack.c.h.b16 %v1331
    %v2810 = vunpack.c.l.b16 %v1332
    %v2811 = vunpack.c.h.b16 %v1332
    %v2812 = vunpack.c.l.b16 %v1333
    %v2813 = vunpack.c.h.b16 %v1333
    %v2814 = vunpack.c.l.b16 %v1334
    %v2815 = vunpack.c.h.b16 %v1334
    %v2816 = vunpack.c.l.b16 %v1335
    %v2817 = vunpack.c.h.b16 %v1335
    %v2818 = vunpack.c.l.b16 %v1336
    %v2819 = vunpack.c.h.b16 %v1336
    %v2820 = vunpack.c.l.b16 %v1337
    %v2821 = vunpack.c.h.b16 %v1337
    %v2822 = vunpack.c.l.b16 %v1338
    %v2823 = vunpack.c.h.b16 %v1338
    %v2824 = vunpack.c.l.b16 %v1339
    %v2825 = vunpack.c.h.b16 %v1339
    %v2826 = vunpack.c.l.b16 %v1340
    %v2827 = vunpack.c.h.b16 %v1340
    %v2828 = vunpack.c.l.b16 %v1341
    %v2829 = vunpack.c.h.b16 %v1341
    %v2830 = vunpack.c.l.b16 %v1342
    %v2831 = vunpack.c.h.b16 %v1342
    %v2832 = vunpack.c.l.b16 %v1343
    %v2833 = vunpack.c.h.b16 %v1343
    %v2834 = vunpack.c.l.b16 %v1344
    %v2835 = vunpack.c.h.b16 %v1344
    %v2836 = vunpack.c.l.b16 %v1345
    %v2837 = vunpack.c.h.b16 %v1345
    %v2838 = vunpack.c.l.b16 %v1346
    %v2839 = vunpack.c.h.b16 %v1346
    %v2840 = vunpack.c.l.b16 %v1347
    %v2841 = vunpack.c.h.b16 %v1347
    %v2842 = vunpack.c.l.b16 %v1348
    %v2843 = vunpack.c.h.b16 %v1348
    %v2844 = vunpack.c.l.b16 %v1349
    %v2845 = vunpack.c.h.b16 %v1349
    %v2846 = vunpack.c.l.b16 %v1350
    %v2847 = vunpack.c.h.b16 %v1350
    %v2848 = vunpack.c.l.b16 %v1351
    %v2849 = vunpack.c.h.b16 %v1351
    %v2850 = vunpack.c.l.b16 %v1352
    %v2851 = vunpack.c.h.b16 %v1352
    %v2852 = vunpack.c.l.b16 %v1353
    %v2853 = vunpack.c.h.b16 %v1353
    %v2854 = vunpack.c.l.b16 %v1354
    %v2855 = vunpack.c.h.b16 %v1354
    %v2856 = vunpack.c.l.b16 %v1355
    %v2857 = vunpack.c.h.b16 %v1355
    %v2858 = vunpack.c.l.b16 %v1356
    %v2859 = vunpack.c.h.b16 %v1356
    %v2860 = vunpack.c.l.b16 %v1357
    %v2861 = vunpack.c.h.b16 %v1357
    %v2862 = vunpack.c.l.b16 %v1358
    %v2863 = vunpack.c.h.b16 %v1358
    %v2864 = vunpack.c.l.b16 %v1359
    %v2865 = vunpack.c.h.b16 %v1359
    %v2866 = vunpack.c.l.b16 %v1360
    %v2867 = vunpack.c.h.b16 %v1360
    %v2868 = vunpack.c.l.b16 %v1361
    %v2869 = vunpack.c.h.b16 %v1361
    %v2870 = vunpack.c.l.b16 %v1362
    %v2871 = vunpack.c.h.b16 %v1362
    %v2872 = vunpack.c.l.b16 %v1363
    %v2873 = vunpack.c.h.b16 %v1363
    %v2874 = vunpack.c.l.b16 %v1364
    %v2875 = vunpack.c.h.b16 %v1364
    %v2876 = vunpack.c.l.b16 %v1365
    %v2877 = vunpack.c.h.b16 %v1365
    %v2878 = vunpack.c.l.b16 %v1366
    %v2879 = vunpack.c.h.b16 %v1366
    %v2880 = vunpack.c.l.b16 %v1367
    %v2881 = vunpack.c.h.b16 %v1367
    %v2882 = vunpack.c.l.b16 %v1368
    %v2883 = vunpack.c.h.b16 %v1368
    %v2884 = vunpack.c.l.b16 %v1369
    %v2885 = vunpack.c.h.b16 %v1369
    %v2886 = vunpack.c.l.b16 %v1370
    %v2887 = vunpack.c.h.b16 %v1370
    %v2888 = vunpack.c.l.b16 %v1371
    %v2889 = vunpack.c.h.b16 %v1371
    %v2890 = vunpack.c.l.b16 %v1372
    %v2891 = vunpack.c.h.b16 %v1372
    %v2892 = vunpack.c.l.b16 %v1373
    %v2893 = vunpack.c.h.b16 %v1373
    %v2894 = vunpack.c.l.b16 %v1374
    %v2895 = vunpack.c.h.b16 %v1374
    %v2896 = vunpack.c.l.b16 %v1375
    %v2897 = vunpack.c.h.b16 %v1375
    %v2898 = vunpack.c.l.b16 %v1376
    %v2899 = vunpack.c.h.b16 %v1376
    %v2900 = vunpack.c.l.b16 %v1377
    %v2901 = vunpack.c.h.b16 %v1377
    %v2902 = vunpack.c.l.b16 %v1378
    %v2903 = vunpack.c.h.b16 %v1378
    %v2904 = vunpack.c.l.b16 %v1379
    %v2905 = vunpack.c.h.b16 %v1379
    %v2906 = vunpack.c.l.b16 %v1380
    %v2907 = vunpack.c.h.b16 %v1380
    %v2908 = vunpack.c.l.b16 %v1381
    %v2909 = vunpack.c.h.b16 %v1381
    %v2910 = vunpack.c.l.b16 %v1382
    %v2911 = vunpack.c.h.b16 %v1382
    %v2912 = vunpack.c.l.b16 %v1383
    %v2913 = vunpack.c.h.b16 %v1383
    %v2914 = vunpack.c.l.b16 %v1384
    %v2915 = vunpack.c.h.b16 %v1384
    %v2916 = vunpack.c.l.b16 %v1385
    %v2917 = vunpack.c.h.b16 %v1385
    %v2918 = vunpack.c.l.b16 %v1386
    %v2919 = vunpack.c.h.b16 %v1386
    %v2920 = vunpack.c.l.b16 %v1387
    %v2921 = vunpack.c.h.b16 %v1387
    %v2922 = vunpack.c.l.b16 %v1388
    %v2923 = vunpack.c.h.b16 %v1388
    %v2924 = vunpack.c.l.b16 %v1389
    %v2925 = vunpack.c.h.b16 %v1389
    %v2926 = vunpack.c.l.b16 %v1390
    %v2927 = vunpack.c.h.b16 %v1390
    %v2928 = vunpack.c.l.b16 %v1391
    %v2929 = vunpack.c.h.b16 %v1391
    %v2930 = vunpack.c.l.b16 %v1392
    %v2931 = vunpack.c.h.b16 %v1392
    %v2932 = vunpack.c.l.b16 %v1393
    %v2933 = vunpack.c.h.b16 %v1393
    %v2934 = vunpack.c.l.b16 %v1394
    %v2935 = vunpack.c.h.b16 %v1394
    %v2936 = vunpack.c.l.b16 %v1395
    %v2937 = vunpack.c.h.b16 %v1395
    %v2938 = vunpack.c.l.b16 %v1396
    %v2939 = vunpack.c.h.b16 %v1396
    %v2940 = vunpack.c.l.b16 %v1397
    %v2941 = vunpack.c.h.b16 %v1397
    %v2942 = vunpack.c.l.b16 %v1398
    %v2943 = vunpack.c.h.b16 %v1398
    %v2944 = vunpack.c.l.b16 %v1399
    %v2945 = vunpack.c.h.b16 %v1399
    %v2946 = vunpack.c.l.b16 %v1400
    %v2947 = vunpack.c.h.b16 %v1400
    %v2948 = vunpack.c.l.b16 %v1401
    %v2949 = vunpack.c.h.b16 %v1401
    %v2950 = vunpack.c.l.b16 %v1402
    %v2951 = vunpack.c.h.b16 %v1402
    %v2952 = vunpack.c.l.b16 %v1403
    %v2953 = vunpack.c.h.b16 %v1403
    %v2954 = vunpack.c.l.b16 %v1404
    %v2955 = vunpack.c.h.b16 %v1404
    %v2956 = vunpack.c.l.b16 %v1405
    %v2957 = vunpack.c.h.b16 %v1405
    %v2958 = vunpack.c.l.b16 %v1406
    %v2959 = vunpack.c.h.b16 %v1406
    %v2960 = vunpack.c.l.b16 %v1407
    %v2961 = vunpack.c.h.b16 %v1407
    %v2962 = vunpack.c.l.b16 %v1408
    %v2963 = vunpack.c.h.b16 %v1408
    %v2964 = vunpack.c.l.b16 %v1409
    %v2965 = vunpack.c.h.b16 %v1409
    %v2966 = vunpack.c.l.b16 %v1410
    %v2967 = vunpack.c.h.b16 %v1410
    %v2968 = vunpack.c.l.b16 %v1411
    %v2969 = vunpack.c.h.b16 %v1411
    %v2970 = vunpack.c.l.b16 %v1412
    %v2971 = vunpack.c.h.b16 %v1412
    %v2972 = vunpack.c.l.b16 %v1413
    %v2973 = vunpack.c.h.b16 %v1413
    %v2974 = vunpack.c.l.b16 %v1414
    %v2975 = vunpack.c.h.b16 %v1414
    %v2976 = vunpack.c.l.b16 %v1415
    %v2977 = vunpack.c.h.b16 %v1415
    %v2978 = vunpack.c.l.b16 %v1416
    %v2979 = vunpack.c.h.b16 %v1416
    %v2980 = vunpack.c.l.b16 %v1417
    %v2981 = vunpack.c.h.b16 %v1417
    %v2982 = vunpack.c.l.b16 %v1418
    %v2983 = vunpack.c.h.b16 %v1418
    %v2984 = vunpack.c.l.b16 %v1419
    %v2985 = vunpack.c.h.b16 %v1419
    %v2986 = vunpack.c.l.b16 %v1420
    %v2987 = vunpack.c.h.b16 %v1420
    %v2988 = vunpack.c.l.b16 %v1421
    %v2989 = vunpack.c.h.b16 %v1421
    %v2990 = vunpack.c.l.b16 %v1422
    %v2991 = vunpack.c.h.b16 %v1422
    %v2992 = vunpack.c.l.b16 %v1423
    %v2993 = vunpack.c.h.b16 %v1423
    %v2994 = vunpack.c.l.b16 %v1424
    %v2995 = vunpack.c.h.b16 %v1424
    %v2996 = vunpack.c.l.b16 %v1425
    %v2997 = vunpack.c.h.b16 %v1425
    %v2998 = vunpack.c.l.b16 %v1426
    %v2999 = vunpack.c.h.b16 %v1426
    %v3000 = vunpack.c.l.b16 %v1427
    %v3001 = vunpack.c.h.b16 %v1427
    %v3002 = vunpack.c.l.b16 %v1428
    %v3003 = vunpack.c.h.b16 %v1428
    %v3004 = vunpack.c.l.b16 %v1429
    %v3005 = vunpack.c.h.b16 %v1429
    %v3006 = vunpack.c.l.b16 %v1430
    %v3007 = vunpack.c.h.b16 %v1430
    %v3008 = vunpack.c.l.b16 %v1431
    %v3009 = vunpack.c.h.b16 %v1431
    %v3010 = vpack.c.b16 %v1994, %v1986
    %v3011 = vpack.c.b16 %v1995, %v1987
    %v3012 = vpack.c.b16 %v1996, %v1988
    %v3013 = vpack.c.b16 %v1997, %v1989
    %v3014 = vpack.c.b16 %v1998, %v1990
    %v3015 = vpack.c.b16 %v1999, %v1991
    %v3016 = vpack.c.b16 %v2000, %v1992
    %v3017 = vpack.c.b16 %v2001, %v1993
    %v3018 = vpack.c.b16 %v2010, %v2002
    %v3019 = vpack.c.b16 %v2011, %v2003
    %v3020 = vpack.c.b16 %v2012, %v2004
    %v3021 = vpack.c.b16 %v2013, %v2005
    %v3022 = vpack.c.b16 %v2014, %v2006
    %v3023 = vpack.c.b16 %v2015, %v2007
    %v3024 = vpack.c.b16 %v2016, %v2008
    %v3025 = vpack.c.b16 %v2017, %v2009
    %v3026 = vpack.c.b16 %v2026, %v2018
    %v3027 = vpack.c.b16 %v2027, %v2019
    %v3028 = vpack.c.b16 %v2028, %v2020
    %v3029 = vpack.c.b16 %v2029, %v2021
    %v3030 = vpack.c.b16 %v2030, %v2022
    %v3031 = vpack.c.b16 %v2031, %v2023
    %v3032 = vpack.c.b16 %v2032, %v2024
    %v3033 = vpack.c.b16 %v2033, %v2025
    %v3034 = vpack.c.b16 %v2042, %v2034
    %v3035 = vpack.c.b16 %v2043, %v2035
    %v3036 = vpack.c.b16 %v2044, %v2036
    %v3037 = vpack.c.b16 %v2045, %v2037
    %v3038 = vpack.c.b16 %v2046, %v2038
    %v3039 = vpack.c.b16 %v2047, %v2039
    %v3040 = vpack.c.b16 %v2048, %v2040
    %v3041 = vpack.c.b16 %v2049, %v2041
    %v3042 = vpack.c.b16 %v2058, %v2050
    %v3043 = vpack.c.b16 %v2059, %v2051
    %v3044 = vpack.c.b16 %v2060, %v2052
    %v3045 = vpack.c.b16 %v2061, %v2053
    %v3046 = vpack.c.b16 %v2062, %v2054
    %v3047 = vpack.c.b16 %v2063, %v2055
    %v3048 = vpack.c.b16 %v2064, %v2056
    %v3049 = vpack.c.b16 %v2065, %v2057
    %v3050 = vpack.c.b16 %v2074, %v2066
    %v3051 = vpack.c.b16 %v2075, %v2067
    %v3052 = vpack.c.b16 %v2076, %v2068
    %v3053 = vpack.c.b16 %v2077, %v2069
    %v3054 = vpack.c.b16 %v2078, %v2070
    %v3055 = vpack.c.b16 %v2079, %v2071
    %v3056 = vpack.c.b16 %v2080, %v2072
    %v3057 = vpack.c.b16 %v2081, %v2073
    %v3058 = vpack.c.b16 %v2090, %v2082
    %v3059 = vpack.c.b16 %v2091, %v2083
    %v3060 = vpack.c.b16 %v2092, %v2084
    %v3061 = vpack.c.b16 %v2093, %v2085
    %v3062 = vpack.c.b16 %v2094, %v2086
    %v3063 = vpack.c.b16 %v2095, %v2087
    %v3064 = vpack.c.b16 %v2096, %v2088
    %v3065 = vpack.c.b16 %v2097, %v2089
    %v3066 = vpack.c.b16 %v2106, %v2098
    %v3067 = vpack.c.b16 %v2107, %v2099
    %v3068 = vpack.c.b16 %v2108, %v2100
    %v3069 = vpack.c.b16 %v2109, %v2101
    %v3070 = vpack.c.b16 %v2110, %v2102
    %v3071 = vpack.c.b16 %v2111, %v2103
    %v3072 = vpack.c.b16 %v2112, %v2104
    %v3073 = vpack.c.b16 %v2113, %v2105
    %v3074 = vpack.c.b16 %v2122, %v2114
    %v3075 = vpack.c.b16 %v2123, %v2115
    %v3076 = vpack.c.b16 %v2124, %v2116
    %v3077 = vpack.c.b16 %v2125, %v2117
    %v3078 = vpack.c.b16 %v2126, %v2118
    %v3079 = vpack.c.b16 %v2127, %v2119
    %v3080 = vpack.c.b16 %v2128, %v2120
    %v3081 = vpack.c.b16 %v2129, %v2121
    %v3082 = vpack.c.b16 %v2138, %v2130
    %v3083 = vpack.c.b16 %v2139, %v2131
    %v3084 = vpack.c.b16 %v2140, %v2132
    %v3085 = vpack.c.b16 %v2141, %v2133
    %v3086 = vpack.c.b16 %v2142, %v2134
    %v3087 = vpack.c.b16 %v2143, %v2135
    %v3088 = vpack.c.b16 %v2144, %v2136
    %v3089 = vpack.c.b16 %v2145, %v2137
    %v3090 = vpack.c.b16 %v2154, %v2146
    %v3091 = vpack.c.b16 %v2155, %v2147
    %v3092 = vpack.c.b16 %v2156, %v2148
    %v3093 = vpack.c.b16 %v2157, %v2149
    %v3094 = vpack.c.b16 %v2158, %v2150
    %v3095 = vpack.c.b16 %v2159, %v2151
    %v3096 = vpack.c.b16 %v2160, %v2152
    %v3097 = vpack.c.b16 %v2161, %v2153
    %v3098 = vpack.c.b16 %v2170, %v2162
    %v3099 = vpack.c.b16 %v2171, %v2163
    %v3100 = vpack.c.b16 %v2172, %v2164
    %v3101 = vpack.c.b16 %v2173, %v2165
    %v3102 = vpack.c.b16 %v2174, %v2166
    %v3103 = vpack.c.b16 %v2175, %v2167
    %v3104 = vpack.c.b16 %v2176, %v2168
    %v3105 = vpack.c.b16 %v2177, %v2169
    %v3106 = vpack.c.b16 %v2186, %v2178
    %v3107 = vpack.c.b16 %v2187, %v2179
    %v3108 = vpack.c.b16 %v2188, %v2180
    %v3109 = vpack.c.b16 %v2189, %v2181
    %v3110 = vpack.c.b16 %v2190, %v2182
    %v3111 = vpack.c.b16 %v2191, %v2183
    %v3112 = vpack.c.b16 %v2192, %v2184
    %v3113 = vpack.c.b16 %v2193, %v2185
    %v3114 = vpack.c.b16 %v2202, %v2194
    %v3115 = vpack.c.b16 %v2203, %v2195
    %v3116 = vpack.c.b16 %v2204, %v2196
    %v3117 = vpack.c.b16 %v2205, %v2197
    %v3118 = vpack.c.b16 %v2206, %v2198
    %v3119 = vpack.c.b16 %v2207, %v2199
    %v3120 = vpack.c.b16 %v2208, %v2200
    %v3121 = vpack.c.b16 %v2209, %v2201
    %v3122 = vpack.c.b16 %v2218, %v2210
    %v3123 = vpack.c.b16 %v2219, %v2211
    %v3124 = vpack.c.b16 %v2220, %v2212
    %v3125 = vpack.c.b16 %v2221, %v2213
    %v3126 = vpack.c.b16 %v2222, %v2214
    %v3127 = vpack.c.b16 %v2223, %v2215
    %v3128 = vpack.c.b16 %v2224, %v2216
    %v3129 = vpack.c.b16 %v2225, %v2217
    %v3130 = vpack.c.b16 %v2234, %v2226
    %v3131 = vpack.c.b16 %v2235, %v2227
    %v3132 = vpack.c.b16 %v2236, %v2228
    %v3133 = vpack.c.b16 %v2237, %v2229
    %v3134 = vpack.c.b16 %v2238, %v2230
    %v3135 = vpack.c.b16 %v2239, %v2231
    %v3136 = vpack.c.b16 %v2240, %v2232
    %v3137 = vpack.c.b16 %v2241, %v2233
    %v3138 = vpack.c.b16 %v2250, %v2242
    %v3139 = vpack.c.b16 %v2251, %v2243
    %v3140 = vpack.c.b16 %v2252, %v2244
    %v3141 = vpack.c.b16 %v2253, %v2245
    %v3142 = vpack.c.b16 %v2254, %v2246
    %v3143 = vpack.c.b16 %v2255, %v2247
    %v3144 = vpack.c.b16 %v2256, %v2248
    %v3145 = vpack.c.b16 %v2257, %v2249
    %v3146 = vpack.c.b16 %v2266, %v2258
    %v3147 = vpack.c.b16 %v2267, %v2259
    %v3148 = vpack.c.b16 %v2268, %v2260
    %v3149 = vpack.c.b16 %v2269, %v2261
    %v3150 = vpack.c.b16 %v2270, %v2262
    %v3151 = vpack.c.b16 %v2271, %v2263
    %v3152 = vpack.c.b16 %v2272, %v2264
    %v3153 = vpack.c.b16 %v2273, %v2265
    %v3154 = vpack.c.b16 %v2282, %v2274
    %v3155 = vpack.c.b16 %v2283, %v2275
    %v3156 = vpack.c.b16 %v2284, %v2276
    %v3157 = vpack.c.b16 %v2285, %v2277
    %v3158 = vpack.c.b16 %v2286, %v2278
    %v3159 = vpack.c.b16 %v2287, %v2279
    %v3160 = vpack.c.b16 %v2288, %v2280
    %v3161 = vpack.c.b16 %v2289, %v2281
    %v3162 = vpack.c.b16 %v2298, %v2290
    %v3163 = vpack.c.b16 %v2299, %v2291
    %v3164 = vpack.c.b16 %v2300, %v2292
    %v3165 = vpack.c.b16 %v2301, %v2293
    %v3166 = vpack.c.b16 %v2302, %v2294
    %v3167 = vpack.c.b16 %v2303, %v2295
    %v3168 = vpack.c.b16 %v2304, %v2296
    %v3169 = vpack.c.b16 %v2305, %v2297
    %v3170 = vpack.c.b16 %v2314, %v2306
    %v3171 = vpack.c.b16 %v2315, %v2307
    %v3172 = vpack.c.b16 %v2316, %v2308
    %v3173 = vpack.c.b16 %v2317, %v2309
    %v3174 = vpack.c.b16 %v2318, %v2310
    %v3175 = vpack.c.b16 %v2319, %v2311
    %v3176 = vpack.c.b16 %v2320, %v2312
    %v3177 = vpack.c.b16 %v2321, %v2313
    %v3178 = vpack.c.b16 %v2330, %v2322
    %v3179 = vpack.c.b16 %v2331, %v2323
    %v3180 = vpack.c.b16 %v2332, %v2324
    %v3181 = vpack.c.b16 %v2333, %v2325
    %v3182 = vpack.c.b16 %v2334, %v2326
    %v3183 = vpack.c.b16 %v2335, %v2327
    %v3184 = vpack.c.b16 %v2336, %v2328
    %v3185 = vpack.c.b16 %v2337, %v2329
    %v3186 = vpack.c.b16 %v2346, %v2338
    %v3187 = vpack.c.b16 %v2347, %v2339
    %v3188 = vpack.c.b16 %v2348, %v2340
    %v3189 = vpack.c.b16 %v2349, %v2341
    %v3190 = vpack.c.b16 %v2350, %v2342
    %v3191 = vpack.c.b16 %v2351, %v2343
    %v3192 = vpack.c.b16 %v2352, %v2344
    %v3193 = vpack.c.b16 %v2353, %v2345
    %v3194 = vpack.c.b16 %v2362, %v2354
    %v3195 = vpack.c.b16 %v2363, %v2355
    %v3196 = vpack.c.b16 %v2364, %v2356
    %v3197 = vpack.c.b16 %v2365, %v2357
    %v3198 = vpack.c.b16 %v2366, %v2358
    %v3199 = vpack.c.b16 %v2367, %v2359
    %v3200 = vpack.c.b16 %v2368, %v2360
    %v3201 = vpack.c.b16 %v2369, %v2361
    %v3202 = vpack.c.b16 %v2378, %v2370
    %v3203 = vpack.c.b16 %v2379, %v2371
    %v3204 = vpack.c.b16 %v2380, %v2372
    %v3205 = vpack.c.b16 %v2381, %v2373
    %v3206 = vpack.c.b16 %v2382, %v2374
    %v3207 = vpack.c.b16 %v2383, %v2375
    %v3208 = vpack.c.b16 %v2384, %v2376
    %v3209 = vpack.c.b16 %v2385, %v2377
    %v3210 = vpack.c.b16 %v2394, %v2386
    %v3211 = vpack.c.b16 %v2395, %v2387
    %v3212 = vpack.c.b16 %v2396, %v2388
    %v3213 = vpack.c.b16 %v2397, %v2389
    %v3214 = vpack.c.b16 %v2398, %v2390
    %v3215 = vpack.c.b16 %v2399, %v2391
    %v3216 = vpack.c.b16 %v2400, %v2392
    %v3217 = vpack.c.b16 %v2401, %v2393
    %v3218 = vpack.c.b16 %v2410, %v2402
    %v3219 = vpack.c.b16 %v2411, %v2403
    %v3220 = vpack.c.b16 %v2412, %v2404
    %v3221 = vpack.c.b16 %v2413, %v2405
    %v3222 = vpack.c.b16 %v2414, %v2406
    %v3223 = vpack.c.b16 %v2415, %v2407
    %v3224 = vpack.c.b16 %v2416, %v2408
    %v3225 = vpack.c.b16 %v2417, %v2409
    %v3226 = vpack.c.b16 %v2426, %v2418
    %v3227 = vpack.c.b16 %v2427, %v2419
    %v3228 = vpack.c.b16 %v2428, %v2420
    %v3229 = vpack.c.b16 %v2429, %v2421
    %v3230 = vpack.c.b16 %v2430, %v2422
    %v3231 = vpack.c.b16 %v2431, %v2423
    %v3232 = vpack.c.b16 %v2432, %v2424
    %v3233 = vpack.c.b16 %v2433, %v2425
    %v3234 = vpack.c.b16 %v2442, %v2434
    %v3235 = vpack.c.b16 %v2443, %v2435
    %v3236 = vpack.c.b16 %v2444, %v2436
    %v3237 = vpack.c.b16 %v2445, %v2437
    %v3238 = vpack.c.b16 %v2446, %v2438
    %v3239 = vpack.c.b16 %v2447, %v2439
    %v3240 = vpack.c.b16 %v2448, %v2440
    %v3241 = vpack.c.b16 %v2449, %v2441
    %v3242 = vpack.c.b16 %v2458, %v2450
    %v3243 = vpack.c.b16 %v2459, %v2451
    %v3244 = vpack.c.b16 %v2460, %v2452
    %v3245 = vpack.c.b16 %v2461, %v2453
    %v3246 = vpack.c.b16 %v2462, %v2454
    %v3247 = vpack.c.b16 %v2463, %v2455
    %v3248 = vpack.c.b16 %v2464, %v2456
    %v3249 = vpack.c.b16 %v2465, %v2457
    %v3250 = vpack.c.b16 %v2474, %v2466
    %v3251 = vpack.c.b16 %v2475, %v2467
    %v3252 = vpack.c.b16 %v2476, %v2468
    %v3253 = vpack.c.b16 %v2477, %v2469
    %v3254 = vpack.c.b16 %v2478, %v2470
    %v3255 = vpack.c.b16 %v2479, %v2471
    %v3256 = vpack.c.b16 %v2480, %v2472
    %v3257 = vpack.c.b16 %v2481, %v2473
    %v3258 = vpack.c.b16 %v2490, %v2482
    %v3259 = vpack.c.b16 %v2491, %v2483
    %v3260 = vpack.c.b16 %v2492, %v2484
    %v3261 = vpack.c.b16 %v2493, %v2485
    %v3262 = vpack.c.b16 %v2494, %v2486
    %v3263 = vpack.c.b16 %v2495, %v2487
    %v3264 = vpack.c.b16 %v2496, %v2488
    %v3265 = vpack.c.b16 %v2497, %v2489
    %v3266 = vpack.c.b16 %v2506, %v2498
    %v3267 = vpack.c.b16 %v2507, %v2499
    %v3268 = vpack.c.b16 %v2508, %v2500
    %v3269 = vpack.c.b16 %v2509, %v2501
    %v3270 = vpack.c.b16 %v2510, %v2502
    %v3271 = vpack.c.b16 %v2511, %v2503
    %v3272 = vpack.c.b16 %v2512, %v2504
    %v3273 = vpack.c.b16 %v2513, %v2505
    %v3274 = vpack.c.b16 %v2522, %v2514
    %v3275 = vpack.c.b16 %v2523, %v2515
    %v3276 = vpack.c.b16 %v2524, %v2516
    %v3277 = vpack.c.b16 %v2525, %v2517
    %v3278 = vpack.c.b16 %v2526, %v2518
    %v3279 = vpack.c.b16 %v2527, %v2519
    %v3280 = vpack.c.b16 %v2528, %v2520
    %v3281 = vpack.c.b16 %v2529, %v2521
    %v3282 = vpack.c.b16 %v2538, %v2530
    %v3283 = vpack.c.b16 %v2539, %v2531
    %v3284 = vpack.c.b16 %v2540, %v2532
    %v3285 = vpack.c.b16 %v2541, %v2533
    %v3286 = vpack.c.b16 %v2542, %v2534
    %v3287 = vpack.c.b16 %v2543, %v2535
    %v3288 = vpack.c.b16 %v2544, %v2536
    %v3289 = vpack.c.b16 %v2545, %v2537
    %v3290 = vpack.c.b16 %v2554, %v2546
    %v3291 = vpack.c.b16 %v2555, %v2547
    %v3292 = vpack.c.b16 %v2556, %v2548
    %v3293 = vpack.c.b16 %v2557, %v2549
    %v3294 = vpack.c.b16 %v2558, %v2550
    %v3295 = vpack.c.b16 %v2559, %v2551
    %v3296 = vpack.c.b16 %v2560, %v2552
    %v3297 = vpack.c.b16 %v2561, %v2553
    %v3298 = vpack.c.b16 %v2570, %v2562
    %v3299 = vpack.c.b16 %v2571, %v2563
    %v3300 = vpack.c.b16 %v2572, %v2564
    %v3301 = vpack.c.b16 %v2573, %v2565
    %v3302 = vpack.c.b16 %v2574, %v2566
    %v3303 = vpack.c.b16 %v2575, %v2567
    %v3304 = vpack.c.b16 %v2576, %v2568
    %v3305 = vpack.c.b16 %v2577, %v2569
    %v3306 = vpack.c.b16 %v2586, %v2578
    %v3307 = vpack.c.b16 %v2587, %v2579
    %v3308 = vpack.c.b16 %v2588, %v2580
    %v3309 = vpack.c.b16 %v2589, %v2581
    %v3310 = vpack.c.b16 %v2590, %v2582
    %v3311 = vpack.c.b16 %v2591, %v2583
    %v3312 = vpack.c.b16 %v2592, %v2584
    %v3313 = vpack.c.b16 %v2593, %v2585
    %v3314 = vpack.c.b16 %v2602, %v2594
    %v3315 = vpack.c.b16 %v2603, %v2595
    %v3316 = vpack.c.b16 %v2604, %v2596
    %v3317 = vpack.c.b16 %v2605, %v2597
    %v3318 = vpack.c.b16 %v2606, %v2598
    %v3319 = vpack.c.b16 %v2607, %v2599
    %v3320 = vpack.c.b16 %v2608, %v2600
    %v3321 = vpack.c.b16 %v2609, %v2601
    %v3322 = vpack.c.b16 %v2618, %v2610
    %v3323 = vpack.c.b16 %v2619, %v2611
    %v3324 = vpack.c.b16 %v2620, %v2612
    %v3325 = vpack.c.b16 %v2621, %v2613
    %v3326 = vpack.c.b16 %v2622, %v2614
    %v3327 = vpack.c.b16 %v2623, %v2615
    %v3328 = vpack.c.b16 %v2624, %v2616
    %v3329 = vpack.c.b16 %v2625, %v2617
    %v3330 = vpack.c.b16 %v2634, %v2626
    %v3331 = vpack.c.b16 %v2635, %v2627
    %v3332 = vpack.c.b16 %v2636, %v2628
    %v3333 = vpack.c.b16 %v2637, %v2629
    %v3334 = vpack.c.b16 %v2638, %v2630
    %v3335 = vpack.c.b16 %v2639, %v2631
    %v3336 = vpack.c.b16 %v2640, %v2632
    %v3337 = vpack.c.b16 %v2641, %v2633
    %v3338 = vpack.c.b16 %v2650, %v2642
    %v3339 = vpack.c.b16 %v2651, %v2643
    %v3340 = vpack.c.b16 %v2652, %v2644
    %v3341 = vpack.c.b16 %v2653, %v2645
    %v3342 = vpack.c.b16 %v2654, %v2646
    %v3343 = vpack.c.b16 %v2655, %v2647
    %v3344 = vpack.c.b16 %v2656, %v2648
    %v3345 = vpack.c.b16 %v2657, %v2649
    %v3346 = vpack.c.b16 %v2666, %v2658
    %v3347 = vpack.c.b16 %v2667, %v2659
    %v3348 = vpack.c.b16 %v2668, %v2660
    %v3349 = vpack.c.b16 %v2669, %v2661
    %v3350 = vpack.c.b16 %v2670, %v2662
    %v3351 = vpack.c.b16 %v2671, %v2663
    %v3352 = vpack.c.b16 %v2672, %v2664
    %v3353 = vpack.c.b16 %v2673, %v2665
    %v3354 = vpack.c.b16 %v2682, %v2674
    %v3355 = vpack.c.b16 %v2683, %v2675
    %v3356 = vpack.c.b16 %v2684, %v2676
    %v3357 = vpack.c.b16 %v2685, %v2677
    %v3358 = vpack.c.b16 %v2686, %v2678
    %v3359 = vpack.c.b16 %v2687, %v2679
    %v3360 = vpack.c.b16 %v2688, %v2680
    %v3361 = vpack.c.b16 %v2689, %v2681
    %v3362 = vpack.c.b16 %v2698, %v2690
    %v3363 = vpack.c.b16 %v2699, %v2691
    %v3364 = vpack.c.b16 %v2700, %v2692
    %v3365 = vpack.c.b16 %v2701, %v2693
    %v3366 = vpack.c.b16 %v2702, %v2694
    %v3367 = vpack.c.b16 %v2703, %v2695
    %v3368 = vpack.c.b16 %v2704, %v2696
    %v3369 = vpack.c.b16 %v2705, %v2697
    %v3370 = vpack.c.b16 %v2714, %v2706
    %v3371 = vpack.c.b16 %v2715, %v2707
    %v3372 = vpack.c.b16 %v2716, %v2708
    %v3373 = vpack.c.b16 %v2717, %v2709
    %v3374 = vpack.c.b16 %v2718, %v2710
    %v3375 = vpack.c.b16 %v2719, %v2711
    %v3376 = vpack.c.b16 %v2720, %v2712
    %v3377 = vpack.c.b16 %v2721, %v2713
    %v3378 = vpack.c.b16 %v2730, %v2722
    %v3379 = vpack.c.b16 %v2731, %v2723
    %v3380 = vpack.c.b16 %v2732, %v2724
    %v3381 = vpack.c.b16 %v2733, %v2725
    %v3382 = vpack.c.b16 %v2734, %v2726
    %v3383 = vpack.c.b16 %v2735, %v2727
    %v3384 = vpack.c.b16 %v2736, %v2728
    %v3385 = vpack.c.b16 %v2737, %v2729
    %v3386 = vpack.c.b16 %v2746, %v2738
    %v3387 = vpack.c.b16 %v2747, %v2739
    %v3388 = vpack.c.b16 %v2748, %v2740
    %v3389 = vpack.c.b16 %v2749, %v2741
    %v3390 = vpack.c.b16 %v2750, %v2742
    %v3391 = vpack.c.b16 %v2751, %v2743
    %v3392 = vpack.c.b16 %v2752, %v2744
    %v3393 = vpack.c.b16 %v2753, %v2745
    %v3394 = vpack.c.b16 %v2762, %v2754
    %v3395 = vpack.c.b16 %v2763, %v2755
    %v3396 = vpack.c.b16 %v2764, %v2756
    %v3397 = vpack.c.b16 %v2765, %v2757
    %v3398 = vpack.c.b16 %v2766, %v2758
    %v3399 = vpack.c.b16 %v2767, %v2759
    %v3400 = vpack.c.b16 %v2768, %v2760
    %v3401 = vpack.c.b16 %v2769, %v2761
    %v3402 = vpack.c.b16 %v2778, %v2770
    %v3403 = vpack.c.b16 %v2779, %v2771
    %v3404 = vpack.c.b16 %v2780, %v2772
    %v3405 = vpack.c.b16 %v2781, %v2773
    %v3406 = vpack.c.b16 %v2782, %v2774
    %v3407 = vpack.c.b16 %v2783, %v2775
    %v3408 = vpack.c.b16 %v2784, %v2776
    %v3409 = vpack.c.b16 %v2785, %v2777
    %v3410 = vpack.c.b16 %v2794, %v2786
    %v3411 = vpack.c.b16 %v2795, %v2787
    %v3412 = vpack.c.b16 %v2796, %v2788
    %v3413 = vpack.c.b16 %v2797, %v2789
    %v3414 = vpack.c.b16 %v2798, %v2790
    %v3415 = vpack.c.b16 %v2799, %v2791
    %v3416 = vpack.c.b16 %v2800, %v2792
    %v3417 = vpack.c.b16 %v2801, %v2793
    %v3418 = vpack.c.b16 %v2810, %v2802
    %v3419 = vpack.c.b16 %v2811, %v2803
    %v3420 = vpack.c.b16 %v2812, %v2804
    %v3421 = vpack.c.b16 %v2813, %v2805
    %v3422 = vpack.c.b16 %v2814, %v2806
    %v3423 = vpack.c.b16 %v2815, %v2807
    %v3424 = vpack.c.b16 %v2816, %v2808
    %v3425 = vpack.c.b16 %v2817, %v2809
    %v3426 = vpack.c.b16 %v2826, %v2818
    %v3427 = vpack.c.b16 %v2827, %v2819
    %v3428 = vpack.c.b16 %v2828, %v2820
    %v3429 = vpack.c.b16 %v2829, %v2821
    %v3430 = vpack.c.b16 %v2830, %v2822
    %v3431 = vpack.c.b16 %v2831, %v2823
    %v3432 = vpack.c.b16 %v2832, %v2824
    %v3433 = vpack.c.b16 %v2833, %v2825
    %v3434 = vpack.c.b16 %v2842, %v2834
    %v3435 = vpack.c.b16 %v2843, %v2835
    %v3436 = vpack.c.b16 %v2844, %v2836
    %v3437 = vpack.c.b16 %v2845, %v2837
    %v3438 = vpack.c.b16 %v2846, %v2838
    %v3439 = vpack.c.b16 %v2847, %v2839
    %v3440 = vpack.c.b16 %v2848, %v2840
    %v3441 = vpack.c.b16 %v2849, %v2841
    %v3442 = vpack.c.b16 %v2858, %v2850
    %v3443 = vpack.c.b16 %v2859, %v2851
    %v3444 = vpack.c.b16 %v2860, %v2852
    %v3445 = vpack.c.b16 %v2861, %v2853
    %v3446 = vpack.c.b16 %v2862, %v2854
    %v3447 = vpack.c.b16 %v2863, %v2855
    %v3448 = vpack.c.b16 %v2864, %v2856
    %v3449 = vpack.c.b16 %v2865, %v2857
    %v3450 = vpack.c.b16 %v2874, %v2866
    %v3451 = vpack.c.b16 %v2875, %v2867
    %v3452 = vpack.c.b16 %v2876, %v2868
    %v3453 = vpack.c.b16 %v2877, %v2869
    %v3454 = vpack.c.b16 %v2878, %v2870
    %v3455 = vpack.c.b16 %v2879, %v2871
    %v3456 = vpack.c.b16 %v2880, %v2872
    %v3457 = vpack.c.b16 %v2881, %v2873
    %v3458 = vpack.c.b16 %v2890, %v2882
    %v3459 = vpack.c.b16 %v2891, %v2883
    %v3460 = vpack.c.b16 %v2892, %v2884
    %v3461 = vpack.c.b16 %v2893, %v2885
    %v3462 = vpack.c.b16 %v2894, %v2886
    %v3463 = vpack.c.b16 %v2895, %v2887
    %v3464 = vpack.c.b16 %v2896, %v2888
    %v3465 = vpack.c.b16 %v2897, %v2889
    %v3466 = vpack.c.b16 %v2906, %v2898
    %v3467 = vpack.c.b16 %v2907, %v2899
    %v3468 = vpack.c.b16 %v2908, %v2900
    %v3469 = vpack.c.b16 %v2909, %v2901
    %v3470 = vpack.c.b16 %v2910, %v2902
    %v3471 = vpack.c.b16 %v2911, %v2903
    %v3472 = vpack.c.b16 %v2912, %v2904
    %v3473 = vpack.c.b16 %v2913, %v2905
    %v3474 = vpack.c.b16 %v2922, %v2914
    %v3475 = vpack.c.b16 %v2923, %v2915
    %v3476 = vpack.c.b16 %v2924, %v2916
    %v3477 = vpack.c.b16 %v2925, %v2917
    %v3478 = vpack.c.b16 %v2926, %v2918
    %v3479 = vpack.c.b16 %v2927, %v2919
    %v3480 = vpack.c.b16 %v2928, %v2920
    %v3481 = vpack.c.b16 %v2929, %v2921
    %v3482 = vpack.c.b16 %v2938, %v2930
    %v3483 = vpack.c.b16 %v2939, %v2931
    %v3484 = vpack.c.b16 %v2940, %v2932
    %v3485 = vpack.c.b16 %v2941, %v2933
    %v3486 = vpack.c.b16 %v2942, %v2934
    %v3487 = vpack.c.b16 %v2943, %v2935
    %v3488 = vpack.c.b16 %v2944, %v2936
    %v3489 = vpack.c.b16 %v2945, %v2937
    %v3490 = vpack.c.b16 %v2954, %v2946
    %v3491 = vpack.c.b16 %v2955, %v2947
    %v3492 = vpack.c.b16 %v2956, %v2948
    %v3493 = vpack.c.b16 %v2957, %v2949
    %v3494 = vpack.c.b16 %v2958, %v2950
    %v3495 = vpack.c.b16 %v2959, %v2951
    %v3496 = vpack.c.b16 %v2960, %v2952
    %v3497 = vpack.c.b16 %v2961, %v2953
    %v3498 = vpack.c.b16 %v2970, %v2962
    %v3499 = vpack.c.b16 %v2971, %v2963
    %v3500 = vpack.c.b16 %v2972, %v2964
    %v3501 = vpack.c.b16 %v2973, %v2965
    %v3502 = vpack.c.b16 %v2974, %v2966
    %v3503 = vpack.c.b16 %v2975, %v2967
    %v3504 = vpack.c.b16 %v2976, %v2968
    %v3505 = vpack.c.b16 %v2977, %v2969
    %v3506 = vpack.c.b16 %v2986, %v2978
    %v3507 = vpack.c.b16 %v2987, %v2979
    %v3508 = vpack.c.b16 %v2988, %v2980
    %v3509 = vpack.c.b16 %v2989, %v2981
    %v3510 = vpack.c.b16 %v2990, %v2982
    %v3511 = vpack.c.b16 %v2991, %v2983
    %v3512 = vpack.c.b16 %v2992, %v2984
    %v3513 = vpack.c.b16 %v2993, %v2985
    %v3514 = vpack.c.b16 %v3002, %v2994
    %v3515 = vpack.c.b16 %v3003, %v2995
    %v3516 = vpack.c.b16 %v3004, %v2996
    %v3517 = vpack.c.b16 %v3005, %v2997
    %v3518 = vpack.c.b16 %v3006, %v2998
    %v3519 = vpack.c.b16 %v3007, %v2999
    %v3520 = vpack.c.b16 %v3008, %v3000
    %v3521 = vpack.c.b16 %v3009, %v3001
    %4034 = vmatprep.subr.bf16.mxu0 %v3067
    %4035 = vmatpush1.bf16.msra.mxu0 %v3066
    %4036 = vmatprep.subr.bf16.mxu0 %v3059
    %4037 = vmatpush1.bf16.msra.mxu0 %v3058
    %4038 = vmatprep.subr.bf16.mxu0 %v3051
    %4039 = vmatpush1.bf16.msra.mxu0 %v3050
    %4040 = vmatprep.subr.bf16.mxu0 %v3043
    %4041 = vmatpush1.bf16.msra.mxu0 %v3042
    %4042 = vmatprep.subr.bf16.mxu0 %v3035
    %4043 = vmatpush1.bf16.msra.mxu0 %v3034
    %4044 = vmatprep.subr.bf16.mxu0 %v3027
    %4045 = vmatpush1.bf16.msra.mxu0 %v3026
    %4046 = vmatprep.subr.bf16.mxu0 %v3019
    %4047 = vmatpush1.bf16.msra.mxu0 %v3018
    %4048 = vmatprep.subr.bf16.mxu0 %v3011
    %4049 = vmatpush1.bf16.msra.mxu0 %v3010
    %4050 = vmatprep.subr.bf16.mxu0 %v3131
    %4051 = vmatpush2.bf16.msra.mxu0 %v3130
    %4052 = vmatprep.subr.bf16.mxu0 %v3123
    %4053 = vmatpush2.bf16.msra.mxu0 %v3122
    %4054 = vmatprep.subr.bf16.mxu0 %v3115
    %4055 = vmatpush2.bf16.msra.mxu0 %v3114
    %4056 = vmatprep.subr.bf16.mxu0 %v3107
    %4057 = vmatpush2.bf16.msra.mxu0 %v3106
    %4058 = vmatprep.subr.bf16.mxu0 %v3099
    %4059 = vmatpush2.bf16.msra.mxu0 %v3098
    %4060 = vmatprep.subr.bf16.mxu0 %v3091
    %4061 = vmatpush2.bf16.msra.mxu0 %v3090
    %4062 = vmatprep.subr.bf16.mxu0 %v3083
    %4063 = vmatpush2.bf16.msra.mxu0 %v3082
    %4064 = vmatprep.subr.bf16.mxu0 %v3075
    %4065 = vmatpush2.bf16.msra.mxu0 %v3074
    %4066 = vmatprep.mubr.bf16.mxu0 %v913
    %4067 = vmatmul.mubr.bf16.gmra.mxu0 %v912
    %v4068 = vpop.f32.mrf.mxu0
    %v4069 = vadd.f32 %v1437, %v4068
    %v4070 = vpop.f32.mrf.mxu0
    %v4071 = vadd.f32 %v1441, %v4070
    %v4072 = vpop.f32.mrf.mxu0
    %v4073 = vpop.f32.mrf.mxu0
    %4074 = vdwg.mxu0
    %4075 = vmatprep.subr.bf16.mxu0 %v3195
    %4076 = vmatpush1.bf16.msra.mxu0 %v3194
    %4077 = vmatprep.subr.bf16.mxu0 %v3187
    %4078 = vmatpush1.bf16.msra.mxu0 %v3186
    %4079 = vmatprep.subr.bf16.mxu0 %v3179
    %4080 = vmatpush1.bf16.msra.mxu0 %v3178
    %4081 = vmatprep.subr.bf16.mxu0 %v3171
    %4082 = vmatpush1.bf16.msra.mxu0 %v3170
    %4083 = vmatprep.subr.bf16.mxu0 %v3163
    %4084 = vmatpush1.bf16.msra.mxu0 %v3162
    %4085 = vmatprep.subr.bf16.mxu0 %v3155
    %4086 = vmatpush1.bf16.msra.mxu0 %v3154
    %4087 = vmatprep.subr.bf16.mxu0 %v3147
    %4088 = vmatpush1.bf16.msra.mxu0 %v3146
    %4089 = vmatprep.subr.bf16.mxu0 %v3139
    %4090 = vmatpush1.bf16.msra.mxu0 %v3138
    %4091 = vmatprep.subr.bf16.mxu0 %v3259
    %4092 = vmatpush2.bf16.msra.mxu0 %v3258
    %4093 = vmatprep.subr.bf16.mxu0 %v3251
    %4094 = vmatpush2.bf16.msra.mxu0 %v3250
    %4095 = vmatprep.subr.bf16.mxu0 %v3243
    %4096 = vmatpush2.bf16.msra.mxu0 %v3242
    %4097 = vmatprep.subr.bf16.mxu0 %v3235
    %4098 = vmatpush2.bf16.msra.mxu0 %v3234
    %4099 = vmatprep.subr.bf16.mxu0 %v3227
    %4100 = vmatpush2.bf16.msra.mxu0 %v3226
    %4101 = vmatprep.subr.bf16.mxu0 %v3219
    %4102 = vmatpush2.bf16.msra.mxu0 %v3218
    %4103 = vmatprep.subr.bf16.mxu0 %v3211
    %4104 = vmatpush2.bf16.msra.mxu0 %v3210
    %4105 = vmatprep.subr.bf16.mxu0 %v3203
    %4106 = vmatpush2.bf16.msra.mxu0 %v3202
    %4107 = vmatprep.mubr.bf16.mxu0 %v915
    %4108 = vmatmul.mubr.bf16.gmra.mxu0 %v914
    %v4109 = vpop.f32.mrf.mxu0
    %v4110 = vadd.f32 %v4069, %v4109
    %v4111 = vpop.f32.mrf.mxu0
    %v4112 = vadd.f32 %v4071, %v4111
    %v4113 = vpop.f32.mrf.mxu0
    %v4114 = vpop.f32.mrf.mxu0
    %4115 = vdwg.mxu0
    %4116 = vmatprep.subr.bf16.mxu0 %v3323
    %4117 = vmatpush1.bf16.msra.mxu0 %v3322
    %4118 = vmatprep.subr.bf16.mxu0 %v3315
    %4119 = vmatpush1.bf16.msra.mxu0 %v3314
    %4120 = vmatprep.subr.bf16.mxu0 %v3307
    %4121 = vmatpush1.bf16.msra.mxu0 %v3306
    %4122 = vmatprep.subr.bf16.mxu0 %v3299
    %4123 = vmatpush1.bf16.msra.mxu0 %v3298
    %4124 = vmatprep.subr.bf16.mxu0 %v3291
    %4125 = vmatpush1.bf16.msra.mxu0 %v3290
    %4126 = vmatprep.subr.bf16.mxu0 %v3283
    %4127 = vmatpush1.bf16.msra.mxu0 %v3282
    %4128 = vmatprep.subr.bf16.mxu0 %v3275
    %4129 = vmatpush1.bf16.msra.mxu0 %v3274
    %4130 = vmatprep.subr.bf16.mxu0 %v3267
    %4131 = vmatpush1.bf16.msra.mxu0 %v3266
    %4132 = vmatprep.subr.bf16.mxu0 %v3387
    %4133 = vmatpush2.bf16.msra.mxu0 %v3386
    %4134 = vmatprep.subr.bf16.mxu0 %v3379
    %4135 = vmatpush2.bf16.msra.mxu0 %v3378
    %4136 = vmatprep.subr.bf16.mxu0 %v3371
    %4137 = vmatpush2.bf16.msra.mxu0 %v3370
    %4138 = vmatprep.subr.bf16.mxu0 %v3363
    %4139 = vmatpush2.bf16.msra.mxu0 %v3362
    %4140 = vmatprep.subr.bf16.mxu0 %v3355
    %4141 = vmatpush2.bf16.msra.mxu0 %v3354
    %4142 = vmatprep.subr.bf16.mxu0 %v3347
    %4143 = vmatpush2.bf16.msra.mxu0 %v3346
    %4144 = vmatprep.subr.bf16.mxu0 %v3339
    %4145 = vmatpush2.bf16.msra.mxu0 %v3338
    %4146 = vmatprep.subr.bf16.mxu0 %v3331
    %4147 = vmatpush2.bf16.msra.mxu0 %v3330
    %4148 = vmatprep.mubr.bf16.mxu0 %v917
    %4149 = vmatmul.mubr.bf16.gmra.mxu0 %v916
    %v4150 = vpop.f32.mrf.mxu0
    %v4151 = vadd.f32 %v4110, %v4150
    %v4152 = vpop.f32.mrf.mxu0
    %v4153 = vadd.f32 %v4112, %v4152
    %v4154 = vpop.f32.mrf.mxu0
    %v4155 = vpop.f32.mrf.mxu0
    %4156 = vdwg.mxu0
    %4157 = vmatprep.subr.bf16.mxu0 %v3451
    %4158 = vmatpush1.bf16.msra.mxu0 %v3450
    %4159 = vmatprep.subr.bf16.mxu0 %v3443
    %4160 = vmatpush1.bf16.msra.mxu0 %v3442
    %4161 = vmatprep.subr.bf16.mxu0 %v3435
    %4162 = vmatpush1.bf16.msra.mxu0 %v3434
    %4163 = vmatprep.subr.bf16.mxu0 %v3427
    %4164 = vmatpush1.bf16.msra.mxu0 %v3426
    %4165 = vmatprep.subr.bf16.mxu0 %v3419
    %4166 = vmatpush1.bf16.msra.mxu0 %v3418
    %4167 = vmatprep.subr.bf16.mxu0 %v3411
    %4168 = vmatpush1.bf16.msra.mxu0 %v3410
    %4169 = vmatprep.subr.bf16.mxu0 %v3403
    %4170 = vmatpush1.bf16.msra.mxu0 %v3402
    %4171 = vmatprep.subr.bf16.mxu0 %v3395
    %4172 = vmatpush1.bf16.msra.mxu0 %v3394
    %4173 = vmatprep.subr.bf16.mxu0 %v3515
    %4174 = vmatpush2.bf16.msra.mxu0 %v3514
    %4175 = vmatprep.subr.bf16.mxu0 %v3507
    %4176 = vmatpush2.bf16.msra.mxu0 %v3506
    %4177 = vmatprep.subr.bf16.mxu0 %v3499
    %4178 = vmatpush2.bf16.msra.mxu0 %v3498
    %4179 = vmatprep.subr.bf16.mxu0 %v3491
    %4180 = vmatpush2.bf16.msra.mxu0 %v3490
    %4181 = vmatprep.subr.bf16.mxu0 %v3483
    %4182 = vmatpush2.bf16.msra.mxu0 %v3482
    %4183 = vmatprep.subr.bf16.mxu0 %v3475
    %4184 = vmatpush2.bf16.msra.mxu0 %v3474
    %4185 = vmatprep.subr.bf16.mxu0 %v3467
    %4186 = vmatpush2.bf16.msra.mxu0 %v3466
    %4187 = vmatprep.subr.bf16.mxu0 %v3459
    %4188 = vmatpush2.bf16.msra.mxu0 %v3458
    %4189 = vmatprep.mubr.bf16.mxu0 %v919
    %4190 = vmatmul.mubr.bf16.gmra.mxu0 %v918
    %v4191 = vpop.f32.mrf.mxu0
    %v4192 = vadd.f32 %v4151, %v4191
    %v4193 = vpop.f32.mrf.mxu0
    %v4194 = vadd.f32 %v4153, %v4193
    %v4195 = vpop.f32.mrf.mxu0
    %v4196 = vpop.f32.mrf.mxu0
    %4197 = vdwg.mxu0
    %4198 = vmatprep.subr.bf16.mxu0 %v3069
    %4199 = vmatpush1.bf16.msra.mxu0 %v3068
    %4200 = vmatprep.subr.bf16.mxu0 %v3061
    %4201 = vmatpush1.bf16.msra.mxu0 %v3060
    %4202 = vmatprep.subr.bf16.mxu0 %v3053
    %4203 = vmatpush1.bf16.msra.mxu0 %v3052
    %4204 = vmatprep.subr.bf16.mxu0 %v3045
    %4205 = vmatpush1.bf16.msra.mxu0 %v3044
    %4206 = vmatprep.subr.bf16.mxu0 %v3037
    %4207 = vmatpush1.bf16.msra.mxu0 %v3036
    %4208 = vmatprep.subr.bf16.mxu0 %v3029
    %4209 = vmatpush1.bf16.msra.mxu0 %v3028
    %4210 = vmatprep.subr.bf16.mxu0 %v3021
    %4211 = vmatpush1.bf16.msra.mxu0 %v3020
    %4212 = vmatprep.subr.bf16.mxu0 %v3013
    %4213 = vmatpush1.bf16.msra.mxu0 %v3012
    %4214 = vmatprep.subr.bf16.mxu0 %v3133
    %4215 = vmatpush2.bf16.msra.mxu0 %v3132
    %4216 = vmatprep.subr.bf16.mxu0 %v3125
    %4217 = vmatpush2.bf16.msra.mxu0 %v3124
    %4218 = vmatprep.subr.bf16.mxu0 %v3117
    %4219 = vmatpush2.bf16.msra.mxu0 %v3116
    %4220 = vmatprep.subr.bf16.mxu0 %v3109
    %4221 = vmatpush2.bf16.msra.mxu0 %v3108
    %4222 = vmatprep.subr.bf16.mxu0 %v3101
    %4223 = vmatpush2.bf16.msra.mxu0 %v3100
    %4224 = vmatprep.subr.bf16.mxu0 %v3093
    %4225 = vmatpush2.bf16.msra.mxu0 %v3092
    %4226 = vmatprep.subr.bf16.mxu0 %v3085
    %4227 = vmatpush2.bf16.msra.mxu0 %v3084
    %4228 = vmatprep.subr.bf16.mxu0 %v3077
    %4229 = vmatpush2.bf16.msra.mxu0 %v3076
    %4230 = vmatprep.mubr.bf16.mxu0 %v913
    %4231 = vmatmul.mubr.bf16.gmra.mxu0 %v912
    %v4232 = vpop.f32.mrf.mxu0
    %v4233 = vadd.f32 %v1445, %v4232
    %v4234 = vpop.f32.mrf.mxu0
    %v4235 = vadd.f32 %v1449, %v4234
    %v4236 = vpop.f32.mrf.mxu0
    %v4237 = vpop.f32.mrf.mxu0
    %4238 = vdwg.mxu0
    %4239 = vmatprep.subr.bf16.mxu0 %v3197
    %4240 = vmatpush1.bf16.msra.mxu0 %v3196
    %4241 = vmatprep.subr.bf16.mxu0 %v3189
    %4242 = vmatpush1.bf16.msra.mxu0 %v3188
    %4243 = vmatprep.subr.bf16.mxu0 %v3181
    %4244 = vmatpush1.bf16.msra.mxu0 %v3180
    %4245 = vmatprep.subr.bf16.mxu0 %v3173
    %4246 = vmatpush1.bf16.msra.mxu0 %v3172
    %4247 = vmatprep.subr.bf16.mxu0 %v3165
    %4248 = vmatpush1.bf16.msra.mxu0 %v3164
    %4249 = vmatprep.subr.bf16.mxu0 %v3157
    %4250 = vmatpush1.bf16.msra.mxu0 %v3156
    %4251 = vmatprep.subr.bf16.mxu0 %v3149
    %4252 = vmatpush1.bf16.msra.mxu0 %v3148
    %4253 = vmatprep.subr.bf16.mxu0 %v3141
    %4254 = vmatpush1.bf16.msra.mxu0 %v3140
    %4255 = vmatprep.subr.bf16.mxu0 %v3261
    %4256 = vmatpush2.bf16.msra.mxu0 %v3260
    %4257 = vmatprep.subr.bf16.mxu0 %v3253
    %4258 = vmatpush2.bf16.msra.mxu0 %v3252
    %4259 = vmatprep.subr.bf16.mxu0 %v3245
    %4260 = vmatpush2.bf16.msra.mxu0 %v3244
    %4261 = vmatprep.subr.bf16.mxu0 %v3237
    %4262 = vmatpush2.bf16.msra.mxu0 %v3236
    %4263 = vmatprep.subr.bf16.mxu0 %v3229
    %4264 = vmatpush2.bf16.msra.mxu0 %v3228
    %4265 = vmatprep.subr.bf16.mxu0 %v3221
    %4266 = vmatpush2.bf16.msra.mxu0 %v3220
    %4267 = vmatprep.subr.bf16.mxu0 %v3213
    %4268 = vmatpush2.bf16.msra.mxu0 %v3212
    %4269 = vmatprep.subr.bf16.mxu0 %v3205
    %4270 = vmatpush2.bf16.msra.mxu0 %v3204
    %4271 = vmatprep.mubr.bf16.mxu0 %v915
    %4272 = vmatmul.mubr.bf16.gmra.mxu0 %v914
    %v4273 = vpop.f32.mrf.mxu0
    %v4274 = vadd.f32 %v4233, %v4273
    %v4275 = vpop.f32.mrf.mxu0
    %v4276 = vadd.f32 %v4235, %v4275
    %v4277 = vpop.f32.mrf.mxu0
    %v4278 = vpop.f32.mrf.mxu0
    %4279 = vdwg.mxu0
    %4280 = vmatprep.subr.bf16.mxu0 %v3325
    %4281 = vmatpush1.bf16.msra.mxu0 %v3324
    %4282 = vmatprep.subr.bf16.mxu0 %v3317
    %4283 = vmatpush1.bf16.msra.mxu0 %v3316
    %4284 = vmatprep.subr.bf16.mxu0 %v3309
    %4285 = vmatpush1.bf16.msra.mxu0 %v3308
    %4286 = vmatprep.subr.bf16.mxu0 %v3301
    %4287 = vmatpush1.bf16.msra.mxu0 %v3300
    %4288 = vmatprep.subr.bf16.mxu0 %v3293
    %4289 = vmatpush1.bf16.msra.mxu0 %v3292
    %4290 = vmatprep.subr.bf16.mxu0 %v3285
    %4291 = vmatpush1.bf16.msra.mxu0 %v3284
    %4292 = vmatprep.subr.bf16.mxu0 %v3277
    %4293 = vmatpush1.bf16.msra.mxu0 %v3276
    %4294 = vmatprep.subr.bf16.mxu0 %v3269
    %4295 = vmatpush1.bf16.msra.mxu0 %v3268
    %4296 = vmatprep.subr.bf16.mxu0 %v3389
    %4297 = vmatpush2.bf16.msra.mxu0 %v3388
    %4298 = vmatprep.subr.bf16.mxu0 %v3381
    %4299 = vmatpush2.bf16.msra.mxu0 %v3380
    %4300 = vmatprep.subr.bf16.mxu0 %v3373
    %4301 = vmatpush2.bf16.msra.mxu0 %v3372
    %4302 = vmatprep.subr.bf16.mxu0 %v3365
    %4303 = vmatpush2.bf16.msra.mxu0 %v3364
    %4304 = vmatprep.subr.bf16.mxu0 %v3357
    %4305 = vmatpush2.bf16.msra.mxu0 %v3356
    %4306 = vmatprep.subr.bf16.mxu0 %v3349
    %4307 = vmatpush2.bf16.msra.mxu0 %v3348
    %4308 = vmatprep.subr.bf16.mxu0 %v3341
    %4309 = vmatpush2.bf16.msra.mxu0 %v3340
    %4310 = vmatprep.subr.bf16.mxu0 %v3333
    %4311 = vmatpush2.bf16.msra.mxu0 %v3332
    %4312 = vmatprep.mubr.bf16.mxu0 %v917
    %4313 = vmatmul.mubr.bf16.gmra.mxu0 %v916
    %v4314 = vpop.f32.mrf.mxu0
    %v4315 = vadd.f32 %v4274, %v4314
    %v4316 = vpop.f32.mrf.mxu0
    %v4317 = vadd.f32 %v4276, %v4316
    %v4318 = vpop.f32.mrf.mxu0
    %v4319 = vpop.f32.mrf.mxu0
    %4320 = vdwg.mxu0
    %4321 = vmatprep.subr.bf16.mxu0 %v3453
    %4322 = vmatpush1.bf16.msra.mxu0 %v3452
    %4323 = vmatprep.subr.bf16.mxu0 %v3445
    %4324 = vmatpush1.bf16.msra.mxu0 %v3444
    %4325 = vmatprep.subr.bf16.mxu0 %v3437
    %4326 = vmatpush1.bf16.msra.mxu0 %v3436
    %4327 = vmatprep.subr.bf16.mxu0 %v3429
    %4328 = vmatpush1.bf16.msra.mxu0 %v3428
    %4329 = vmatprep.subr.bf16.mxu0 %v3421
    %4330 = vmatpush1.bf16.msra.mxu0 %v3420
    %4331 = vmatprep.subr.bf16.mxu0 %v3413
    %4332 = vmatpush1.bf16.msra.mxu0 %v3412
    %4333 = vmatprep.subr.bf16.mxu0 %v3405
    %4334 = vmatpush1.bf16.msra.mxu0 %v3404
    %4335 = vmatprep.subr.bf16.mxu0 %v3397
    %4336 = vmatpush1.bf16.msra.mxu0 %v3396
    %4337 = vmatprep.subr.bf16.mxu0 %v3517
    %4338 = vmatpush2.bf16.msra.mxu0 %v3516
    %4339 = vmatprep.subr.bf16.mxu0 %v3509
    %4340 = vmatpush2.bf16.msra.mxu0 %v3508
    %4341 = vmatprep.subr.bf16.mxu0 %v3501
    %4342 = vmatpush2.bf16.msra.mxu0 %v3500
    %4343 = vmatprep.subr.bf16.mxu0 %v3493
    %4344 = vmatpush2.bf16.msra.mxu0 %v3492
    %4345 = vmatprep.subr.bf16.mxu0 %v3485
    %4346 = vmatpush2.bf16.msra.mxu0 %v3484
    %4347 = vmatprep.subr.bf16.mxu0 %v3477
    %4348 = vmatpush2.bf16.msra.mxu0 %v3476
    %4349 = vmatprep.subr.bf16.mxu0 %v3469
    %4350 = vmatpush2.bf16.msra.mxu0 %v3468
    %4351 = vmatprep.subr.bf16.mxu0 %v3461
    %4352 = vmatpush2.bf16.msra.mxu0 %v3460
    %4353 = vmatprep.mubr.bf16.mxu0 %v919
    %4354 = vmatmul.mubr.bf16.gmra.mxu0 %v918
    %v4355 = vpop.f32.mrf.mxu0
    %v4356 = vadd.f32 %v4315, %v4355
    %v4357 = vpop.f32.mrf.mxu0
    %v4358 = vadd.f32 %v4317, %v4357
    %v4359 = vpop.f32.mrf.mxu0
    %v4360 = vpop.f32.mrf.mxu0
    %4361 = vdwg.mxu0
    %4362 = vmatprep.subr.bf16.mxu0 %v3071
    %4363 = vmatpush1.bf16.msra.mxu0 %v3070
    %4364 = vmatprep.subr.bf16.mxu0 %v3063
    %4365 = vmatpush1.bf16.msra.mxu0 %v3062
    %4366 = vmatprep.subr.bf16.mxu0 %v3055
    %4367 = vmatpush1.bf16.msra.mxu0 %v3054
    %4368 = vmatprep.subr.bf16.mxu0 %v3047
    %4369 = vmatpush1.bf16.msra.mxu0 %v3046
    %4370 = vmatprep.subr.bf16.mxu0 %v3039
    %4371 = vmatpush1.bf16.msra.mxu0 %v3038
    %4372 = vmatprep.subr.bf16.mxu0 %v3031
    %4373 = vmatpush1.bf16.msra.mxu0 %v3030
    %4374 = vmatprep.subr.bf16.mxu0 %v3023
    %4375 = vmatpush1.bf16.msra.mxu0 %v3022
    %4376 = vmatprep.subr.bf16.mxu0 %v3015
    %4377 = vmatpush1.bf16.msra.mxu0 %v3014
    %4378 = vmatprep.subr.bf16.mxu0 %v3135
    %4379 = vmatpush2.bf16.msra.mxu0 %v3134
    %4380 = vmatprep.subr.bf16.mxu0 %v3127
    %4381 = vmatpush2.bf16.msra.mxu0 %v3126
    %4382 = vmatprep.subr.bf16.mxu0 %v3119
    %4383 = vmatpush2.bf16.msra.mxu0 %v3118
    %4384 = vmatprep.subr.bf16.mxu0 %v3111
    %4385 = vmatpush2.bf16.msra.mxu0 %v3110
    %4386 = vmatprep.subr.bf16.mxu0 %v3103
    %4387 = vmatpush2.bf16.msra.mxu0 %v3102
    %4388 = vmatprep.subr.bf16.mxu0 %v3095
    %4389 = vmatpush2.bf16.msra.mxu0 %v3094
    %4390 = vmatprep.subr.bf16.mxu0 %v3087
    %4391 = vmatpush2.bf16.msra.mxu0 %v3086
    %4392 = vmatprep.subr.bf16.mxu0 %v3079
    %4393 = vmatpush2.bf16.msra.mxu0 %v3078
    %4394 = vmatprep.mubr.bf16.mxu0 %v913
    %4395 = vmatmul.mubr.bf16.gmra.mxu0 %v912
    %v4396 = vpop.f32.mrf.mxu0
    %v4397 = vadd.f32 %v1453, %v4396
    %v4398 = vpop.f32.mrf.mxu0
    %v4399 = vadd.f32 %v1457, %v4398
    %v4400 = vpop.f32.mrf.mxu0
    %v4401 = vpop.f32.mrf.mxu0
    %4402 = vdwg.mxu0
    %4403 = vmatprep.subr.bf16.mxu0 %v3199
    %4404 = vmatpush1.bf16.msra.mxu0 %v3198
    %4405 = vmatprep.subr.bf16.mxu0 %v3191
    %4406 = vmatpush1.bf16.msra.mxu0 %v3190
    %4407 = vmatprep.subr.bf16.mxu0 %v3183
    %4408 = vmatpush1.bf16.msra.mxu0 %v3182
    %4409 = vmatprep.subr.bf16.mxu0 %v3175
    %4410 = vmatpush1.bf16.msra.mxu0 %v3174
    %4411 = vmatprep.subr.bf16.mxu0 %v3167
    %4412 = vmatpush1.bf16.msra.mxu0 %v3166
    %4413 = vmatprep.subr.bf16.mxu0 %v3159
    %4414 = vmatpush1.bf16.msra.mxu0 %v3158
    %4415 = vmatprep.subr.bf16.mxu0 %v3151
    %4416 = vmatpush1.bf16.msra.mxu0 %v3150
    %4417 = vmatprep.subr.bf16.mxu0 %v3143
    %4418 = vmatpush1.bf16.msra.mxu0 %v3142
    %4419 = vmatprep.subr.bf16.mxu0 %v3263
    %4420 = vmatpush2.bf16.msra.mxu0 %v3262
    %4421 = vmatprep.subr.bf16.mxu0 %v3255
    %4422 = vmatpush2.bf16.msra.mxu0 %v3254
    %4423 = vmatprep.subr.bf16.mxu0 %v3247
    %4424 = vmatpush2.bf16.msra.mxu0 %v3246
    %4425 = vmatprep.subr.bf16.mxu0 %v3239
    %4426 = vmatpush2.bf16.msra.mxu0 %v3238
    %4427 = vmatprep.subr.bf16.mxu0 %v3231
    %4428 = vmatpush2.bf16.msra.mxu0 %v3230
    %4429 = vmatprep.subr.bf16.mxu0 %v3223
    %4430 = vmatpush2.bf16.msra.mxu0 %v3222
    %4431 = vmatprep.subr.bf16.mxu0 %v3215
    %4432 = vmatpush2.bf16.msra.mxu0 %v3214
    %4433 = vmatprep.subr.bf16.mxu0 %v3207
    %4434 = vmatpush2.bf16.msra.mxu0 %v3206
    %4435 = vmatprep.mubr.bf16.mxu0 %v915
    %4436 = vmatmul.mubr.bf16.gmra.mxu0 %v914
    %v4437 = vpop.f32.mrf.mxu0
    %v4438 = vadd.f32 %v4397, %v4437
    %v4439 = vpop.f32.mrf.mxu0
    %v4440 = vadd.f32 %v4399, %v4439
    %v4441 = vpop.f32.mrf.mxu0
    %v4442 = vpop.f32.mrf.mxu0
    %4443 = vdwg.mxu0
    %4444 = vmatprep.subr.bf16.mxu0 %v3327
    %4445 = vmatpush1.bf16.msra.mxu0 %v3326
    %4446 = vmatprep.subr.bf16.mxu0 %v3319
    %4447 = vmatpush1.bf16.msra.mxu0 %v3318
    %4448 = vmatprep.subr.bf16.mxu0 %v3311
    %4449 = vmatpush1.bf16.msra.mxu0 %v3310
    %4450 = vmatprep.subr.bf16.mxu0 %v3303
    %4451 = vmatpush1.bf16.msra.mxu0 %v3302
    %4452 = vmatprep.subr.bf16.mxu0 %v3295
    %4453 = vmatpush1.bf16.msra.mxu0 %v3294
    %4454 = vmatprep.subr.bf16.mxu0 %v3287
    %4455 = vmatpush1.bf16.msra.mxu0 %v3286
    %4456 = vmatprep.subr.bf16.mxu0 %v3279
    %4457 = vmatpush1.bf16.msra.mxu0 %v3278
    %4458 = vmatprep.subr.bf16.mxu0 %v3271
    %4459 = vmatpush1.bf16.msra.mxu0 %v3270
    %4460 = vmatprep.subr.bf16.mxu0 %v3391
    %4461 = vmatpush2.bf16.msra.mxu0 %v3390
    %4462 = vmatprep.subr.bf16.mxu0 %v3383
    %4463 = vmatpush2.bf16.msra.mxu0 %v3382
    %4464 = vmatprep.subr.bf16.mxu0 %v3375
    %4465 = vmatpush2.bf16.msra.mxu0 %v3374
    %4466 = vmatprep.subr.bf16.mxu0 %v3367
    %4467 = vmatpush2.bf16.msra.mxu0 %v3366
    %4468 = vmatprep.subr.bf16.mxu0 %v3359
    %4469 = vmatpush2.bf16.msra.mxu0 %v3358
    %4470 = vmatprep.subr.bf16.mxu0 %v3351
    %4471 = vmatpush2.bf16.msra.mxu0 %v3350
    %4472 = vmatprep.subr.bf16.mxu0 %v3343
    %4473 = vmatpush2.bf16.msra.mxu0 %v3342
    %4474 = vmatprep.subr.bf16.mxu0 %v3335
    %4475 = vmatpush2.bf16.msra.mxu0 %v3334
    %4476 = vmatprep.mubr.bf16.mxu0 %v917
    %4477 = vmatmul.mubr.bf16.gmra.mxu0 %v916
    %v4478 = vpop.f32.mrf.mxu0
    %v4479 = vadd.f32 %v4438, %v4478
    %v4480 = vpop.f32.mrf.mxu0
    %v4481 = vadd.f32 %v4440, %v4480
    %v4482 = vpop.f32.mrf.mxu0
    %v4483 = vpop.f32.mrf.mxu0
    %4484 = vdwg.mxu0
    %4485 = vmatprep.subr.bf16.mxu0 %v3455
    %4486 = vmatpush1.bf16.msra.mxu0 %v3454
    %4487 = vmatprep.subr.bf16.mxu0 %v3447
    %4488 = vmatpush1.bf16.msra.mxu0 %v3446
    %4489 = vmatprep.subr.bf16.mxu0 %v3439
    %4490 = vmatpush1.bf16.msra.mxu0 %v3438
    %4491 = vmatprep.subr.bf16.mxu0 %v3431
    %4492 = vmatpush1.bf16.msra.mxu0 %v3430
    %4493 = vmatprep.subr.bf16.mxu0 %v3423
    %4494 = vmatpush1.bf16.msra.mxu0 %v3422
    %4495 = vmatprep.subr.bf16.mxu0 %v3415
    %4496 = vmatpush1.bf16.msra.mxu0 %v3414
    %4497 = vmatprep.subr.bf16.mxu0 %v3407
    %4498 = vmatpush1.bf16.msra.mxu0 %v3406
    %4499 = vmatprep.subr.bf16.mxu0 %v3399
    %4500 = vmatpush1.bf16.msra.mxu0 %v3398
    %4501 = vmatprep.subr.bf16.mxu0 %v3519
    %4502 = vmatpush2.bf16.msra.mxu0 %v3518
    %4503 = vmatprep.subr.bf16.mxu0 %v3511
    %4504 = vmatpush2.bf16.msra.mxu0 %v3510
    %4505 = vmatprep.subr.bf16.mxu0 %v3503
    %4506 = vmatpush2.bf16.msra.mxu0 %v3502
    %4507 = vmatprep.subr.bf16.mxu0 %v3495
    %4508 = vmatpush2.bf16.msra.mxu0 %v3494
    %4509 = vmatprep.subr.bf16.mxu0 %v3487
    %4510 = vmatpush2.bf16.msra.mxu0 %v3486
    %4511 = vmatprep.subr.bf16.mxu0 %v3479
    %4512 = vmatpush2.bf16.msra.mxu0 %v3478
    %4513 = vmatprep.subr.bf16.mxu0 %v3471
    %4514 = vmatpush2.bf16.msra.mxu0 %v3470
    %4515 = vmatprep.subr.bf16.mxu0 %v3463
    %4516 = vmatpush2.bf16.msra.mxu0 %v3462
    %4517 = vmatprep.mubr.bf16.mxu0 %v919
    %4518 = vmatmul.mubr.bf16.gmra.mxu0 %v918
    %v4519 = vpop.f32.mrf.mxu0
    %v4520 = vadd.f32 %v4479, %v4519
    %v4521 = vpop.f32.mrf.mxu0
    %v4522 = vadd.f32 %v4481, %v4521
    %v4523 = vpop.f32.mrf.mxu0
    %v4524 = vpop.f32.mrf.mxu0
    %4525 = vdwg.mxu0
    %4526 = vmatprep.subr.bf16.mxu0 %v3073
    %4527 = vmatpush1.bf16.msra.mxu0 %v3072
    %4528 = vmatprep.subr.bf16.mxu0 %v3065
    %4529 = vmatpush1.bf16.msra.mxu0 %v3064
    %4530 = vmatprep.subr.bf16.mxu0 %v3057
    %4531 = vmatpush1.bf16.msra.mxu0 %v3056
    %4532 = vmatprep.subr.bf16.mxu0 %v3049
    %4533 = vmatpush1.bf16.msra.mxu0 %v3048
    %4534 = vmatprep.subr.bf16.mxu0 %v3041
    %4535 = vmatpush1.bf16.msra.mxu0 %v3040
    %4536 = vmatprep.subr.bf16.mxu0 %v3033
    %4537 = vmatpush1.bf16.msra.mxu0 %v3032
    %4538 = vmatprep.subr.bf16.mxu0 %v3025
    %4539 = vmatpush1.bf16.msra.mxu0 %v3024
    %4540 = vmatprep.subr.bf16.mxu0 %v3017
    %4541 = vmatpush1.bf16.msra.mxu0 %v3016
    %4542 = vmatprep.subr.bf16.mxu0 %v3137
    %4543 = vmatpush2.bf16.msra.mxu0 %v3136
    %4544 = vmatprep.subr.bf16.mxu0 %v3129
    %4545 = vmatpush2.bf16.msra.mxu0 %v3128
    %4546 = vmatprep.subr.bf16.mxu0 %v3121
    %4547 = vmatpush2.bf16.msra.mxu0 %v3120
    %4548 = vmatprep.subr.bf16.mxu0 %v3113
    %4549 = vmatpush2.bf16.msra.mxu0 %v3112
    %4550 = vmatprep.subr.bf16.mxu0 %v3105
    %4551 = vmatpush2.bf16.msra.mxu0 %v3104
    %4552 = vmatprep.subr.bf16.mxu0 %v3097
    %4553 = vmatpush2.bf16.msra.mxu0 %v3096
    %4554 = vmatprep.subr.bf16.mxu0 %v3089
    %4555 = vmatpush2.bf16.msra.mxu0 %v3088
    %4556 = vmatprep.subr.bf16.mxu0 %v3081
    %4557 = vmatpush2.bf16.msra.mxu0 %v3080
    %4558 = vmatprep.mubr.bf16.mxu0 %v913
    %4559 = vmatmul.mubr.bf16.gmra.mxu0 %v912
    %v4560 = vpop.f32.mrf.mxu0
    %v4561 = vadd.f32 %v1461, %v4560
    %v4562 = vpop.f32.mrf.mxu0
    %v4563 = vadd.f32 %v1465, %v4562
    %v4564 = vpop.f32.mrf.mxu0
    %v4565 = vpop.f32.mrf.mxu0
    %4566 = vdwg.mxu0
    %4567 = vmatprep.subr.bf16.mxu0 %v3201
    %4568 = vmatpush1.bf16.msra.mxu0 %v3200
    %4569 = vmatprep.subr.bf16.mxu0 %v3193
    %4570 = vmatpush1.bf16.msra.mxu0 %v3192
    %4571 = vmatprep.subr.bf16.mxu0 %v3185
    %4572 = vmatpush1.bf16.msra.mxu0 %v3184
    %4573 = vmatprep.subr.bf16.mxu0 %v3177
    %4574 = vmatpush1.bf16.msra.mxu0 %v3176
    %4575 = vmatprep.subr.bf16.mxu0 %v3169
    %4576 = vmatpush1.bf16.msra.mxu0 %v3168
    %4577 = vmatprep.subr.bf16.mxu0 %v3161
    %4578 = vmatpush1.bf16.msra.mxu0 %v3160
    %4579 = vmatprep.subr.bf16.mxu0 %v3153
    %4580 = vmatpush1.bf16.msra.mxu0 %v3152
    %4581 = vmatprep.subr.bf16.mxu0 %v3145
    %4582 = vmatpush1.bf16.msra.mxu0 %v3144
    %4583 = vmatprep.subr.bf16.mxu0 %v3265
    %4584 = vmatpush2.bf16.msra.mxu0 %v3264
    %4585 = vmatprep.subr.bf16.mxu0 %v3257
    %4586 = vmatpush2.bf16.msra.mxu0 %v3256
    %4587 = vmatprep.subr.bf16.mxu0 %v3249
    %4588 = vmatpush2.bf16.msra.mxu0 %v3248
    %4589 = vmatprep.subr.bf16.mxu0 %v3241
    %4590 = vmatpush2.bf16.msra.mxu0 %v3240
    %4591 = vmatprep.subr.bf16.mxu0 %v3233
    %4592 = vmatpush2.bf16.msra.mxu0 %v3232
    %4593 = vmatprep.subr.bf16.mxu0 %v3225
    %4594 = vmatpush2.bf16.msra.mxu0 %v3224
    %4595 = vmatprep.subr.bf16.mxu0 %v3217
    %4596 = vmatpush2.bf16.msra.mxu0 %v3216
    %4597 = vmatprep.subr.bf16.mxu0 %v3209
    %4598 = vmatpush2.bf16.msra.mxu0 %v3208
    %4599 = vmatprep.mubr.bf16.mxu0 %v915
    %4600 = vmatmul.mubr.bf16.gmra.mxu0 %v914
    %v4601 = vpop.f32.mrf.mxu0
    %v4602 = vadd.f32 %v4561, %v4601
    %v4603 = vpop.f32.mrf.mxu0
    %v4604 = vadd.f32 %v4563, %v4603
    %v4605 = vpop.f32.mrf.mxu0
    %v4606 = vpop.f32.mrf.mxu0
    %4607 = vdwg.mxu0
    %4608 = vmatprep.subr.bf16.mxu0 %v3329
    %4609 = vmatpush1.bf16.msra.mxu0 %v3328
    %4610 = vmatprep.subr.bf16.mxu0 %v3321
    %4611 = vmatpush1.bf16.msra.mxu0 %v3320
    %4612 = vmatprep.subr.bf16.mxu0 %v3313
    %4613 = vmatpush1.bf16.msra.mxu0 %v3312
    %4614 = vmatprep.subr.bf16.mxu0 %v3305
    %4615 = vmatpush1.bf16.msra.mxu0 %v3304
    %4616 = vmatprep.subr.bf16.mxu0 %v3297
    %4617 = vmatpush1.bf16.msra.mxu0 %v3296
    %4618 = vmatprep.subr.bf16.mxu0 %v3289
    %4619 = vmatpush1.bf16.msra.mxu0 %v3288
    %4620 = vmatprep.subr.bf16.mxu0 %v3281
    %4621 = vmatpush1.bf16.msra.mxu0 %v3280
    %4622 = vmatprep.subr.bf16.mxu0 %v3273
    %4623 = vmatpush1.bf16.msra.mxu0 %v3272
    %4624 = vmatprep.subr.bf16.mxu0 %v3393
    %4625 = vmatpush2.bf16.msra.mxu0 %v3392
    %4626 = vmatprep.subr.bf16.mxu0 %v3385
    %4627 = vmatpush2.bf16.msra.mxu0 %v3384
    %4628 = vmatprep.subr.bf16.mxu0 %v3377
    %4629 = vmatpush2.bf16.msra.mxu0 %v3376
    %4630 = vmatprep.subr.bf16.mxu0 %v3369
    %4631 = vmatpush2.bf16.msra.mxu0 %v3368
    %4632 = vmatprep.subr.bf16.mxu0 %v3361
    %4633 = vmatpush2.bf16.msra.mxu0 %v3360
    %4634 = vmatprep.subr.bf16.mxu0 %v3353
    %4635 = vmatpush2.bf16.msra.mxu0 %v3352
    %4636 = vmatprep.subr.bf16.mxu0 %v3345
    %4637 = vmatpush2.bf16.msra.mxu0 %v3344
    %4638 = vmatprep.subr.bf16.mxu0 %v3337
    %4639 = vmatpush2.bf16.msra.mxu0 %v3336
    %4640 = vmatprep.mubr.bf16.mxu0 %v917
    %4641 = vmatmul.mubr.bf16.gmra.mxu0 %v916
    %v4642 = vpop.f32.mrf.mxu0
    %v4643 = vadd.f32 %v4602, %v4642
    %v4644 = vpop.f32.mrf.mxu0
    %v4645 = vadd.f32 %v4604, %v4644
    %v4646 = vpop.f32.mrf.mxu0
    %v4647 = vpop.f32.mrf.mxu0
    %4648 = vdwg.mxu0
    %4649 = vmatprep.subr.bf16.mxu0 %v3457
    %4650 = vmatpush1.bf16.msra.mxu0 %v3456
    %4651 = vmatprep.subr.bf16.mxu0 %v3449
    %4652 = vmatpush1.bf16.msra.mxu0 %v3448
    %4653 = vmatprep.subr.bf16.mxu0 %v3441
    %4654 = vmatpush1.bf16.msra.mxu0 %v3440
    %4655 = vmatprep.subr.bf16.mxu0 %v3433
    %4656 = vmatpush1.bf16.msra.mxu0 %v3432
    %4657 = vmatprep.subr.bf16.mxu0 %v3425
    %4658 = vmatpush1.bf16.msra.mxu0 %v3424
    %4659 = vmatprep.subr.bf16.mxu0 %v3417
    %4660 = vmatpush1.bf16.msra.mxu0 %v3416
    %4661 = vmatprep.subr.bf16.mxu0 %v3409
    %4662 = vmatpush1.bf16.msra.mxu0 %v3408
    %4663 = vmatprep.subr.bf16.mxu0 %v3401
    %4664 = vmatpush1.bf16.msra.mxu0 %v3400
    %4665 = vmatprep.subr.bf16.mxu0 %v3521
    %4666 = vmatpush2.bf16.msra.mxu0 %v3520
    %4667 = vmatprep.subr.bf16.mxu0 %v3513
    %4668 = vmatpush2.bf16.msra.mxu0 %v3512
    %4669 = vmatprep.subr.bf16.mxu0 %v3505
    %4670 = vmatpush2.bf16.msra.mxu0 %v3504
    %4671 = vmatprep.subr.bf16.mxu0 %v3497
    %4672 = vmatpush2.bf16.msra.mxu0 %v3496
    %4673 = vmatprep.subr.bf16.mxu0 %v3489
    %4674 = vmatpush2.bf16.msra.mxu0 %v3488
    %4675 = vmatprep.subr.bf16.mxu0 %v3481
    %4676 = vmatpush2.bf16.msra.mxu0 %v3480
    %4677 = vmatprep.subr.bf16.mxu0 %v3473
    %4678 = vmatpush2.bf16.msra.mxu0 %v3472
    %4679 = vmatprep.subr.bf16.mxu0 %v3465
    %4680 = vmatpush2.bf16.msra.mxu0 %v3464
    %4681 = vmatprep.mubr.bf16.mxu0 %v919
    %4682 = vmatmul.mubr.bf16.gmra.mxu0 %v918
    %v4683 = vpop.f32.mrf.mxu0
    %v4684 = vadd.f32 %v4643, %v4683
    %v4685 = vpop.f32.mrf.mxu0
    %v4686 = vadd.f32 %v4645, %v4685
    %v4687 = vpop.f32.mrf.mxu0
    %v4688 = vpop.f32.mrf.mxu0
    %4689 = vdwg.mxu0
    %v4690 = vmax.f32 %v4192, 0.0
    %v4691 = vmax.f32 %v4194, 0.0
    %v4692 = vmax.f32 %v4356, 0.0
    %v4693 = vmax.f32 %v4358, 0.0
    %v4694 = vmax.f32 %v4520, 0.0
    %v4695 = vmax.f32 %v4522, 0.0
    %v4696 = vmax.f32 %v4684, 0.0
    %v4697 = vmax.f32 %v4686, 0.0
    %v4698 = vpack.c.bf16 %v4690, %v4690
    %v4699 = vpack.c.bf16 %v4691, %v4691
    %v4700 = vpack.c.bf16 %v4692, %v4692
    %v4701 = vpack.c.bf16 %v4693, %v4693
    %v4702 = vpack.c.bf16 %v4694, %v4694
    %v4703 = vpack.c.bf16 %v4695, %v4695
    %v4704 = vpack.c.bf16 %v4696, %v4696
    %v4705 = vpack.c.bf16 %v4697, %v4697
    %v4706 = vld [vmem:[%s11] sm:$0xf]
    %v4707 = vld [vmem:[%s11 + $0x4] sm:$0xf]
    %v4708 = vld [vmem:[%s11 + $0x8] sm:$0xf]
    %v4709 = vld [vmem:[%s11 + $0xc] sm:$0xf]
    %v4710 = vld [vmem:[%s11 + $0x10] sm:$0xf]
    %v4711 = vld [vmem:[%s11 + $0x14] sm:$0xf]
    %v4712 = vld [vmem:[%s11 + $0x18] sm:$0xf]
    %v4713 = vld [vmem:[%s11 + $0x1c] sm:$0xf]
    %v4714 = vld [vmem:[%s11 + $0x20] sm:$0xf]
    %v4715 = vld [vmem:[%s11 + $0x24] sm:$0xf]
    %v4716 = vld [vmem:[%s11 + $0x28] sm:$0xf]
    %v4717 = vld [vmem:[%s11 + $0x2c] sm:$0xf]
    %v4718 = vld [vmem:[%s11 + $0x30] sm:$0xf]
    %v4719 = vld [vmem:[%s11 + $0x34] sm:$0xf]
    %v4720 = vld [vmem:[%s11 + $0x38] sm:$0xf]
    %v4721 = vld [vmem:[%s11 + $0x3c] sm:$0xf]
    %v4722 = vld [vmem:[%s11 + $0x40] sm:$0xf]
    %v4723 = vld [vmem:[%s11 + $0x44] sm:$0xf]
    %v4724 = vld [vmem:[%s11 + $0x48] sm:$0xf]
    %v4725 = vld [vmem:[%s11 + $0x4c] sm:$0xf]
    %v4726 = vld [vmem:[%s11 + $0x50] sm:$0xf]
    %v4727 = vld [vmem:[%s11 + $0x54] sm:$0xf]
    %v4728 = vld [vmem:[%s11 + $0x58] sm:$0xf]
    %v4729 = vld [vmem:[%s11 + $0x5c] sm:$0xf]
    %v4730 = vld [vmem:[%s11 + $0x60] sm:$0xf]
    %v4731 = vld [vmem:[%s11 + $0x64] sm:$0xf]
    %v4732 = vld [vmem:[%s11 + $0x68] sm:$0xf]
    %v4733 = vld [vmem:[%s11 + $0x6c] sm:$0xf]
    %v4734 = vld [vmem:[%s11 + $0x70] sm:$0xf]
    %v4735 = vld [vmem:[%s11 + $0x74] sm:$0xf]
    %v4736 = vld [vmem:[%s11 + $0x78] sm:$0xf]
    %v4737 = vld [vmem:[%s11 + $0x7c] sm:$0xf]
    %v4738 = vld [vmem:[%s11 + $0x80] sm:$0xf]
    %v4739 = vld [vmem:[%s11 + $0x84] sm:$0xf]
    %v4740 = vld [vmem:[%s11 + $0x88] sm:$0xf]
    %v4741 = vld [vmem:[%s11 + $0x8c] sm:$0xf]
    %v4742 = vld [vmem:[%s11 + $0x90] sm:$0xf]
    %v4743 = vld [vmem:[%s11 + $0x94] sm:$0xf]
    %v4744 = vld [vmem:[%s11 + $0x98] sm:$0xf]
    %v4745 = vld [vmem:[%s11 + $0x9c] sm:$0xf]
    %v4746 = vld [vmem:[%s11 + $0xa0] sm:$0xf]
    %v4747 = vld [vmem:[%s11 + $0xa4] sm:$0xf]
    %v4748 = vld [vmem:[%s11 + $0xa8] sm:$0xf]
    %v4749 = vld [vmem:[%s11 + $0xac] sm:$0xf]
    %v4750 = vld [vmem:[%s11 + $0xb0] sm:$0xf]
    %v4751 = vld [vmem:[%s11 + $0xb4] sm:$0xf]
    %v4752 = vld [vmem:[%s11 + $0xb8] sm:$0xf]
    %v4753 = vld [vmem:[%s11 + $0xbc] sm:$0xf]
    %v4754 = vld [vmem:[%s11 + $0xc0] sm:$0xf]
    %v4755 = vld [vmem:[%s11 + $0xc4] sm:$0xf]
    %v4756 = vld [vmem:[%s11 + $0xc8] sm:$0xf]
    %v4757 = vld [vmem:[%s11 + $0xcc] sm:$0xf]
    %v4758 = vld [vmem:[%s11 + $0xd0] sm:$0xf]
    %v4759 = vld [vmem:[%s11 + $0xd4] sm:$0xf]
    %v4760 = vld [vmem:[%s11 + $0xd8] sm:$0xf]
    %v4761 = vld [vmem:[%s11 + $0xdc] sm:$0xf]
    %v4762 = vld [vmem:[%s11 + $0xe0] sm:$0xf]
    %v4763 = vld [vmem:[%s11 + $0xe4] sm:$0xf]
    %v4764 = vld [vmem:[%s11 + $0xe8] sm:$0xf]
    %v4765 = vld [vmem:[%s11 + $0xec] sm:$0xf]
    %v4766 = vld [vmem:[%s11 + $0xf0] sm:$0xf]
    %v4767 = vld [vmem:[%s11 + $0xf4] sm:$0xf]
    %v4768 = vld [vmem:[%s11 + $0xf8] sm:$0xf]
    %v4769 = vld [vmem:[%s11 + $0xfc] sm:$0xf]
    %v4770 = vld [vmem:[%s11 + $0x100] sm:$0xf]
    %v4771 = vld [vmem:[%s11 + $0x104] sm:$0xf]
    %v4772 = vld [vmem:[%s11 + $0x108] sm:$0xf]
    %v4773 = vld [vmem:[%s11 + $0x10c] sm:$0xf]
    %v4774 = vld [vmem:[%s11 + $0x110] sm:$0xf]
    %v4775 = vld [vmem:[%s11 + $0x114] sm:$0xf]
    %v4776 = vld [vmem:[%s11 + $0x118] sm:$0xf]
    %v4777 = vld [vmem:[%s11 + $0x11c] sm:$0xf]
    %v4778 = vld [vmem:[%s11 + $0x120] sm:$0xf]
    %v4779 = vld [vmem:[%s11 + $0x124] sm:$0xf]
    %v4780 = vld [vmem:[%s11 + $0x128] sm:$0xf]
    %v4781 = vld [vmem:[%s11 + $0x12c] sm:$0xf]
    %v4782 = vld [vmem:[%s11 + $0x130] sm:$0xf]
    %v4783 = vld [vmem:[%s11 + $0x134] sm:$0xf]
    %v4784 = vld [vmem:[%s11 + $0x138] sm:$0xf]
    %v4785 = vld [vmem:[%s11 + $0x13c] sm:$0xf]
    %v4786 = vld [vmem:[%s11 + $0x140] sm:$0xf]
    %v4787 = vld [vmem:[%s11 + $0x144] sm:$0xf]
    %v4788 = vld [vmem:[%s11 + $0x148] sm:$0xf]
    %v4789 = vld [vmem:[%s11 + $0x14c] sm:$0xf]
    %v4790 = vld [vmem:[%s11 + $0x150] sm:$0xf]
    %v4791 = vld [vmem:[%s11 + $0x154] sm:$0xf]
    %v4792 = vld [vmem:[%s11 + $0x158] sm:$0xf]
    %v4793 = vld [vmem:[%s11 + $0x15c] sm:$0xf]
    %v4794 = vld [vmem:[%s11 + $0x160] sm:$0xf]
    %v4795 = vld [vmem:[%s11 + $0x164] sm:$0xf]
    %v4796 = vld [vmem:[%s11 + $0x168] sm:$0xf]
    %v4797 = vld [vmem:[%s11 + $0x16c] sm:$0xf]
    %v4798 = vld [vmem:[%s11 + $0x170] sm:$0xf]
    %v4799 = vld [vmem:[%s11 + $0x174] sm:$0xf]
    %v4800 = vld [vmem:[%s11 + $0x178] sm:$0xf]
    %v4801 = vld [vmem:[%s11 + $0x17c] sm:$0xf]
    %v4802 = vld [vmem:[%s11 + $0x180] sm:$0xf]
    %v4803 = vld [vmem:[%s11 + $0x184] sm:$0xf]
    %v4804 = vld [vmem:[%s11 + $0x188] sm:$0xf]
    %v4805 = vld [vmem:[%s11 + $0x18c] sm:$0xf]
    %v4806 = vld [vmem:[%s11 + $0x190] sm:$0xf]
    %v4807 = vld [vmem:[%s11 + $0x194] sm:$0xf]
    %v4808 = vld [vmem:[%s11 + $0x198] sm:$0xf]
    %v4809 = vld [vmem:[%s11 + $0x19c] sm:$0xf]
    %v4810 = vld [vmem:[%s11 + $0x1a0] sm:$0xf]
    %v4811 = vld [vmem:[%s11 + $0x1a4] sm:$0xf]
    %v4812 = vld [vmem:[%s11 + $0x1a8] sm:$0xf]
    %v4813 = vld [vmem:[%s11 + $0x1ac] sm:$0xf]
    %v4814 = vld [vmem:[%s11 + $0x1b0] sm:$0xf]
    %v4815 = vld [vmem:[%s11 + $0x1b4] sm:$0xf]
    %v4816 = vld [vmem:[%s11 + $0x1b8] sm:$0xf]
    %v4817 = vld [vmem:[%s11 + $0x1bc] sm:$0xf]
    %v4818 = vld [vmem:[%s11 + $0x1c0] sm:$0xf]
    %v4819 = vld [vmem:[%s11 + $0x1c4] sm:$0xf]
    %v4820 = vld [vmem:[%s11 + $0x1c8] sm:$0xf]
    %v4821 = vld [vmem:[%s11 + $0x1cc] sm:$0xf]
    %v4822 = vld [vmem:[%s11 + $0x1d0] sm:$0xf]
    %v4823 = vld [vmem:[%s11 + $0x1d4] sm:$0xf]
    %v4824 = vld [vmem:[%s11 + $0x1d8] sm:$0xf]
    %v4825 = vld [vmem:[%s11 + $0x1dc] sm:$0xf]
    %v4826 = vld [vmem:[%s11 + $0x1e0] sm:$0xf]
    %v4827 = vld [vmem:[%s11 + $0x1e4] sm:$0xf]
    %v4828 = vld [vmem:[%s11 + $0x1e8] sm:$0xf]
    %v4829 = vld [vmem:[%s11 + $0x1ec] sm:$0xf]
    %v4830 = vld [vmem:[%s11 + $0x1f0] sm:$0xf]
    %v4831 = vld [vmem:[%s11 + $0x1f4] sm:$0xf]
    %v4832 = vld [vmem:[%s11 + $0x1f8] sm:$0xf]
    %v4833 = vld [vmem:[%s11 + $0x1fc] sm:$0xf]
    %v4834 = vld [vmem:[#allocation20] sm:$0x1]
    %v4836 = vlaneseq
    %v4837 = vshrl.u32 %v4836, 7
    %v4838 = vsub.s32 0, %v4837
    %v4839 = vrot.slane %v4834, %v4838
    %v4969 = vunpack.c.l.b16 %v4706
    %v4970 = vunpack.c.l.b16 %v4707
    %v4971 = vunpack.c.l.b16 %v4708
    %v4972 = vunpack.c.l.b16 %v4709
    %v4973 = vunpack.c.l.b16 %v4710
    %v4974 = vunpack.c.l.b16 %v4711
    %v4975 = vunpack.c.l.b16 %v4712
    %v4976 = vunpack.c.l.b16 %v4713
    %v4977 = vunpack.c.l.b16 %v4714
    %v4978 = vunpack.c.l.b16 %v4715
    %v4979 = vunpack.c.l.b16 %v4716
    %v4980 = vunpack.c.l.b16 %v4717
    %v4981 = vunpack.c.l.b16 %v4718
    %v4982 = vunpack.c.l.b16 %v4719
    %v4983 = vunpack.c.l.b16 %v4720
    %v4984 = vunpack.c.l.b16 %v4721
    %v4985 = vunpack.c.l.b16 %v4722
    %v4986 = vunpack.c.l.b16 %v4723
    %v4987 = vunpack.c.l.b16 %v4724
    %v4988 = vunpack.c.l.b16 %v4725
    %v4989 = vunpack.c.l.b16 %v4726
    %v4990 = vunpack.c.l.b16 %v4727
    %v4991 = vunpack.c.l.b16 %v4728
    %v4992 = vunpack.c.l.b16 %v4729
    %v4993 = vunpack.c.l.b16 %v4730
    %v4994 = vunpack.c.l.b16 %v4731
    %v4995 = vunpack.c.l.b16 %v4732
    %v4996 = vunpack.c.l.b16 %v4733
    %v4997 = vunpack.c.l.b16 %v4734
    %v4998 = vunpack.c.l.b16 %v4735
    %v4999 = vunpack.c.l.b16 %v4736
    %v5000 = vunpack.c.l.b16 %v4737
    %v5001 = vunpack.c.l.b16 %v4738
    %v5002 = vunpack.c.l.b16 %v4739
    %v5003 = vunpack.c.l.b16 %v4740
    %v5004 = vunpack.c.l.b16 %v4741
    %v5005 = vunpack.c.l.b16 %v4742
    %v5006 = vunpack.c.l.b16 %v4743
    %v5007 = vunpack.c.l.b16 %v4744
    %v5008 = vunpack.c.l.b16 %v4745
    %v5009 = vunpack.c.l.b16 %v4746
    %v5010 = vunpack.c.l.b16 %v4747
    %v5011 = vunpack.c.l.b16 %v4748
    %v5012 = vunpack.c.l.b16 %v4749
    %v5013 = vunpack.c.l.b16 %v4750
    %v5014 = vunpack.c.l.b16 %v4751
    %v5015 = vunpack.c.l.b16 %v4752
    %v5016 = vunpack.c.l.b16 %v4753
    %v5017 = vunpack.c.l.b16 %v4754
    %v5018 = vunpack.c.l.b16 %v4755
    %v5019 = vunpack.c.l.b16 %v4756
    %v5020 = vunpack.c.l.b16 %v4757
    %v5021 = vunpack.c.l.b16 %v4758
    %v5022 = vunpack.c.l.b16 %v4759
    %v5023 = vunpack.c.l.b16 %v4760
    %v5024 = vunpack.c.l.b16 %v4761
    %v5025 = vunpack.c.l.b16 %v4762
    %v5026 = vunpack.c.l.b16 %v4763
    %v5027 = vunpack.c.l.b16 %v4764
    %v5028 = vunpack.c.l.b16 %v4765
    %v5029 = vunpack.c.l.b16 %v4766
    %v5030 = vunpack.c.l.b16 %v4767
    %v5031 = vunpack.c.l.b16 %v4768
    %v5032 = vunpack.c.l.b16 %v4769
    %v5033 = vunpack.c.l.b16 %v4770
    %v5034 = vunpack.c.l.b16 %v4771
    %v5035 = vunpack.c.l.b16 %v4772
    %v5036 = vunpack.c.l.b16 %v4773
    %v5037 = vunpack.c.l.b16 %v4774
    %v5038 = vunpack.c.l.b16 %v4775
    %v5039 = vunpack.c.l.b16 %v4776
    %v5040 = vunpack.c.l.b16 %v4777
    %v5041 = vunpack.c.l.b16 %v4778
    %v5042 = vunpack.c.l.b16 %v4779
    %v5043 = vunpack.c.l.b16 %v4780
    %v5044 = vunpack.c.l.b16 %v4781
    %v5045 = vunpack.c.l.b16 %v4782
    %v5046 = vunpack.c.l.b16 %v4783
    %v5047 = vunpack.c.l.b16 %v4784
    %v5048 = vunpack.c.l.b16 %v4785
    %v5049 = vunpack.c.l.b16 %v4786
    %v5050 = vunpack.c.l.b16 %v4787
    %v5051 = vunpack.c.l.b16 %v4788
    %v5052 = vunpack.c.l.b16 %v4789
    %v5053 = vunpack.c.l.b16 %v4790
    %v5054 = vunpack.c.l.b16 %v4791
    %v5055 = vunpack.c.l.b16 %v4792
    %v5056 = vunpack.c.l.b16 %v4793
    %v5057 = vunpack.c.l.b16 %v4794
    %v5058 = vunpack.c.l.b16 %v4795
    %v5059 = vunpack.c.l.b16 %v4796
    %v5060 = vunpack.c.l.b16 %v4797
    %v5061 = vunpack.c.l.b16 %v4798
    %v5062 = vunpack.c.l.b16 %v4799
    %v5063 = vunpack.c.l.b16 %v4800
    %v5064 = vunpack.c.l.b16 %v4801
    %v5065 = vunpack.c.l.b16 %v4802
    %v5066 = vunpack.c.l.b16 %v4803
    %v5067 = vunpack.c.l.b16 %v4804
    %v5068 = vunpack.c.l.b16 %v4805
    %v5069 = vunpack.c.l.b16 %v4806
    %v5070 = vunpack.c.l.b16 %v4807
    %v5071 = vunpack.c.l.b16 %v4808
    %v5072 = vunpack.c.l.b16 %v4809
    %v5073 = vunpack.c.l.b16 %v4810
    %v5074 = vunpack.c.l.b16 %v4811
    %v5075 = vunpack.c.l.b16 %v4812
    %v5076 = vunpack.c.l.b16 %v4813
    %v5077 = vunpack.c.l.b16 %v4814
    %v5078 = vunpack.c.l.b16 %v4815
    %v5079 = vunpack.c.l.b16 %v4816
    %v5080 = vunpack.c.l.b16 %v4817
    %v5081 = vunpack.c.l.b16 %v4818
    %v5082 = vunpack.c.l.b16 %v4819
    %v5083 = vunpack.c.l.b16 %v4820
    %v5084 = vunpack.c.l.b16 %v4821
    %v5085 = vunpack.c.l.b16 %v4822
    %v5086 = vunpack.c.l.b16 %v4823
    %v5087 = vunpack.c.l.b16 %v4824
    %v5088 = vunpack.c.l.b16 %v4825
    %v5089 = vunpack.c.l.b16 %v4826
    %v5090 = vunpack.c.l.b16 %v4827
    %v5091 = vunpack.c.l.b16 %v4828
    %v5092 = vunpack.c.l.b16 %v4829
    %v5093 = vunpack.c.l.b16 %v4830
    %v5094 = vunpack.c.l.b16 %v4831
    %v5095 = vunpack.c.l.b16 %v4832
    %v5096 = vunpack.c.l.b16 %v4833
    %v5097 = vpack.c.b16 %v4970, %v4969
    %v5098 = vpack.c.b16 %v4972, %v4971
    %v5099 = vpack.c.b16 %v4974, %v4973
    %v5100 = vpack.c.b16 %v4976, %v4975
    %v5101 = vpack.c.b16 %v4978, %v4977
    %v5102 = vpack.c.b16 %v4980, %v4979
    %v5103 = vpack.c.b16 %v4982, %v4981
    %v5104 = vpack.c.b16 %v4984, %v4983
    %v5105 = vpack.c.b16 %v4986, %v4985
    %v5106 = vpack.c.b16 %v4988, %v4987
    %v5107 = vpack.c.b16 %v4990, %v4989
    %v5108 = vpack.c.b16 %v4992, %v4991
    %v5109 = vpack.c.b16 %v4994, %v4993
    %v5110 = vpack.c.b16 %v4996, %v4995
    %v5111 = vpack.c.b16 %v4998, %v4997
    %v5112 = vpack.c.b16 %v5000, %v4999
    %v5113 = vpack.c.b16 %v5002, %v5001
    %v5114 = vpack.c.b16 %v5004, %v5003
    %v5115 = vpack.c.b16 %v5006, %v5005
    %v5116 = vpack.c.b16 %v5008, %v5007
    %v5117 = vpack.c.b16 %v5010, %v5009
    %v5118 = vpack.c.b16 %v5012, %v5011
    %v5119 = vpack.c.b16 %v5014, %v5013
    %v5120 = vpack.c.b16 %v5016, %v5015
    %v5121 = vpack.c.b16 %v5018, %v5017
    %v5122 = vpack.c.b16 %v5020, %v5019
    %v5123 = vpack.c.b16 %v5022, %v5021
    %v5124 = vpack.c.b16 %v5024, %v5023
    %v5125 = vpack.c.b16 %v5026, %v5025
    %v5126 = vpack.c.b16 %v5028, %v5027
    %v5127 = vpack.c.b16 %v5030, %v5029
    %v5128 = vpack.c.b16 %v5032, %v5031
    %v5129 = vpack.c.b16 %v5034, %v5033
    %v5130 = vpack.c.b16 %v5036, %v5035
    %v5131 = vpack.c.b16 %v5038, %v5037
    %v5132 = vpack.c.b16 %v5040, %v5039
    %v5133 = vpack.c.b16 %v5042, %v5041
    %v5134 = vpack.c.b16 %v5044, %v5043
    %v5135 = vpack.c.b16 %v5046, %v5045
    %v5136 = vpack.c.b16 %v5048, %v5047
    %v5137 = vpack.c.b16 %v5050, %v5049
    %v5138 = vpack.c.b16 %v5052, %v5051
    %v5139 = vpack.c.b16 %v5054, %v5053
    %v5140 = vpack.c.b16 %v5056, %v5055
    %v5141 = vpack.c.b16 %v5058, %v5057
    %v5142 = vpack.c.b16 %v5060, %v5059
    %v5143 = vpack.c.b16 %v5062, %v5061
    %v5144 = vpack.c.b16 %v5064, %v5063
    %v5145 = vpack.c.b16 %v5066, %v5065
    %v5146 = vpack.c.b16 %v5068, %v5067
    %v5147 = vpack.c.b16 %v5070, %v5069
    %v5148 = vpack.c.b16 %v5072, %v5071
    %v5149 = vpack.c.b16 %v5074, %v5073
    %v5150 = vpack.c.b16 %v5076, %v5075
    %v5151 = vpack.c.b16 %v5078, %v5077
    %v5152 = vpack.c.b16 %v5080, %v5079
    %v5153 = vpack.c.b16 %v5082, %v5081
    %v5154 = vpack.c.b16 %v5084, %v5083
    %v5155 = vpack.c.b16 %v5086, %v5085
    %v5156 = vpack.c.b16 %v5088, %v5087
    %v5157 = vpack.c.b16 %v5090, %v5089
    %v5158 = vpack.c.b16 %v5092, %v5091
    %v5159 = vpack.c.b16 %v5094, %v5093
    %v5160 = vpack.c.b16 %v5096, %v5095
    %5225 = vmatprep.subr.bf16.mxu0 0
    %5226 = vmatpush1.bf16.msra.mxu0 %v5104
    %5227 = vmatprep.subr.bf16.mxu0 0
    %5228 = vmatpush1.bf16.msra.mxu0 %v5103
    %5229 = vmatprep.subr.bf16.mxu0 0
    %5230 = vmatpush1.bf16.msra.mxu0 %v5102
    %5231 = vmatprep.subr.bf16.mxu0 0
    %5232 = vmatpush1.bf16.msra.mxu0 %v5101
    %5233 = vmatprep.subr.bf16.mxu0 0
    %5234 = vmatpush1.bf16.msra.mxu0 %v5100
    %5235 = vmatprep.subr.bf16.mxu0 0
    %5236 = vmatpush1.bf16.msra.mxu0 %v5099
    %5237 = vmatprep.subr.bf16.mxu0 0
    %5238 = vmatpush1.bf16.msra.mxu0 %v5098
    %5239 = vmatprep.subr.bf16.mxu0 0
    %5240 = vmatpush1.bf16.msra.mxu0 %v5097
    %5241 = vmatprep.subr.bf16.mxu0 0
    %5242 = vmatpush2.bf16.msra.mxu0 %v5112
    %5243 = vmatprep.subr.bf16.mxu0 0
    %5244 = vmatpush2.bf16.msra.mxu0 %v5111
    %5245 = vmatprep.subr.bf16.mxu0 0
    %5246 = vmatpush2.bf16.msra.mxu0 %v5110
    %5247 = vmatprep.subr.bf16.mxu0 0
    %5248 = vmatpush2.bf16.msra.mxu0 %v5109
    %5249 = vmatprep.subr.bf16.mxu0 0
    %5250 = vmatpush2.bf16.msra.mxu0 %v5108
    %5251 = vmatprep.subr.bf16.mxu0 0
    %5252 = vmatpush2.bf16.msra.mxu0 %v5107
    %5253 = vmatprep.subr.bf16.mxu0 0
    %5254 = vmatpush2.bf16.msra.mxu0 %v5106
    %5255 = vmatprep.subr.bf16.mxu0 0
    %5256 = vmatpush2.bf16.msra.mxu0 %v5105
    %5257 = vmatprep.mubr.bf16.mxu0 %v4699
    %5258 = vmatmul.mubr.bf16.gmra.mxu0 %v4698
    %v5259 = vpop.f32.mrf.mxu0
    %v5260 = vadd.f32 %v4839, %v5259
    %v5261 = vpop.f32.mrf.mxu0
    %v5262 = vpop.f32.mrf.mxu0
    %v5263 = vpop.f32.mrf.mxu0
    %5264 = vdwg.mxu0
    %5265 = vmatprep.subr.bf16.mxu0 0
    %5266 = vmatpush1.bf16.msra.mxu0 %v5120
    %5267 = vmatprep.subr.bf16.mxu0 0
    %5268 = vmatpush1.bf16.msra.mxu0 %v5119
    %5269 = vmatprep.subr.bf16.mxu0 0
    %5270 = vmatpush1.bf16.msra.mxu0 %v5118
    %5271 = vmatprep.subr.bf16.mxu0 0
    %5272 = vmatpush1.bf16.msra.mxu0 %v5117
    %5273 = vmatprep.subr.bf16.mxu0 0
    %5274 = vmatpush1.bf16.msra.mxu0 %v5116
    %5275 = vmatprep.subr.bf16.mxu0 0
    %5276 = vmatpush1.bf16.msra.mxu0 %v5115
    %5277 = vmatprep.subr.bf16.mxu0 0
    %5278 = vmatpush1.bf16.msra.mxu0 %v5114
    %5279 = vmatprep.subr.bf16.mxu0 0
    %5280 = vmatpush1.bf16.msra.mxu0 %v5113
    %5281 = vmatprep.subr.bf16.mxu0 0
    %5282 = vmatpush2.bf16.msra.mxu0 %v5128
    %5283 = vmatprep.subr.bf16.mxu0 0
    %5284 = vmatpush2.bf16.msra.mxu0 %v5127
    %5285 = vmatprep.subr.bf16.mxu0 0
    %5286 = vmatpush2.bf16.msra.mxu0 %v5126
    %5287 = vmatprep.subr.bf16.mxu0 0
    %5288 = vmatpush2.bf16.msra.mxu0 %v5125
    %5289 = vmatprep.subr.bf16.mxu0 0
    %5290 = vmatpush2.bf16.msra.mxu0 %v5124
    %5291 = vmatprep.subr.bf16.mxu0 0
    %5292 = vmatpush2.bf16.msra.mxu0 %v5123
    %5293 = vmatprep.subr.bf16.mxu0 0
    %5294 = vmatpush2.bf16.msra.mxu0 %v5122
    %5295 = vmatprep.subr.bf16.mxu0 0
    %5296 = vmatpush2.bf16.msra.mxu0 %v5121
    %5297 = vmatprep.mubr.bf16.mxu0 %v4701
    %5298 = vmatmul.mubr.bf16.gmra.mxu0 %v4700
    %v5299 = vpop.f32.mrf.mxu0
    %v5300 = vadd.f32 %v5260, %v5299
    %v5301 = vpop.f32.mrf.mxu0
    %v5302 = vpop.f32.mrf.mxu0
    %v5303 = vpop.f32.mrf.mxu0
    %5304 = vdwg.mxu0
    %5305 = vmatprep.subr.bf16.mxu0 0
    %5306 = vmatpush1.bf16.msra.mxu0 %v5136
    %5307 = vmatprep.subr.bf16.mxu0 0
    %5308 = vmatpush1.bf16.msra.mxu0 %v5135
    %5309 = vmatprep.subr.bf16.mxu0 0
    %5310 = vmatpush1.bf16.msra.mxu0 %v5134
    %5311 = vmatprep.subr.bf16.mxu0 0
    %5312 = vmatpush1.bf16.msra.mxu0 %v5133
    %5313 = vmatprep.subr.bf16.mxu0 0
    %5314 = vmatpush1.bf16.msra.mxu0 %v5132
    %5315 = vmatprep.subr.bf16.mxu0 0
    %5316 = vmatpush1.bf16.msra.mxu0 %v5131
    %5317 = vmatprep.subr.bf16.mxu0 0
    %5318 = vmatpush1.bf16.msra.mxu0 %v5130
    %5319 = vmatprep.subr.bf16.mxu0 0
    %5320 = vmatpush1.bf16.msra.mxu0 %v5129
    %5321 = vmatprep.subr.bf16.mxu0 0
    %5322 = vmatpush2.bf16.msra.mxu0 %v5144
    %5323 = vmatprep.subr.bf16.mxu0 0
    %5324 = vmatpush2.bf16.msra.mxu0 %v5143
    %5325 = vmatprep.subr.bf16.mxu0 0
    %5326 = vmatpush2.bf16.msra.mxu0 %v5142
    %5327 = vmatprep.subr.bf16.mxu0 0
    %5328 = vmatpush2.bf16.msra.mxu0 %v5141
    %5329 = vmatprep.subr.bf16.mxu0 0
    %5330 = vmatpush2.bf16.msra.mxu0 %v5140
    %5331 = vmatprep.subr.bf16.mxu0 0
    %5332 = vmatpush2.bf16.msra.mxu0 %v5139
    %5333 = vmatprep.subr.bf16.mxu0 0
    %5334 = vmatpush2.bf16.msra.mxu0 %v5138
    %5335 = vmatprep.subr.bf16.mxu0 0
    %5336 = vmatpush2.bf16.msra.mxu0 %v5137
    %5337 = vmatprep.mubr.bf16.mxu0 %v4703
    %5338 = vmatmul.mubr.bf16.gmra.mxu0 %v4702
    %v5339 = vpop.f32.mrf.mxu0
    %v5340 = vadd.f32 %v5300, %v5339
    %v5341 = vpop.f32.mrf.mxu0
    %v5342 = vpop.f32.mrf.mxu0
    %v5343 = vpop.f32.mrf.mxu0
    %5344 = vdwg.mxu0
    %5345 = vmatprep.subr.bf16.mxu0 0
    %5346 = vmatpush1.bf16.msra.mxu0 %v5152
    %5347 = vmatprep.subr.bf16.mxu0 0
    %5348 = vmatpush1.bf16.msra.mxu0 %v5151
    %5349 = vmatprep.subr.bf16.mxu0 0
    %5350 = vmatpush1.bf16.msra.mxu0 %v5150
    %5351 = vmatprep.subr.bf16.mxu0 0
    %5352 = vmatpush1.bf16.msra.mxu0 %v5149
    %5353 = vmatprep.subr.bf16.mxu0 0
    %5354 = vmatpush1.bf16.msra.mxu0 %v5148
    %5355 = vmatprep.subr.bf16.mxu0 0
    %5356 = vmatpush1.bf16.msra.mxu0 %v5147
    %5357 = vmatprep.subr.bf16.mxu0 0
    %5358 = vmatpush1.bf16.msra.mxu0 %v5146
    %5359 = vmatprep.subr.bf16.mxu0 0
    %5360 = vmatpush1.bf16.msra.mxu0 %v5145
    %5361 = vmatprep.subr.bf16.mxu0 0
    %5362 = vmatpush2.bf16.msra.mxu0 %v5160
    %5363 = vmatprep.subr.bf16.mxu0 0
    %5364 = vmatpush2.bf16.msra.mxu0 %v5159
    %5365 = vmatprep.subr.bf16.mxu0 0
    %5366 = vmatpush2.bf16.msra.mxu0 %v5158
    %5367 = vmatprep.subr.bf16.mxu0 0
    %5368 = vmatpush2.bf16.msra.mxu0 %v5157
    %5369 = vmatprep.subr.bf16.mxu0 0
    %5370 = vmatpush2.bf16.msra.mxu0 %v5156
    %5371 = vmatprep.subr.bf16.mxu0 0
    %5372 = vmatpush2.bf16.msra.mxu0 %v5155
    %5373 = vmatprep.subr.bf16.mxu0 0
    %5374 = vmatpush2.bf16.msra.mxu0 %v5154
    %5375 = vmatprep.subr.bf16.mxu0 0
    %5376 = vmatpush2.bf16.msra.mxu0 %v5153
    %5377 = vmatprep.mubr.bf16.mxu0 %v4705
    %5378 = vmatmul.mubr.bf16.gmra.mxu0 %v4704
    %v5379 = vpop.f32.mrf.mxu0
    %v5380 = vadd.f32 %v5340, %v5379
    %v5381 = vpop.f32.mrf.mxu0
    %v5382 = vpop.f32.mrf.mxu0
    %v5383 = vpop.f32.mrf.mxu0
    %5384 = vdwg.mxu0
    %5385 = vst.msk [vmem:[#allocation22] sm:$0xff] %vm212, %v5380
    // Predicated region
    $region102: #{tpu_custom_call.1} parent=1 // pred_check
      _
    $region103: #{tpu_custom_call.1} parent=1 // pred_check_branch
      %5387 = sbr.rel (0) target = $region105
    $region104: #{tpu_custom_call.1} parent=1 // pred_region
      %s5389 = ssub.s32 128, 128
      %5390 = vsyncadd [#allocation4], %s5389
      %s5392 = sshll.u32 [#allocation22], 4
      %s5393 = int_to_ptr.vmem [resolvable:$true] %s5392
      %5395 = dma.vmem_to_hbm [thread:$0]  %s5393, 128, %s13, [#allocation4]
    $region105: #{tpu_custom_call.1} parent=1 // pred_fallthru
      _
    // Predicated region
    $region106: #{tpu_custom_call.1} parent=1 // pred_check
      _
    $region107: #{tpu_custom_call.1} parent=1 // pred_check_branch
      %5397 = sbr.rel (0) target = $region109
    $region108: #{tpu_custom_call.1} parent=1 // pred_region
      %5398 = dma.done [#allocation4], 128
    $region109: #{tpu_custom_call.1} parent=1 // pred_fallthru
      _
    %5399 = vsyncpa [#allocation3], 1
    %5400 = vsyncpa [#allocation6], 1
    %5401 = vsyncpa [#allocation9], 1
    %5402 = vsyncpa [#allocation12], 1
    %5403 = vsyncpa [#allocation15], 1
    %5404 = vsyncpa [#allocation18], 1
    %5405 = vsyncpa [#allocation21], 1
    %5406 = vsyncpa [#allocation4], 1

</llo_original>
